<compile_context>
chip_gen: v7x
topology: tpu7x:2x2x1
jax: 0.10.0
libtpu: 0.0.40
codegen_flags: <defaults>
</compile_context>

<pallas_src>
import jax
import jax.numpy as jnp
from jax.experimental import pallas as pl
from jax.experimental.pallas import tpu as pltpu


# ----------------------------------------------------------------------------
# Model constants (from the PyTorch spec: 3->64->128, k=3, s=2,
# fc expects 128*15*15 => input spatial must be 64).
# ----------------------------------------------------------------------------
KSZ = 3
STRIDE = 2
C_IN = 3
C1 = 64                      # conv1 out channels
C2 = 128                     # conv2 out channels
H_IN = 64
HO1 = (H_IN - KSZ) // STRIDE + 1     # 31
HO2 = (HO1 - KSZ) // STRIDE + 1      # 15
P1 = HO1 * HO1                       # 961 conv1 output positions
P2 = HO2 * HO2                       # 225 conv2 output positions
NEG_SLOPE = 0.01                     # F.leaky_relu default
EPS = 1e-5                           # BatchNorm2d default

K1 = KSZ * KSZ * C_IN                # 27  (conv1 im2col contraction)
K1_PAD = 32                          # zero-padded contraction (both operands)
K2 = KSZ * KSZ * C1                  # 576 (conv2 im2col contraction)


# ----------------------------------------------------------------------------
# Wrapper-side channel-major im2col (pure layout glue).
#   x: (B, C, H, W)  ->  patches (B, C*k*k, ho*wo)
#   K index = c*k*k_idx with tap = kh*k + kw, i.e. matches an OIHW weight
#   reshaped to (Cout, C*k*k).
# ----------------------------------------------------------------------------
def _im2col_cm(x, k, stride):
    B, C, H, W = x.shape
    ho = (H - k) // stride + 1
    wo = (W - k) // stride + 1
    taps = []
    for kh in range(k):
        for kw in range(k):
            taps.append(x[:, :,
                          kh:kh + stride * (ho - 1) + 1:stride,
                          kw:kw + stride * (wo - 1) + 1:stride])
    p = jnp.stack(taps, axis=2)                    # (B, C, k*k, ho, wo)
    return p.reshape(B, C * k * k, ho * wo)


# ----------------------------------------------------------------------------
# Kernel 1: conv1 as one MXU matmul per image + bias + LeakyReLU.
#   out[b] = lrelu(W1 (64,32) @ patches[b] (32,961) + b1)   -> (64, 961) bf16
# Channel-major output: lanes = positions (dense stores), no channel padding.
# ----------------------------------------------------------------------------
def _conv1_kernel(p_ref, w_ref, b_ref, o_ref):
    # p_ref: (K1_PAD, P1) bf16; w_ref: (C1, K1_PAD) bf16; b_ref: (C1, 1) f32
    h = jnp.dot(w_ref[...], p_ref[...], preferred_element_type=jnp.float32)
    h = h + b_ref[...]                                  # bias (f32)
    h = jnp.where(h >= 0.0, h, NEG_SLOPE * h)           # LeakyReLU (f32)
    o_ref[...] = h.astype(o_ref.dtype)                  # store bf16


def conv1_lrelu(p1, w1, b1):
    B = p1.shape[0]
    cost = pl.CostEstimate(
        flops=2 * B * C1 * K1_PAD * P1,
        transcendentals=0,
        bytes_accessed=(B * K1_PAD * P1 * 2 + C1 * K1_PAD * 2 + C1 * 4
                        + B * C1 * P1 * 2),
    )
    return pl.pallas_call(
        _conv1_kernel,
        out_shape=jax.ShapeDtypeStruct((B, C1, P1), jnp.bfloat16),
        grid=(B,),
        in_specs=[
            pl.BlockSpec((pl.Squeezed(), K1_PAD, P1), lambda b: (b, 0, 0)),
            pl.BlockSpec((C1, K1_PAD), lambda b: (0, 0)),
            pl.BlockSpec((C1, 1), lambda b: (0, 0)),
        ],
        out_specs=pl.BlockSpec((pl.Squeezed(), C1, P1), lambda b: (b, 0, 0)),
        compiler_params=pltpu.CompilerParams(
            dimension_semantics=("parallel",)),
        cost_estimate=cost,
    )(p1, w1, b1)


# ----------------------------------------------------------------------------
# Kernel 2: conv2 + bias + LeakyReLU fused with BatchNorm (training-mode batch
# stats), flatten, Linear(...,1) and sigmoid.
#
# Per image b:  h = lrelu(W2 (128,576) @ patches[b] (576,225) + b2)  (128,225)
# Accumulated across the batch grid axis (scratch, "arbitrary"):
#   s1[c] += sum_p h[c,p],  s2[c] += sum_p h[c,p]^2,
#   t[b,c] = sum_p Wfc[c,p] * h[c,p]
# BN is the affine map xn = scale*h + shift with batch statistics, so
#   logit[b] = sum_c scale[c]*t[b,c] + sum_c shift[c]*rowsum(Wfc)[c] + b_fc,
# computed (with sigmoid) at the last grid step.  h never leaves VMEM.
# ----------------------------------------------------------------------------
def _make_conv2_bn_fc_kernel(n_total):
    inv_n = 1.0 / float(n_total)

    def kernel(p_ref, w_ref, b_ref, wfc_ref, g_ref, bt_ref, bfc_ref,
               o_ref, s1_ref, s2_ref, t_ref):
        b = pl.program_id(0)

        @pl.when(b == 0)
        def _():
            s1_ref[...] = jnp.zeros_like(s1_ref)
            s2_ref[...] = jnp.zeros_like(s2_ref)

        # conv2 matmul (bf16 operands, f32 accumulate) + bias + LeakyReLU.
        h = jnp.dot(w_ref[...], p_ref[...],
                    preferred_element_type=jnp.float32)        # (C2, P2)
        h = h + b_ref[...]
        h = jnp.where(h >= 0.0, h, NEG_SLOPE * h)

        # Per-channel reductions over positions (lanes).
        s1_ref[...] += jnp.sum(h, axis=1, keepdims=True)        # (C2, 1)
        s2_ref[...] += jnp.sum(h * h, axis=1, keepdims=True)    # (C2, 1)
        t_ref[b] = jnp.sum(h * wfc_ref[...], axis=1, keepdims=True)

        @pl.when(b == pl.num_programs(0) - 1)
        def _():
            mean = s1_ref[...] * inv_n                          # (C2, 1)
            var = jnp.maximum(s2_ref[...] * inv_n - mean * mean, 0.0)
            rstd = jax.lax.rsqrt(var + EPS)
            scale = g_ref[...] * rstd                           # (C2, 1)
            shift = bt_ref[...] - mean * scale                  # (C2, 1)
            wrow = jnp.sum(wfc_ref[...], axis=1, keepdims=True) # (C2, 1)
            const = jnp.sum(shift * wrow)                       # scalar
            logits = jnp.sum(t_ref[...] * scale[None, :, :], axis=1)  # (B, 1)
            logits = logits + const + bfc_ref[...]
            o_ref[...] = 1.0 / (1.0 + jnp.exp(-logits))         # sigmoid

    return kernel


def conv2_bn_fc_sigmoid(p2, w2, b2, w_fc, gamma, beta, b_fc, *, n_total):
    B = p2.shape[0]
    cost = pl.CostEstimate(
        flops=2 * B * C2 * K2 * P2 + 8 * B * C2 * P2,
        transcendentals=B,
        bytes_accessed=(B * K2 * P2 * 2 + C2 * K2 * 2 + C2 * P2 * 4
                        + 3 * C2 * 4 + 4 + B * 4),
    )
    return pl.pallas_call(
        _make_conv2_bn_fc_kernel(n_total),
        out_shape=jax.ShapeDtypeStruct((B, 1), jnp.float32),
        grid=(B,),
        in_specs=[
            pl.BlockSpec((pl.Squeezed(), K2, P2), lambda b: (b, 0, 0)),
            pl.BlockSpec((C2, K2), lambda b: (0, 0)),
            pl.BlockSpec((C2, 1), lambda b: (0, 0)),
            pl.BlockSpec((C2, P2), lambda b: (0, 0)),
            pl.BlockSpec((C2, 1), lambda b: (0, 0)),
            pl.BlockSpec((C2, 1), lambda b: (0, 0)),
            pl.BlockSpec((1, 1), lambda b: (0, 0)),
        ],
        out_specs=pl.BlockSpec((B, 1), lambda b: (0, 0)),
        scratch_shapes=[
            pltpu.VMEM((C2, 1), jnp.float32),      # s1 (sum)
            pltpu.VMEM((C2, 1), jnp.float32),      # s2 (sum of squares)
            pltpu.VMEM((B, C2, 1), jnp.float32),   # t  (fc partial dot)
        ],
        compiler_params=pltpu.CompilerParams(
            dimension_semantics=("arbitrary",)),
        cost_estimate=cost,
    )(p2, w2, b2, w_fc, gamma, beta, b_fc)


# ----------------------------------------------------------------------------
# Full forward pass (wrapper glue: channel-major im2col + zero K-pad only).
# ----------------------------------------------------------------------------
@jax.jit
def discriminator_forward(x_nchw, params):
    B = x_nchw.shape[0]

    # conv1 + leaky_relu (dropout2d -> identity, eval mode)
    p1 = _im2col_cm(x_nchw, KSZ, STRIDE).astype(jnp.bfloat16)    # (B, 27, 961)
    p1 = jnp.pad(p1, ((0, 0), (0, K1_PAD - K1), (0, 0)))         # (B, 32, 961)
    w1 = params["w1"].reshape(C1, K1).astype(jnp.bfloat16)       # (64, 27)
    w1 = jnp.pad(w1, ((0, 0), (0, K1_PAD - K1)))                 # (64, 32)
    h1 = conv1_lrelu(p1, w1, params["b1"])                       # (B, 64, 961)

    # conv2 + leaky_relu (dropout2d -> identity) + BN + fc + sigmoid, fused.
    p2 = _im2col_cm(h1.reshape(B, C1, HO1, HO1), KSZ, STRIDE)    # (B, 576, 225)
    w2 = params["w2"].reshape(C2, K2).astype(jnp.bfloat16)       # (128, 576)
    return conv2_bn_fc_sigmoid(p2, w2, params["b2"], params["w_fc"],
                               params["gamma"], params["beta"],
                               params["b_fc"], n_total=B * P2)


def init_params(key):
    ks = jax.random.split(key, 8)
    return {
        # conv1: PyTorch weight layout OIHW (64, 3, 3, 3); bias (64,) -> (64,1)
        "w1": 0.10 * jax.random.normal(ks[0], (C1, C_IN, KSZ, KSZ), jnp.float32),
        "b1": 0.10 * jax.random.normal(ks[1], (C1, 1), jnp.float32),
        # conv2: PyTorch weight layout OIHW (128, 64, 3, 3); bias (128,) -> (128,1)
        "w2": 0.05 * jax.random.normal(ks[2], (C2, C1, KSZ, KSZ), jnp.float32),
        "b2": 0.05 * jax.random.normal(ks[3], (C2, 1), jnp.float32),
        # BatchNorm2d(128) affine params, stored as (channel, 1) columns.
        "gamma": 1.0 + 0.1 * jax.random.normal(ks[4], (C2, 1), jnp.float32),
        "beta": 0.1 * jax.random.normal(ks[5], (C2, 1), jnp.float32),
        # fc: Linear(128*15*15, 1); PyTorch (1, 128*225) -> (channel, position).
        "w_fc": 0.01 * jax.random.normal(ks[6], (C2, P2), jnp.float32),
        "b_fc": 0.01 * jax.random.normal(ks[7], (1, 1), jnp.float32),
    }


if __name__ == "__main__":
    key = jax.random.PRNGKey(0)
    k_x, k_p = jax.random.split(key)

    B = 2
    # fc expects 128*15*15 features => input spatial must be 64.
    x = jax.random.normal(k_x, (B, C_IN, H_IN, H_IN), jnp.float32)
    params = init_params(k_p)

    out = jax.block_until_ready(discriminator_forward(x, params))

    assert out.shape == (B, 1), out.shape
    assert bool(jnp.all(jnp.isfinite(out)))
    assert bool(jnp.all((out >= 0.0) & (out <= 1.0)))
    print("KERNEL_OK")
</pallas_src>

<mosaic_0001>
module attributes {stable_mosaic.version = 11 : i64} {
  func.func @_conv1_kernel(%arg0: i32, %arg1: memref<1x32x961xbf16, #tpu.memory_space<vmem>>, %arg2: memref<64x32xbf16, #tpu.memory_space<vmem>>, %arg3: memref<64x1xf32, #tpu.memory_space<vmem>>, %arg4: memref<1x64x961xbf16, #tpu.memory_space<vmem>>) attributes {dimension_semantics = [#tpu.dimension_semantics<parallel>], iteration_bounds = array<i64: 2>, scalar_prefetch = 0 : i64, scratch_operands = 0 : i64, tpu.core_type = #tpu.core_type<tc>, window_params = [{transform_indices = @transform_0, window_bounds = array<i64: 1, 32, 961>}, {pipeline_mode = #tpu.pipeline_mode<synchronous>, transform_indices = @transform_1, window_bounds = array<i64: 64, 32>}, {pipeline_mode = #tpu.pipeline_mode<synchronous>, transform_indices = @transform_2, window_bounds = array<i64: 64, 1>}, {transform_indices = @transform_3, window_bounds = array<i64: 1, 64, 961>}]} {
    %c0 = arith.constant 0 : index
    %c0_0 = arith.constant 0 : index
    %0 = vector.load %arg2[%c0, %c0_0] : memref<64x32xbf16, #tpu.memory_space<vmem>>, vector<64x32xbf16>
    %c0_1 = arith.constant 0 : index
    %c0_2 = arith.constant 0 : index
    %c0_3 = arith.constant 0 : index
    %1 = vector.load %arg1[%c0_1, %c0_2, %c0_3] : memref<1x32x961xbf16, #tpu.memory_space<vmem>>, vector<1x32x961xbf16>
    %2 = vector.shape_cast %1 : vector<1x32x961xbf16> to vector<32x961xbf16>
    %cst = arith.constant dense<0.000000e+00> : vector<64x961xf32>
    %3 = tpu.matmul %0, %2, %cst {dimension_numbers = #tpu.dot_dimension_numbers<[1], [0], [0], [1], [0, 0, 1, 1], [], []>} : vector<64x32xbf16>, vector<32x961xbf16>, vector<64x961xf32> -> vector<64x961xf32>
    %c0_4 = arith.constant 0 : index
    %c0_5 = arith.constant 0 : index
    %4 = vector.load %arg3[%c0_4, %c0_5] : memref<64x1xf32, #tpu.memory_space<vmem>>, vector<64x1xf32>
    %5 = vector.broadcast %4 : vector<64x1xf32> to vector<64x961xf32>
    %6 = arith.addf %3, %5 : vector<64x961xf32>
    %cst_6 = arith.constant 0.000000e+00 : f32
    %7 = vector.broadcast %cst_6 : f32 to vector<64x961xf32>
    %8 = arith.cmpf oge, %6, %7 : vector<64x961xf32>
    %cst_7 = arith.constant 0.00999999977 : f32
    %9 = vector.broadcast %cst_7 : f32 to vector<64x961xf32>
    %10 = arith.mulf %9, %6 : vector<64x961xf32>
    %11 = arith.select %8, %6, %10 : vector<64x961xi1>, vector<64x961xf32>
    %12 = arith.truncf %11 : vector<64x961xf32> to vector<64x961xbf16>
    %c0_8 = arith.constant 0 : index
    %c0_9 = arith.constant 0 : index
    %c0_10 = arith.constant 0 : index
    %13 = vector.load %arg4[%c0_8, %c0_9, %c0_10] : memref<1x64x961xbf16, #tpu.memory_space<vmem>>, vector<1x64x961xbf16>
    %14 = vector.shape_cast %13 : vector<1x64x961xbf16> to vector<64x961xbf16>
    %15 = vector.shape_cast %12 : vector<64x961xbf16> to vector<1x64x961xbf16>
    tpu.vector_store %arg4[%c0_8, %c0_9, %c0_10], %15 {strides = array<i32>} : memref<1x64x961xbf16, #tpu.memory_space<vmem>>, vector<1x64x961xbf16>,
    return
  }
  func.func @transform_0(%arg0: i32) -> (i32, i32, i32) {
    %c0_i32 = arith.constant 0 : i32
    %c0_i32_0 = arith.constant 0 : i32
    %c0_i32_1 = arith.constant 0 : i32
    return %arg0, %c0_i32, %c0_i32_0 : i32, i32, i32
  }
  func.func @transform_1(%arg0: i32) -> (i32, i32) {
    %c0_i32 = arith.constant 0 : i32
    %c0_i32_0 = arith.constant 0 : i32
    %c0_i32_1 = arith.constant 0 : i32
    return %c0_i32, %c0_i32_0 : i32, i32
  }
  func.func @transform_2(%arg0: i32) -> (i32, i32) {
    %c0_i32 = arith.constant 0 : i32
    %c0_i32_0 = arith.constant 0 : i32
    %c0_i32_1 = arith.constant 0 : i32
    return %c0_i32, %c0_i32_0 : i32, i32
  }
  func.func @transform_3(%arg0: i32) -> (i32, i32, i32) {
    %c0_i32 = arith.constant 0 : i32
    %c0_i32_0 = arith.constant 0 : i32
    %c0_i32_1 = arith.constant 0 : i32
    return %arg0, %c0_i32, %c0_i32_0 : i32, i32, i32
  }
}

module attributes {stable_mosaic.version = 11 : i64} {
  func.func @kernel(%arg0: i32, %arg1: memref<1x576x225xbf16, #tpu.memory_space<vmem>>, %arg2: memref<128x576xbf16, #tpu.memory_space<vmem>>, %arg3: memref<128x1xf32, #tpu.memory_space<vmem>>, %arg4: memref<128x225xf32, #tpu.memory_space<vmem>>, %arg5: memref<128x1xf32, #tpu.memory_space<vmem>>, %arg6: memref<128x1xf32, #tpu.memory_space<vmem>>, %arg7: memref<1x1xf32, #tpu.memory_space<vmem>>, %arg8: memref<2x1xf32, #tpu.memory_space<vmem>>, %arg9: memref<128x1xf32, #tpu.memory_space<vmem>>, %arg10: memref<128x1xf32, #tpu.memory_space<vmem>>, %arg11: memref<2x128x1xf32, #tpu.memory_space<vmem>>) attributes {dimension_semantics = [#tpu.dimension_semantics<arbitrary>], iteration_bounds = array<i64: 2>, scalar_prefetch = 0 : i64, scratch_operands = 3 : i64, tpu.core_type = #tpu.core_type<tc>, window_params = [{transform_indices = @transform_0, window_bounds = array<i64: 1, 576, 225>}, {pipeline_mode = #tpu.pipeline_mode<synchronous>, transform_indices = @transform_1, window_bounds = array<i64: 128, 576>}, {pipeline_mode = #tpu.pipeline_mode<synchronous>, transform_indices = @transform_2, window_bounds = array<i64: 128, 1>}, {pipeline_mode = #tpu.pipeline_mode<synchronous>, transform_indices = @transform_3, window_bounds = array<i64: 128, 225>}, {pipeline_mode = #tpu.pipeline_mode<synchronous>, transform_indices = @transform_4, window_bounds = array<i64: 128, 1>}, {pipeline_mode = #tpu.pipeline_mode<synchronous>, transform_indices = @transform_5, window_bounds = array<i64: 128, 1>}, {pipeline_mode = #tpu.pipeline_mode<synchronous>, transform_indices = @transform_6, window_bounds = array<i64: 1, 1>}, {pipeline_mode = #tpu.pipeline_mode<synchronous>, transform_indices = @transform_7, window_bounds = array<i64: 2, 1>}]} {
    %c0_i32 = arith.constant 0 : i32
    %0 = arith.cmpi eq, %arg0, %c0_i32 : i32
    %1 = arith.extui %0 : i1 to i32
    %c0_i32_0 = arith.constant 0 : i32
    %2 = arith.cmpi ne, %1, %c0_i32_0 : i32
    scf.if %2 {
      %cst_25 = arith.constant 0.000000e+00 : f32
      %37 = vector.broadcast %cst_25 : f32 to vector<128x1xf32>
      %c0_26 = arith.constant 0 : index
      %c0_27 = arith.constant 0 : index
      %38 = vector.load %arg9[%c0_26, %c0_27] : memref<128x1xf32, #tpu.memory_space<vmem>>, vector<128x1xf32>
      tpu.vector_store %arg9[%c0_26, %c0_27], %37 {strides = array<i32>} : memref<128x1xf32, #tpu.memory_space<vmem>>, vector<128x1xf32>,
      %cst_28 = arith.constant 0.000000e+00 : f32
      %39 = vector.broadcast %cst_28 : f32 to vector<128x1xf32>
      %c0_29 = arith.constant 0 : index
      %c0_30 = arith.constant 0 : index
      %40 = vector.load %arg10[%c0_29, %c0_30] : memref<128x1xf32, #tpu.memory_space<vmem>>, vector<128x1xf32>
      tpu.vector_store %arg10[%c0_29, %c0_30], %39 {strides = array<i32>} : memref<128x1xf32, #tpu.memory_space<vmem>>, vector<128x1xf32>,
    } else {
    }
    %c0 = arith.constant 0 : index
    %c0_1 = arith.constant 0 : index
    %3 = vector.load %arg2[%c0, %c0_1] : memref<128x576xbf16, #tpu.memory_space<vmem>>, vector<128x576xbf16>
    %c0_2 = arith.constant 0 : index
    %c0_3 = arith.constant 0 : index
    %c0_4 = arith.constant 0 : index
    %4 = vector.load %arg1[%c0_2, %c0_3, %c0_4] : memref<1x576x225xbf16, #tpu.memory_space<vmem>>, vector<1x576x225xbf16>
    %5 = vector.shape_cast %4 : vector<1x576x225xbf16> to vector<576x225xbf16>
    %cst = arith.constant dense<0.000000e+00> : vector<128x225xf32>
    %6 = tpu.matmul %3, %5, %cst {dimension_numbers = #tpu.dot_dimension_numbers<[1], [0], [0], [1], [0, 0, 1, 1], [], []>} : vector<128x576xbf16>, vector<576x225xbf16>, vector<128x225xf32> -> vector<128x225xf32>
    %c0_5 = arith.constant 0 : index
    %c0_6 = arith.constant 0 : index
    %7 = vector.load %arg3[%c0_5, %c0_6] : memref<128x1xf32, #tpu.memory_space<vmem>>, vector<128x1xf32>
    %8 = vector.broadcast %7 : vector<128x1xf32> to vector<128x225xf32>
    %9 = arith.addf %6, %8 : vector<128x225xf32>
    %cst_7 = arith.constant 0.000000e+00 : f32
    %10 = vector.broadcast %cst_7 : f32 to vector<128x225xf32>
    %11 = arith.cmpf oge, %9, %10 : vector<128x225xf32>
    %cst_8 = arith.constant 0.00999999977 : f32
    %12 = vector.broadcast %cst_8 : f32 to vector<128x225xf32>
    %13 = arith.mulf %12, %9 : vector<128x225xf32>
    %14 = arith.select %11, %9, %13 : vector<128x225xi1>, vector<128x225xf32>
    %c0_9 = arith.constant 0 : index
    %c0_10 = arith.constant 0 : index
    %15 = vector.load %arg9[%c0_9, %c0_10] : memref<128x1xf32, #tpu.memory_space<vmem>>, vector<128x1xf32>
    %cst_11 = arith.constant dense<0.000000e+00> : vector<128xf32>
    %16 = vector.multi_reduction <add>, %14, %cst_11 [1] : vector<128x225xf32> to vector<128xf32>
    %17 = vector.shape_cast %16 : vector<128xf32> to vector<128x1xf32>
    %18 = arith.addf %15, %17 : vector<128x1xf32>
    %c0_12 = arith.constant 0 : index
    %c0_13 = arith.constant 0 : index
    %19 = vector.load %arg9[%c0_12, %c0_13] : memref<128x1xf32, #tpu.memory_space<vmem>>, vector<128x1xf32>
    tpu.vector_store %arg9[%c0_12, %c0_13], %18 {strides = array<i32>} : memref<128x1xf32, #tpu.memory_space<vmem>>, vector<128x1xf32>,
    %c0_14 = arith.constant 0 : index
    %c0_15 = arith.constant 0 : index
    %20 = vector.load %arg10[%c0_14, %c0_15] : memref<128x1xf32, #tpu.memory_space<vmem>>, vector<128x1xf32>
    %21 = arith.mulf %14, %14 : vector<128x225xf32>
    %cst_16 = arith.constant dense<0.000000e+00> : vector<128xf32>
    %22 = vector.multi_reduction <add>, %21, %cst_16 [1] : vector<128x225xf32> to vector<128xf32>
    %23 = vector.shape_cast %22 : vector<128xf32> to vector<128x1xf32>
    %24 = arith.addf %20, %23 : vector<128x1xf32>
    %c0_17 = arith.constant 0 : index
    %c0_18 = arith.constant 0 : index
    %25 = vector.load %arg10[%c0_17, %c0_18] : memref<128x1xf32, #tpu.memory_space<vmem>>, vector<128x1xf32>
    tpu.vector_store %arg10[%c0_17, %c0_18], %24 {strides = array<i32>} : memref<128x1xf32, #tpu.memory_space<vmem>>, vector<128x1xf32>,
    %c0_19 = arith.constant 0 : index
    %c0_20 = arith.constant 0 : index
    %26 = vector.load %arg4[%c0_19, %c0_20] : memref<128x225xf32, #tpu.memory_space<vmem>>, vector<128x225xf32>
    %27 = arith.mulf %14, %26 : vector<128x225xf32>
    %cst_21 = arith.constant dense<0.000000e+00> : vector<128xf32>
    %28 = vector.multi_reduction <add>, %27, %cst_21 [1] : vector<128x225xf32> to vector<128xf32>
    %29 = vector.shape_cast %28 : vector<128xf32> to vector<128x1xf32>
    %30 = arith.index_cast %arg0 : i32 to index
    %c0_22 = arith.constant 0 : index
    %c0_23 = arith.constant 0 : index
    %31 = vector.load %arg11[%30, %c0_22, %c0_23] : memref<2x128x1xf32, #tpu.memory_space<vmem>>, vector<1x128x1xf32>
    %32 = vector.shape_cast %31 : vector<1x128x1xf32> to vector<128x1xf32>
    %33 = vector.shape_cast %29 : vector<128x1xf32> to vector<1x128x1xf32>
    tpu.vector_store %arg11[%30, %c0_22, %c0_23], %33 {strides = array<i32>} : memref<2x128x1xf32, #tpu.memory_space<vmem>>, vector<1x128x1xf32>,
    %c1_i32 = arith.constant 1 : i32
    %34 = arith.cmpi eq, %arg0, %c1_i32 : i32
    %35 = arith.extui %34 : i1 to i32
    %c0_i32_24 = arith.constant 0 : i32
    %36 = arith.cmpi ne, %35, %c0_i32_24 : i32
    scf.if %36 {
      %c0_25 = arith.constant 0 : index
      %c0_26 = arith.constant 0 : index
      %37 = vector.load %arg9[%c0_25, %c0_26] : memref<128x1xf32, #tpu.memory_space<vmem>>, vector<128x1xf32>
      %cst_27 = arith.constant 0.00222222228 : f32
      %38 = vector.broadcast %cst_27 : f32 to vector<128x1xf32>
      %39 = arith.mulf %37, %38 : vector<128x1xf32>
      %c0_28 = arith.constant 0 : index
      %c0_29 = arith.constant 0 : index
      %40 = vector.load %arg10[%c0_28, %c0_29] : memref<128x1xf32, #tpu.memory_space<vmem>>, vector<128x1xf32>
      %cst_30 = arith.constant 0.00222222228 : f32
      %41 = vector.broadcast %cst_30 : f32 to vector<128x1xf32>
      %42 = arith.mulf %40, %41 : vector<128x1xf32>
      %43 = arith.mulf %39, %39 : vector<128x1xf32>
      %44 = arith.subf %42, %43 : vector<128x1xf32>
      %cst_31 = arith.constant 0.000000e+00 : f32
      %45 = vector.broadcast %cst_31 : f32 to vector<128x1xf32>
      %46 = arith.maximumf %44, %45 : vector<128x1xf32>
      %cst_32 = arith.constant 9.99999974E-6 : f32
      %47 = vector.broadcast %cst_32 : f32 to vector<128x1xf32>
      %48 = arith.addf %46, %47 : vector<128x1xf32>
      %49 = math.rsqrt %48 : vector<128x1xf32>
      %c0_33 = arith.constant 0 : index
      %c0_34 = arith.constant 0 : index
      %50 = vector.load %arg5[%c0_33, %c0_34] : memref<128x1xf32, #tpu.memory_space<vmem>>, vector<128x1xf32>
      %51 = arith.mulf %50, %49 : vector<128x1xf32>
      %c0_35 = arith.constant 0 : index
      %c0_36 = arith.constant 0 : index
      %52 = vector.load %arg6[%c0_35, %c0_36] : memref<128x1xf32, #tpu.memory_space<vmem>>, vector<128x1xf32>
      %53 = arith.mulf %39, %51 : vector<128x1xf32>
      %54 = arith.subf %52, %53 : vector<128x1xf32>
      %c0_37 = arith.constant 0 : index
      %c0_38 = arith.constant 0 : index
      %55 = vector.load %arg4[%c0_37, %c0_38] : memref<128x225xf32, #tpu.memory_space<vmem>>, vector<128x225xf32>
      %cst_39 = arith.constant dense<0.000000e+00> : vector<128xf32>
      %56 = vector.multi_reduction <add>, %55, %cst_39 [1] : vector<128x225xf32> to vector<128xf32>
      %57 = vector.shape_cast %56 : vector<128xf32> to vector<128x1xf32>
      %58 = arith.mulf %54, %57 : vector<128x1xf32>
      %59 = vector.shape_cast %58 : vector<128x1xf32> to vector<1x128x1xf32>
      %cst_40 = arith.constant dense<0.000000e+00> : vector<1xf32>
      %60 = vector.multi_reduction <add>, %59, %cst_40 [1, 2] : vector<1x128x1xf32> to vector<1xf32>
      %61 = vector.shape_cast %60 : vector<1xf32> to vector<1x1x1xf32>
      %62 = vector.extract %61[0, 0, 0] : f32 from vector<1x1x1xf32>
      %c0_41 = arith.constant 0 : index
      %c0_42 = arith.constant 0 : index
      %c0_43 = arith.constant 0 : index
      %63 = vector.load %arg11[%c0_41, %c0_42, %c0_43] : memref<2x128x1xf32, #tpu.memory_space<vmem>>, vector<2x128x1xf32>
      %64 = vector.shape_cast %51 : vector<128x1xf32> to vector<1x128x1xf32>
      %65 = vector.broadcast %64 : vector<1x128x1xf32> to vector<2x128x1xf32>
      %66 = arith.mulf %63, %65 : vector<2x128x1xf32>
      %cst_44 = arith.constant dense<0.000000e+00> : vector<2x1xf32>
      %67 = vector.multi_reduction <add>, %66, %cst_44 [1] : vector<2x128x1xf32> to vector<2x1xf32>
      %68 = vector.broadcast %62 : f32 to vector<2x1xf32>
      %69 = arith.addf %67, %68 : vector<2x1xf32>
      %c0_45 = arith.constant 0 : index
      %c0_46 = arith.constant 0 : index
      %70 = vector.load %arg7[%c0_45, %c0_46] : memref<1x1xf32, #tpu.memory_space<vmem>>, vector<1x1xf32>
      %71 = vector.broadcast %70 : vector<1x1xf32> to vector<2x1xf32>
      %72 = arith.addf %69, %71 : vector<2x1xf32>
      %cst_47 = arith.constant 0.000000e+00 : f32
      %73 = vector.broadcast %cst_47 : f32 to vector<2x1xf32>
      %74 = arith.subf %73, %72 : vector<2x1xf32>
      %75 = math.exp %74 : vector<2x1xf32>
      %cst_48 = arith.constant 1.000000e+00 : f32
      %76 = vector.broadcast %cst_48 : f32 to vector<2x1xf32>
      %77 = arith.addf %76, %75 : vector<2x1xf32>
      %cst_49 = arith.constant 1.000000e+00 : f32
      %78 = vector.broadcast %cst_49 : f32 to vector<2x1xf32>
      %79 = arith.divf %78, %77 : vector<2x1xf32>
      %c0_50 = arith.constant 0 : index
      %c0_51 = arith.constant 0 : index
      %80 = vector.load %arg8[%c0_50, %c0_51] : memref<2x1xf32, #tpu.memory_space<vmem>>, vector<2x1xf32>
      tpu.vector_store %arg8[%c0_50, %c0_51], %79 {strides = array<i32>} : memref<2x1xf32, #tpu.memory_space<vmem>>, vector<2x1xf32>,
    } else {
    }
    return
  }
  func.func @transform_0(%arg0: i32) -> (i32, i32, i32) {
    %c0_i32 = arith.constant 0 : i32
    %c0_i32_0 = arith.constant 0 : i32
    %c0_i32_1 = arith.constant 0 : i32
    return %arg0, %c0_i32, %c0_i32_0 : i32, i32, i32
  }
  func.func @transform_1(%arg0: i32) -> (i32, i32) {
    %c0_i32 = arith.constant 0 : i32
    %c0_i32_0 = arith.constant 0 : i32
    %c0_i32_1 = arith.constant 0 : i32
    return %c0_i32, %c0_i32_0 : i32, i32
  }
  func.func @transform_2(%arg0: i32) -> (i32, i32) {
    %c0_i32 = arith.constant 0 : i32
    %c0_i32_0 = arith.constant 0 : i32
    %c0_i32_1 = arith.constant 0 : i32
    return %c0_i32, %c0_i32_0 : i32, i32
  }
  func.func @transform_3(%arg0: i32) -> (i32, i32) {
    %c0_i32 = arith.constant 0 : i32
    %c0_i32_0 = arith.constant 0 : i32
    %c0_i32_1 = arith.constant 0 : i32
    return %c0_i32, %c0_i32_0 : i32, i32
  }
  func.func @transform_4(%arg0: i32) -> (i32, i32) {
    %c0_i32 = arith.constant 0 : i32
    %c0_i32_0 = arith.constant 0 : i32
    %c0_i32_1 = arith.constant 0 : i32
    return %c0_i32, %c0_i32_0 : i32, i32
  }
  func.func @transform_5(%arg0: i32) -> (i32, i32) {
    %c0_i32 = arith.constant 0 : i32
    %c0_i32_0 = arith.constant 0 : i32
    %c0_i32_1 = arith.constant 0 : i32
    return %c0_i32, %c0_i32_0 : i32, i32
  }
  func.func @transform_6(%arg0: i32) -> (i32, i32) {
    %c0_i32 = arith.constant 0 : i32
    %c0_i32_0 = arith.constant 0 : i32
    %c0_i32_1 = arith.constant 0 : i32
    return %c0_i32, %c0_i32_0 : i32, i32
  }
  func.func @transform_7(%arg0: i32) -> (i32, i32) {
    %c0_i32 = arith.constant 0 : i32
    %c0_i32_0 = arith.constant 0 : i32
    %c0_i32_1 = arith.constant 0 : i32
    return %c0_i32, %c0_i32_0 : i32, i32
  }
}

</mosaic_0001>

<llo_original>
// kernel: discriminator_forward.2
$region0: #{discriminator_forward.2}
  #allocation0 [shape = 'u32[]', space=smem, size = 0x4, offset = 0x4, fixed_abs, tag = 'smem constant byte address 0x4 - core index']
  #allocation1 [shape = 'u32[144,128]{1,0:T(1,128)}', space=vmem, size = 0x12000, scoped, tag = 'internal scratch']
  %s0 = inlined_call_operand.vmem [shape: bf16[2,32,961], index: 0, kind: input, shape index: {}]
  %s1 = inlined_call_operand.vmem [shape: bf16[64,32], index: 1, kind: input, shape index: {}]
  %s2 = inlined_call_operand.vmem [shape: f32[64,1], index: 2, kind: input, shape index: {}]
  %s3 = inlined_call_operand.vmem [shape: bf16[2,64,961], index: 3, kind: output, shape index: {}]
  %s4 = sld [smem:[#allocation0]]
  $region45: #{discriminator_forward.2} parent=0
    _
  %s6 = ssub.s32 1, %s4
  %s7 = scalar_select 0, %s6, %s4
  loop: start=0, step=1, limit=4
  $region2: #{discriminator_forward.2} parent=0 // loop_pre_header
    _
  $region3: #{discriminator_forward.2} parent=0 // loop_header
    %s9 = sphi 0, %s13
    %p10 = scmp.ge.s32.totalorder %s9, 4
    %s19 = sphi 0, %s21
    %s22 = sphi 0, %s19
    %s23 = sphi 0, %s22
    %s39 = sphi 0, %s23
    %s43 = sphi 0, %s43
    %s45 = sphi 0, %s43
    %s46 = sphi 0, %s45
    %s60 = sphi 0, %s46
    %s64 = sphi 0, %s64
    %s66 = sphi 0, %s64
    %s67 = sphi 0, %s66
    %s81 = sphi 0, %s67
    %s87 = sphi 0, %s89
    %s90 = sphi 0, %s87
    %s91 = sphi 0, %s90
    %s107 = sphi 0, %s91
  $region4: #{discriminator_forward.2} parent=0 // loop_header_branch
    %12 = sbr.rel (%p10) target = $region8
  $region5: #{discriminator_forward.2} parent=0 // loop_body
    %s14 = ssub.s32 %s9, 1
    %s15 = ssub.s32 %s9, 2
    %s16 = sadd.s32 %s9, 1
    %s17 = ssub.s32 %s9, %s16
    %p18 = scmp.eq.s32.totalorder %s17, 0
    %s20 = sadd.s32 %s19, 1
    %s21 = scalar_select %p18, %s19, %s20
    %p24 = pneg %p18
    %p25 = scmp.eq.s32.totalorder %s9, 1
    %p26 = por %p24, %p25
    %p27 = scmp.ne.s32.totalorder %s19, %s22
    %p28 = scmp.eq.s32.totalorder %s9, 0
    %p29 = por %p27, %p28
    %p30 = scmp.ne.s32.totalorder %s19, %s22
    %p31 = scmp.eq.s32.totalorder %s14, 1
    %p32 = por %p30, %p31
    %p33 = scmp.ne.s32.totalorder %s22, %s23
    %p34 = scmp.eq.s32.totalorder %s14, 0
    %p35 = por %p33, %p34
    %p36 = scmp.ne.s32.totalorder %s22, %s23
    %p37 = scmp.eq.s32.totalorder %s15, 1
    %p38 = por %p36, %p37
    %p40 = scmp.ne.s32.totalorder %s23, %s39
    %p41 = scmp.eq.s32.totalorder %s15, 0
    %p42 = por %p40, %p41
    %s44 = sadd.s32 %s43, 1
    %p47 = scmp.eq.s32.totalorder %s9, 1
    %p48 = scmp.ne.s32.totalorder %s43, %s45
    %p49 = scmp.eq.s32.totalorder %s9, 0
    %p50 = por %p48, %p49
    %p51 = scmp.ne.s32.totalorder %s43, %s45
    %p52 = scmp.eq.s32.totalorder %s14, 1
    %p53 = por %p51, %p52
    %p54 = scmp.ne.s32.totalorder %s45, %s46
    %p55 = scmp.eq.s32.totalorder %s14, 0
    %p56 = por %p54, %p55
    %p57 = scmp.ne.s32.totalorder %s45, %s46
    %p58 = scmp.eq.s32.totalorder %s15, 1
    %p59 = por %p57, %p58
    %p61 = scmp.ne.s32.totalorder %s46, %s60
    %p62 = scmp.eq.s32.totalorder %s15, 0
    %p63 = por %p61, %p62
    %s65 = sadd.s32 %s64, 1
    %p68 = scmp.eq.s32.totalorder %s9, 1
    %p69 = scmp.ne.s32.totalorder %s64, %s66
    %p70 = scmp.eq.s32.totalorder %s9, 0
    %p71 = por %p69, %p70
    %p72 = scmp.ne.s32.totalorder %s64, %s66
    %p73 = scmp.eq.s32.totalorder %s14, 1
    %p74 = por %p72, %p73
    %p75 = scmp.ne.s32.totalorder %s66, %s67
    %p76 = scmp.eq.s32.totalorder %s14, 0
    %p77 = por %p75, %p76
    %p78 = scmp.ne.s32.totalorder %s66, %s67
    %p79 = scmp.eq.s32.totalorder %s15, 1
    %p80 = por %p78, %p79
    %p82 = scmp.ne.s32.totalorder %s67, %s81
    %p83 = scmp.eq.s32.totalorder %s15, 0
    %p84 = por %p82, %p83
    %s85 = ssub.s32 %s9, %s16
    %p86 = scmp.eq.s32.totalorder %s85, 0
    %s88 = sadd.s32 %s87, 1
    %s89 = scalar_select %p86, %s87, %s88
    %p92 = pneg %p86
    %p93 = scmp.eq.s32.totalorder %s9, 1
    %p94 = por %p92, %p93
    %p95 = scmp.ne.s32.totalorder %s87, %s90
    %p96 = scmp.eq.s32.totalorder %s9, 0
    %p97 = por %p95, %p96
    %p98 = scmp.ne.s32.totalorder %s87, %s90
    %p99 = scmp.eq.s32.totalorder %s14, 1
    %p100 = por %p98, %p99
    %p101 = scmp.ne.s32.totalorder %s90, %s91
    %p102 = scmp.eq.s32.totalorder %s14, 0
    %p103 = por %p101, %p102
    %p104 = scmp.ne.s32.totalorder %s90, %s91
    %p105 = scmp.eq.s32.totalorder %s15, 1
    %p106 = por %p104, %p105
    %p108 = scmp.ne.s32.totalorder %s91, %s107
    %p109 = scmp.eq.s32.totalorder %s15, 0
    %p110 = por %p108, %p109
    %p111 = scmp.le.s32.totalorder 1, %s9
    %p112 = scmp.lt.s32.totalorder %s9, 3
    %p113 = pnand %p111, %p112
    %p114 = pneg %p113
    // Predicated region
    $region9: #{discriminator_forward.2} parent=5 // pred_check
      _
    $region10: #{discriminator_forward.2} parent=5 // pred_check_branch
      %116 = sbr.rel (%p113) target = $region12
    $region11: #{discriminator_forward.2} parent=5 // pred_region
      %s117 = ssub.s32 %s9, 1
      // Predicated region
      $region13: #{discriminator_forward.2} parent=11 // pred_check
        %p118 = pneg %p56
      $region14: #{discriminator_forward.2} parent=11 // pred_check_branch
        %120 = sbr.rel (%p118) target = $region16
      $region15: #{discriminator_forward.2} parent=11 // pred_region
        _
      $region16: #{discriminator_forward.2} parent=11 // pred_fallthru
        _
      // Predicated region
      $region17: #{discriminator_forward.2} parent=11 // pred_check
        %p121 = pneg %p77
      $region18: #{discriminator_forward.2} parent=11 // pred_check_branch
        %123 = sbr.rel (%p121) target = $region20
      $region19: #{discriminator_forward.2} parent=11 // pred_region
        _
      $region20: #{discriminator_forward.2} parent=11 // pred_fallthru
        _
    $region12: #{discriminator_forward.2} parent=5 // pred_fallthru
      _
    %p124 = scmp.lt.s32.totalorder %s9, 2
    // Predicated region
    $region21: #{discriminator_forward.2} parent=5 // pred_check
      %p125 = pneg %p124
    $region22: #{discriminator_forward.2} parent=5 // pred_check_branch
      %127 = sbr.rel (%p125) target = $region24
    $region23: #{discriminator_forward.2} parent=5 // pred_region
      // Predicated region
      $region25: #{discriminator_forward.2} parent=23 // pred_check
        %p128 = pneg %p29
      $region26: #{discriminator_forward.2} parent=23 // pred_check_branch
        %130 = sbr.rel (%p128) target = $region28
      $region27: #{discriminator_forward.2} parent=23 // pred_region
        %p131 = scmp.lt.s32.totalorder %s9, 1
        %s132 = scalar_select %p131, %s9, 1
        %s133 = smul.addr %s132, 32
        %s134 = smul.addr %s133, 4
        %s135 = scalar_lea.vmem %s0, %s134
      $region28: #{discriminator_forward.2} parent=23 // pred_fallthru
        _
    $region24: #{discriminator_forward.2} parent=5 // pred_fallthru
      _
    %p136 = scmp.le.s32.totalorder 1, %s9
    %p137 = scmp.lt.s32.totalorder %s9, 3
    %p138 = pnand %p136, %p137
    %p139 = pneg %p138
    // Predicated region
    $region29: #{discriminator_forward.2} parent=5 // pred_check
      _
    $region30: #{discriminator_forward.2} parent=5 // pred_check_branch
      %141 = sbr.rel (%p138) target = $region32
    $region31: #{discriminator_forward.2} parent=5 // pred_region
      %s142 = ssub.s32 %s9, 1
      %p143 = scmp.lt.s32.totalorder %s14, 1
      %s144 = scalar_select %p143, %s14, 1
      %s145 = smul.addr %s144, 32
      %s146 = smul.addr %s145, 4
      %s147 = scalar_lea.vmem %s0, %s146
      %p148 = pneg %p35
      %p149 = pneg %p32
      %p150 = pneg %p56
      %p151 = pneg %p53
      %p152 = pneg %p77
      %p153 = pneg %p74
      %p154 = pneg %p103
      %p155 = pneg %p100
      %p156 = scmp.lt.s32.totalorder %s14, 1
      %s157 = scalar_select %p156, %s14, 1
      %s158 = smul.addr %s157, 64
      %s159 = smul.addr %s158, 4
      %s160 = scalar_lea.vmem %s3, %s159
      %p161 = scmp.lt.s32.totalorder %s14, 1
      %s162 = scalar_select %p161, %s14, 1
      %s163 = smul.addr %s162, 32
      %s164 = smul.addr %s163, 4
      %s165 = scalar_lea.vmem %s0, %s164
      %p166 = scmp.lt.s32.totalorder %s14, 1
      %s167 = scalar_select %p166, %s14, 1
      %s168 = smul.addr %s167, 64
      %s169 = smul.addr %s168, 4
      %s170 = scalar_lea.vmem %s3, %s169
      %v172 = vld [vmem:[%s1] sm:$0xf]
      %v173 = vld [vmem:[%s1 + $0x4] sm:$0xf]
      %v174 = vld [vmem:[%s1 + $0x8] sm:$0xf]
      %v175 = vld [vmem:[%s1 + $0xc] sm:$0xf]
      %v176 = vld [vmem:[%s1 + $0x10] sm:$0xf]
      %v177 = vld [vmem:[%s1 + $0x14] sm:$0xf]
      %v178 = vld [vmem:[%s1 + $0x18] sm:$0xf]
      %v179 = vld [vmem:[%s1 + $0x1c] sm:$0xf]
      %v180 = vld [vmem:[%s165] sm:$0xff]
      %v181 = vld [vmem:[%s165 + $0x8] sm:$0xff]
      %v182 = vld [vmem:[%s165 + $0x10] sm:$0xff]
      %v183 = vld [vmem:[%s165 + $0x18] sm:$0xff]
      %v184 = vld [vmem:[%s165 + $0x20] sm:$0xff]
      %v185 = vld [vmem:[%s165 + $0x28] sm:$0xff]
      %v186 = vld [vmem:[%s165 + $0x30] sm:$0xff]
      %v187 = vld [vmem:[%s165 + $0x38] sm:$0xff]
      %v188 = vld [vmem:[%s165 + $0x40] sm:$0xff]
      %v189 = vld [vmem:[%s165 + $0x48] sm:$0xff]
      %v190 = vld [vmem:[%s165 + $0x50] sm:$0xff]
      %v191 = vld [vmem:[%s165 + $0x58] sm:$0xff]
      %v192 = vld [vmem:[%s165 + $0x60] sm:$0xff]
      %v193 = vld [vmem:[%s165 + $0x68] sm:$0xff]
      %v194 = vld [vmem:[%s165 + $0x70] sm:$0xff]
      %v195 = vld [vmem:[%s165 + $0x78] sm:$0xff]
      %v196 = vld [vmem:[%s2] sm:$0xff]
      %v197 = vld [vmem:[%s2 + $0x8] sm:$0xff]
      %v198 = vld [vmem:[%s2 + $0x10] sm:$0xff]
      %v199 = vld [vmem:[%s2 + $0x18] sm:$0xff]
      %v200 = vld [vmem:[%s2 + $0x20] sm:$0xff]
      %v201 = vld [vmem:[%s2 + $0x28] sm:$0xff]
      %v202 = vld [vmem:[%s2 + $0x30] sm:$0xff]
      %v203 = vld [vmem:[%s2 + $0x38] sm:$0xff]
      %205 = vset.pattern.permute.xlu0 0
      %206 = vperm.xlu0 %205, %v196
      %v207 = vpop.permute.xlu0 %206
      %210 = vset.pattern.permute.xlu0 0
      %211 = vperm.xlu0 %210, %v197
      %v212 = vpop.permute.xlu0 %211
      %215 = vset.pattern.permute.xlu0 0
      %216 = vperm.xlu0 %215, %v198
      %v217 = vpop.permute.xlu0 %216
      %220 = vset.pattern.permute.xlu0 0
      %221 = vperm.xlu0 %220, %v199
      %v222 = vpop.permute.xlu0 %221
      %225 = vset.pattern.permute.xlu0 0
      %226 = vperm.xlu0 %225, %v200
      %v227 = vpop.permute.xlu0 %226
      %230 = vset.pattern.permute.xlu0 0
      %231 = vperm.xlu0 %230, %v201
      %v232 = vpop.permute.xlu0 %231
      %235 = vset.pattern.permute.xlu0 0
      %236 = vperm.xlu0 %235, %v202
      %v237 = vpop.permute.xlu0 %236
      %240 = vset.pattern.permute.xlu0 0
      %241 = vperm.xlu0 %240, %v203
      %v242 = vpop.permute.xlu0 %241
      %v252 = vunpack.c.l.b16 %v172
      %v253 = vunpack.c.l.b16 %v173
      %v254 = vunpack.c.l.b16 %v174
      %v255 = vunpack.c.l.b16 %v175
      %v256 = vunpack.c.l.b16 %v176
      %v257 = vunpack.c.l.b16 %v177
      %v258 = vunpack.c.l.b16 %v178
      %v259 = vunpack.c.l.b16 %v179
      %v260 = vpack.c.b16 %v253, %v252
      %v261 = vpack.c.b16 %v255, %v254
      %v262 = vpack.c.b16 %v257, %v256
      %v263 = vpack.c.b16 %v259, %v258
      %v280 = vunpack.c.l.b16 %v180
      %v281 = vunpack.c.h.b16 %v180
      %v282 = vunpack.c.l.b16 %v181
      %v283 = vunpack.c.h.b16 %v181
      %v284 = vunpack.c.l.b16 %v182
      %v285 = vunpack.c.h.b16 %v182
      %v286 = vunpack.c.l.b16 %v183
      %v287 = vunpack.c.h.b16 %v183
      %v288 = vunpack.c.l.b16 %v184
      %v289 = vunpack.c.h.b16 %v184
      %v290 = vunpack.c.l.b16 %v185
      %v291 = vunpack.c.h.b16 %v185
      %v292 = vunpack.c.l.b16 %v186
      %v293 = vunpack.c.h.b16 %v186
      %v294 = vunpack.c.l.b16 %v187
      %v295 = vunpack.c.h.b16 %v187
      %v296 = vunpack.c.l.b16 %v188
      %v297 = vunpack.c.h.b16 %v188
      %v298 = vunpack.c.l.b16 %v189
      %v299 = vunpack.c.h.b16 %v189
      %v300 = vunpack.c.l.b16 %v190
      %v301 = vunpack.c.h.b16 %v190
      %v302 = vunpack.c.l.b16 %v191
      %v303 = vunpack.c.h.b16 %v191
      %v304 = vunpack.c.l.b16 %v192
      %v305 = vunpack.c.h.b16 %v192
      %v306 = vunpack.c.l.b16 %v193
      %v307 = vunpack.c.h.b16 %v193
      %v308 = vunpack.c.l.b16 %v194
      %v309 = vunpack.c.h.b16 %v194
      %v310 = vunpack.c.l.b16 %v195
      %v311 = vunpack.c.h.b16 %v195
      %v312 = vpack.c.b16 %v288, %v280
      %v313 = vpack.c.b16 %v289, %v281
      %v314 = vpack.c.b16 %v290, %v282
      %v315 = vpack.c.b16 %v291, %v283
      %v316 = vpack.c.b16 %v292, %v284
      %v317 = vpack.c.b16 %v293, %v285
      %v318 = vpack.c.b16 %v294, %v286
      %v319 = vpack.c.b16 %v295, %v287
      %v320 = vpack.c.b16 %v304, %v296
      %v321 = vpack.c.b16 %v305, %v297
      %v322 = vpack.c.b16 %v306, %v298
      %v323 = vpack.c.b16 %v307, %v299
      %v324 = vpack.c.b16 %v308, %v300
      %v325 = vpack.c.b16 %v309, %v301
      %v326 = vpack.c.b16 %v310, %v302
      %v327 = vpack.c.b16 %v311, %v303
      %vm344 = vcmask 261120
      %v346 = vsel %vm344, %v260, 0
      %v349 = vsel %vm344, %v261, 0
      %v352 = vsel %vm344, %v262, 0
      %v355 = vsel %vm344, %v263, 0
      %357 = vmatprep.subr.bf16.mxu0 %v313
      %358 = vmatpush1.bf16.msra.mxu0 %v312
      %359 = vmatprep.subr.bf16.mxu0 %v321
      %360 = vmatpush1.bf16.msra.mxu0 %v320
      %361 = vmatprep.subr.bf16.mxu0 0
      %362 = vmatpush1.bf16.msra.mxu0 0
      %363 = vmatprep.subr.bf16.mxu0 0
      %364 = vmatpush1.bf16.msra.mxu0 0
      %365 = vmatprep.subr.bf16.mxu0 0
      %366 = vmatpush1.bf16.msra.mxu0 0
      %367 = vmatprep.subr.bf16.mxu0 0
      %368 = vmatpush1.bf16.msra.mxu0 0
      %369 = vmatprep.subr.bf16.mxu0 0
      %370 = vmatpush1.bf16.msra.mxu0 0
      %371 = vmatprep.subr.bf16.mxu0 0
      %372 = vmatpush1.bf16.msra.mxu0 0
      %373 = vmatprep.subr.bf16.mxu0 0
      %374 = vmatpush1.bf16.msra.mxu0 0
      %375 = vmatprep.subr.bf16.mxu0 0
      %376 = vmatpush1.bf16.msra.mxu0 0
      %377 = vmatprep.subr.bf16.mxu0 0
      %378 = vmatpush1.bf16.msra.mxu0 0
      %379 = vmatprep.subr.bf16.mxu0 0
      %380 = vmatpush1.bf16.msra.mxu0 0
      %381 = vmatprep.subr.bf16.mxu0 0
      %382 = vmatpush1.bf16.msra.mxu0 0
      %383 = vmatprep.subr.bf16.mxu0 0
      %384 = vmatpush1.bf16.msra.mxu0 0
      %385 = vmatprep.subr.bf16.mxu0 0
      %386 = vmatpush1.bf16.msra.mxu0 0
      %387 = vmatprep.subr.bf16.mxu0 0
      %388 = vmatpush1.bf16.msra.mxu0 0
      %389 = vmatprep.mubr.bf16.mxu0 0
      %390 = vmatmul.mubr.bf16.gmra.mrb[0].mxu0 %v346
      %v391 = vpop.f32.mrb[0].mxu0
      %v392 = vadd.f32 %v207, %v391
      %v393 = vpop.f32.mrb[0].mxu0
      %v394 = vadd.f32 %v207, %v393
      %v395 = vpop.f32.mrb[0].mxu0
      %v396 = vadd.f32 %v212, %v395
      %v397 = vpop.f32.mrb[0].mxu0
      %v398 = vadd.f32 %v212, %v397
      %399 = vmatprep.mubr.bf16.mxu0 0
      %400 = vmatmul.mubr.bf16.gmra.mrb[0].mxu0 %v349
      %v401 = vpop.f32.mrb[0].mxu0
      %v402 = vadd.f32 %v217, %v401
      %v403 = vpop.f32.mrb[0].mxu0
      %v404 = vadd.f32 %v217, %v403
      %v405 = vpop.f32.mrb[0].mxu0
      %v406 = vadd.f32 %v222, %v405
      %v407 = vpop.f32.mrb[0].mxu0
      %v408 = vadd.f32 %v222, %v407
      %409 = vmatprep.mubr.bf16.mxu0 0
      %410 = vmatmul.mubr.bf16.gmra.mrb[0].mxu0 %v352
      %v411 = vpop.f32.mrb[0].mxu0
      %v412 = vadd.f32 %v227, %v411
      %v413 = vpop.f32.mrb[0].mxu0
      %v414 = vadd.f32 %v227, %v413
      %v415 = vpop.f32.mrb[0].mxu0
      %v416 = vadd.f32 %v232, %v415
      %v417 = vpop.f32.mrb[0].mxu0
      %v418 = vadd.f32 %v232, %v417
      %419 = vmatprep.mubr.bf16.mxu0 0
      %420 = vmatmul.mubr.bf16.gmra.mrb[0].mxu0 %v355
      %v421 = vpop.f32.mrb[0].mxu0
      %v422 = vadd.f32 %v237, %v421
      %v423 = vpop.f32.mrb[0].mxu0
      %v424 = vadd.f32 %v237, %v423
      %v425 = vpop.f32.mrb[0].mxu0
      %v426 = vadd.f32 %v242, %v425
      %v427 = vpop.f32.mrb[0].mxu0
      %v428 = vadd.f32 %v242, %v427
      %429 = vdwg.mxu0
      %430 = vmatprep.subr.bf16.mxu0 %v315
      %431 = vmatpush1.bf16.msra.mxu0 %v314
      %432 = vmatprep.subr.bf16.mxu0 %v323
      %433 = vmatpush1.bf16.msra.mxu0 %v322
      %434 = vmatprep.subr.bf16.mxu0 0
      %435 = vmatpush1.bf16.msra.mxu0 0
      %436 = vmatprep.subr.bf16.mxu0 0
      %437 = vmatpush1.bf16.msra.mxu0 0
      %438 = vmatprep.subr.bf16.mxu0 0
      %439 = vmatpush1.bf16.msra.mxu0 0
      %440 = vmatprep.subr.bf16.mxu0 0
      %441 = vmatpush1.bf16.msra.mxu0 0
      %442 = vmatprep.subr.bf16.mxu0 0
      %443 = vmatpush1.bf16.msra.mxu0 0
      %444 = vmatprep.subr.bf16.mxu0 0
      %445 = vmatpush1.bf16.msra.mxu0 0
      %446 = vmatprep.subr.bf16.mxu0 0
      %447 = vmatpush1.bf16.msra.mxu0 0
      %448 = vmatprep.subr.bf16.mxu0 0
      %449 = vmatpush1.bf16.msra.mxu0 0
      %450 = vmatprep.subr.bf16.mxu0 0
      %451 = vmatpush1.bf16.msra.mxu0 0
      %452 = vmatprep.subr.bf16.mxu0 0
      %453 = vmatpush1.bf16.msra.mxu0 0
      %454 = vmatprep.subr.bf16.mxu0 0
      %455 = vmatpush1.bf16.msra.mxu0 0
      %456 = vmatprep.subr.bf16.mxu0 0
      %457 = vmatpush1.bf16.msra.mxu0 0
      %458 = vmatprep.subr.bf16.mxu0 0
      %459 = vmatpush1.bf16.msra.mxu0 0
      %460 = vmatprep.subr.bf16.mxu0 0
      %461 = vmatpush1.bf16.msra.mxu0 0
      %462 = vmatprep.mubr.bf16.mxu0 0
      %463 = vmatmul.mubr.bf16.gmra.mrb[0].mxu0 %v346
      %v464 = vpop.f32.mrb[0].mxu0
      %v465 = vadd.f32 %v207, %v464
      %v466 = vpop.f32.mrb[0].mxu0
      %v467 = vadd.f32 %v207, %v466
      %v468 = vpop.f32.mrb[0].mxu0
      %v469 = vadd.f32 %v212, %v468
      %v470 = vpop.f32.mrb[0].mxu0
      %v471 = vadd.f32 %v212, %v470
      %472 = vmatprep.mubr.bf16.mxu0 0
      %473 = vmatmul.mubr.bf16.gmra.mrb[0].mxu0 %v349
      %v474 = vpop.f32.mrb[0].mxu0
      %v475 = vadd.f32 %v217, %v474
      %v476 = vpop.f32.mrb[0].mxu0
      %v477 = vadd.f32 %v217, %v476
      %v478 = vpop.f32.mrb[0].mxu0
      %v479 = vadd.f32 %v222, %v478
      %v480 = vpop.f32.mrb[0].mxu0
      %v481 = vadd.f32 %v222, %v480
      %482 = vmatprep.mubr.bf16.mxu0 0
      %483 = vmatmul.mubr.bf16.gmra.mrb[0].mxu0 %v352
      %v484 = vpop.f32.mrb[0].mxu0
      %v485 = vadd.f32 %v227, %v484
      %v486 = vpop.f32.mrb[0].mxu0
      %v487 = vadd.f32 %v227, %v486
      %v488 = vpop.f32.mrb[0].mxu0
      %v489 = vadd.f32 %v232, %v488
      %v490 = vpop.f32.mrb[0].mxu0
      %v491 = vadd.f32 %v232, %v490
      %492 = vmatprep.mubr.bf16.mxu0 0
      %493 = vmatmul.mubr.bf16.gmra.mrb[0].mxu0 %v355
      %v494 = vpop.f32.mrb[0].mxu0
      %v495 = vadd.f32 %v237, %v494
      %v496 = vpop.f32.mrb[0].mxu0
      %v497 = vadd.f32 %v237, %v496
      %v498 = vpop.f32.mrb[0].mxu0
      %v499 = vadd.f32 %v242, %v498
      %v500 = vpop.f32.mrb[0].mxu0
      %v501 = vadd.f32 %v242, %v500
      %502 = vdwg.mxu0
      %503 = vmatprep.subr.bf16.mxu0 %v317
      %504 = vmatpush1.bf16.msra.mxu0 %v316
      %505 = vmatprep.subr.bf16.mxu0 %v325
      %506 = vmatpush1.bf16.msra.mxu0 %v324
      %507 = vmatprep.subr.bf16.mxu0 0
      %508 = vmatpush1.bf16.msra.mxu0 0
      %509 = vmatprep.subr.bf16.mxu0 0
      %510 = vmatpush1.bf16.msra.mxu0 0
      %511 = vmatprep.subr.bf16.mxu0 0
      %512 = vmatpush1.bf16.msra.mxu0 0
      %513 = vmatprep.subr.bf16.mxu0 0
      %514 = vmatpush1.bf16.msra.mxu0 0
      %515 = vmatprep.subr.bf16.mxu0 0
      %516 = vmatpush1.bf16.msra.mxu0 0
      %517 = vmatprep.subr.bf16.mxu0 0
      %518 = vmatpush1.bf16.msra.mxu0 0
      %519 = vmatprep.subr.bf16.mxu0 0
      %520 = vmatpush1.bf16.msra.mxu0 0
      %521 = vmatprep.subr.bf16.mxu0 0
      %522 = vmatpush1.bf16.msra.mxu0 0
      %523 = vmatprep.subr.bf16.mxu0 0
      %524 = vmatpush1.bf16.msra.mxu0 0
      %525 = vmatprep.subr.bf16.mxu0 0
      %526 = vmatpush1.bf16.msra.mxu0 0
      %527 = vmatprep.subr.bf16.mxu0 0
      %528 = vmatpush1.bf16.msra.mxu0 0
      %529 = vmatprep.subr.bf16.mxu0 0
      %530 = vmatpush1.bf16.msra.mxu0 0
      %531 = vmatprep.subr.bf16.mxu0 0
      %532 = vmatpush1.bf16.msra.mxu0 0
      %533 = vmatprep.subr.bf16.mxu0 0
      %534 = vmatpush1.bf16.msra.mxu0 0
      %535 = vmatprep.mubr.bf16.mxu0 0
      %536 = vmatmul.mubr.bf16.gmra.mrb[0].mxu0 %v346
      %v537 = vpop.f32.mrb[0].mxu0
      %v538 = vadd.f32 %v207, %v537
      %v539 = vpop.f32.mrb[0].mxu0
      %v540 = vadd.f32 %v207, %v539
      %v541 = vpop.f32.mrb[0].mxu0
      %v542 = vadd.f32 %v212, %v541
      %v543 = vpop.f32.mrb[0].mxu0
      %v544 = vadd.f32 %v212, %v543
      %545 = vmatprep.mubr.bf16.mxu0 0
      %546 = vmatmul.mubr.bf16.gmra.mrb[0].mxu0 %v349
      %v547 = vpop.f32.mrb[0].mxu0
      %v548 = vadd.f32 %v217, %v547
      %v549 = vpop.f32.mrb[0].mxu0
      %v550 = vadd.f32 %v217, %v549
      %v551 = vpop.f32.mrb[0].mxu0
      %v552 = vadd.f32 %v222, %v551
      %v553 = vpop.f32.mrb[0].mxu0
      %v554 = vadd.f32 %v222, %v553
      %555 = vmatprep.mubr.bf16.mxu0 0
      %556 = vmatmul.mubr.bf16.gmra.mrb[0].mxu0 %v352
      %v557 = vpop.f32.mrb[0].mxu0
      %v558 = vadd.f32 %v227, %v557
      %v559 = vpop.f32.mrb[0].mxu0
      %v560 = vadd.f32 %v227, %v559
      %v561 = vpop.f32.mrb[0].mxu0
      %v562 = vadd.f32 %v232, %v561
      %v563 = vpop.f32.mrb[0].mxu0
      %v564 = vadd.f32 %v232, %v563
      %565 = vmatprep.mubr.bf16.mxu0 0
      %566 = vmatmul.mubr.bf16.gmra.mrb[0].mxu0 %v355
      %v567 = vpop.f32.mrb[0].mxu0
      %v568 = vadd.f32 %v237, %v567
      %v569 = vpop.f32.mrb[0].mxu0
      %v570 = vadd.f32 %v237, %v569
      %v571 = vpop.f32.mrb[0].mxu0
      %v572 = vadd.f32 %v242, %v571
      %v573 = vpop.f32.mrb[0].mxu0
      %v574 = vadd.f32 %v242, %v573
      %575 = vdwg.mxu0
      %576 = vmatprep.subr.bf16.mxu0 %v319
      %577 = vmatpush1.bf16.msra.mxu0 %v318
      %578 = vmatprep.subr.bf16.mxu0 %v327
      %579 = vmatpush1.bf16.msra.mxu0 %v326
      %580 = vmatprep.subr.bf16.mxu0 0
      %581 = vmatpush1.bf16.msra.mxu0 0
      %582 = vmatprep.subr.bf16.mxu0 0
      %583 = vmatpush1.bf16.msra.mxu0 0
      %584 = vmatprep.subr.bf16.mxu0 0
      %585 = vmatpush1.bf16.msra.mxu0 0
      %586 = vmatprep.subr.bf16.mxu0 0
      %587 = vmatpush1.bf16.msra.mxu0 0
      %588 = vmatprep.subr.bf16.mxu0 0
      %589 = vmatpush1.bf16.msra.mxu0 0
      %590 = vmatprep.subr.bf16.mxu0 0
      %591 = vmatpush1.bf16.msra.mxu0 0
      %592 = vmatprep.subr.bf16.mxu0 0
      %593 = vmatpush1.bf16.msra.mxu0 0
      %594 = vmatprep.subr.bf16.mxu0 0
      %595 = vmatpush1.bf16.msra.mxu0 0
      %596 = vmatprep.subr.bf16.mxu0 0
      %597 = vmatpush1.bf16.msra.mxu0 0
      %598 = vmatprep.subr.bf16.mxu0 0
      %599 = vmatpush1.bf16.msra.mxu0 0
      %600 = vmatprep.subr.bf16.mxu0 0
      %601 = vmatpush1.bf16.msra.mxu0 0
      %602 = vmatprep.subr.bf16.mxu0 0
      %603 = vmatpush1.bf16.msra.mxu0 0
      %604 = vmatprep.subr.bf16.mxu0 0
      %605 = vmatpush1.bf16.msra.mxu0 0
      %606 = vmatprep.subr.bf16.mxu0 0
      %607 = vmatpush1.bf16.msra.mxu0 0
      %608 = vmatprep.mubr.bf16.mxu0 0
      %609 = vmatmul.mubr.bf16.gmra.mrb[0].mxu0 %v346
      %v610 = vpop.f32.mrb[0].mxu0
      %v611 = vadd.f32 %v207, %v610
      %v612 = vpop.f32.mrb[0].mxu0
      %v613 = vadd.f32 %v207, %v612
      %v614 = vpop.f32.mrb[0].mxu0
      %v615 = vadd.f32 %v212, %v614
      %v616 = vpop.f32.mrb[0].mxu0
      %v617 = vadd.f32 %v212, %v616
      %618 = vmatprep.mubr.bf16.mxu0 0
      %619 = vmatmul.mubr.bf16.gmra.mrb[0].mxu0 %v349
      %v620 = vpop.f32.mrb[0].mxu0
      %v621 = vadd.f32 %v217, %v620
      %v622 = vpop.f32.mrb[0].mxu0
      %v623 = vadd.f32 %v217, %v622
      %v624 = vpop.f32.mrb[0].mxu0
      %v625 = vadd.f32 %v222, %v624
      %v626 = vpop.f32.mrb[0].mxu0
      %v627 = vadd.f32 %v222, %v626
      %628 = vmatprep.mubr.bf16.mxu0 0
      %629 = vmatmul.mubr.bf16.gmra.mrb[0].mxu0 %v352
      %v630 = vpop.f32.mrb[0].mxu0
      %v631 = vadd.f32 %v227, %v630
      %v632 = vpop.f32.mrb[0].mxu0
      %v633 = vadd.f32 %v227, %v632
      %v634 = vpop.f32.mrb[0].mxu0
      %v635 = vadd.f32 %v232, %v634
      %v636 = vpop.f32.mrb[0].mxu0
      %v637 = vadd.f32 %v232, %v636
      %638 = vmatprep.mubr.bf16.mxu0 0
      %639 = vmatmul.mubr.bf16.gmra.mrb[0].mxu0 %v355
      %v640 = vpop.f32.mrb[0].mxu0
      %v641 = vadd.f32 %v237, %v640
      %v642 = vpop.f32.mrb[0].mxu0
      %v643 = vadd.f32 %v237, %v642
      %v644 = vpop.f32.mrb[0].mxu0
      %v645 = vadd.f32 %v242, %v644
      %v646 = vpop.f32.mrb[0].mxu0
      %v647 = vadd.f32 %v242, %v646
      %648 = vdwg.mxu0
      %vm649 = vcmp.ge.f32.partialorder %v392, 0.0
      %vm650 = vcmp.ge.f32.partialorder %v394, 0.0
      %vm651 = vcmp.ge.f32.partialorder %v465, 0.0
      %vm652 = vcmp.ge.f32.partialorder %v467, 0.0
      %vm653 = vcmp.ge.f32.partialorder %v538, 0.0
      %vm654 = vcmp.ge.f32.partialorder %v540, 0.0
      %vm655 = vcmp.ge.f32.partialorder %v611, 0.0
      %vm656 = vcmp.ge.f32.partialorder %v613, 0.0
      %vm657 = vcmp.ge.f32.partialorder %v396, 0.0
      %vm658 = vcmp.ge.f32.partialorder %v398, 0.0
      %vm659 = vcmp.ge.f32.partialorder %v469, 0.0
      %vm660 = vcmp.ge.f32.partialorder %v471, 0.0
      %vm661 = vcmp.ge.f32.partialorder %v542, 0.0
      %vm662 = vcmp.ge.f32.partialorder %v544, 0.0
      %vm663 = vcmp.ge.f32.partialorder %v615, 0.0
      %vm664 = vcmp.ge.f32.partialorder %v617, 0.0
      %vm665 = vcmp.ge.f32.partialorder %v402, 0.0
      %vm666 = vcmp.ge.f32.partialorder %v404, 0.0
      %vm667 = vcmp.ge.f32.partialorder %v475, 0.0
      %vm668 = vcmp.ge.f32.partialorder %v477, 0.0
      %vm669 = vcmp.ge.f32.partialorder %v548, 0.0
      %vm670 = vcmp.ge.f32.partialorder %v550, 0.0
      %vm671 = vcmp.ge.f32.partialorder %v621, 0.0
      %vm672 = vcmp.ge.f32.partialorder %v623, 0.0
      %vm673 = vcmp.ge.f32.partialorder %v406, 0.0
      %vm674 = vcmp.ge.f32.partialorder %v408, 0.0
      %vm675 = vcmp.ge.f32.partialorder %v479, 0.0
      %vm676 = vcmp.ge.f32.partialorder %v481, 0.0
      %vm677 = vcmp.ge.f32.partialorder %v552, 0.0
      %vm678 = vcmp.ge.f32.partialorder %v554, 0.0
      %vm679 = vcmp.ge.f32.partialorder %v625, 0.0
      %vm680 = vcmp.ge.f32.partialorder %v627, 0.0
      %vm681 = vcmp.ge.f32.partialorder %v412, 0.0
      %vm682 = vcmp.ge.f32.partialorder %v414, 0.0
      %vm683 = vcmp.ge.f32.partialorder %v485, 0.0
      %vm684 = vcmp.ge.f32.partialorder %v487, 0.0
      %vm685 = vcmp.ge.f32.partialorder %v558, 0.0
      %vm686 = vcmp.ge.f32.partialorder %v560, 0.0
      %vm687 = vcmp.ge.f32.partialorder %v631, 0.0
      %vm688 = vcmp.ge.f32.partialorder %v633, 0.0
      %vm689 = vcmp.ge.f32.partialorder %v416, 0.0
      %vm690 = vcmp.ge.f32.partialorder %v418, 0.0
      %vm691 = vcmp.ge.f32.partialorder %v489, 0.0
      %vm692 = vcmp.ge.f32.partialorder %v491, 0.0
      %vm693 = vcmp.ge.f32.partialorder %v562, 0.0
      %vm694 = vcmp.ge.f32.partialorder %v564, 0.0
      %vm695 = vcmp.ge.f32.partialorder %v635, 0.0
      %vm696 = vcmp.ge.f32.partialorder %v637, 0.0
      %vm697 = vcmp.ge.f32.partialorder %v422, 0.0
      %vm698 = vcmp.ge.f32.partialorder %v424, 0.0
      %vm699 = vcmp.ge.f32.partialorder %v495, 0.0
      %vm700 = vcmp.ge.f32.partialorder %v497, 0.0
      %vm701 = vcmp.ge.f32.partialorder %v568, 0.0
      %vm702 = vcmp.ge.f32.partialorder %v570, 0.0
      %vm703 = vcmp.ge.f32.partialorder %v641, 0.0
      %vm704 = vcmp.ge.f32.partialorder %v643, 0.0
      %vm705 = vcmp.ge.f32.partialorder %v426, 0.0
      %vm706 = vcmp.ge.f32.partialorder %v428, 0.0
      %vm707 = vcmp.ge.f32.partialorder %v499, 0.0
      %vm708 = vcmp.ge.f32.partialorder %v501, 0.0
      %vm709 = vcmp.ge.f32.partialorder %v572, 0.0
      %vm710 = vcmp.ge.f32.partialorder %v574, 0.0
      %vm711 = vcmp.ge.f32.partialorder %v645, 0.0
      %vm712 = vcmp.ge.f32.partialorder %v647, 0.0
      %v713 = vmul.f32 %v392, 0.01
      %v714 = vmul.f32 %v394, 0.01
      %v715 = vmul.f32 %v465, 0.01
      %v716 = vmul.f32 %v467, 0.01
      %v717 = vmul.f32 %v538, 0.01
      %v718 = vmul.f32 %v540, 0.01
      %v719 = vmul.f32 %v611, 0.01
      %v720 = vmul.f32 %v613, 0.01
      %v721 = vmul.f32 %v396, 0.01
      %v722 = vmul.f32 %v398, 0.01
      %v723 = vmul.f32 %v469, 0.01
      %v724 = vmul.f32 %v471, 0.01
      %v725 = vmul.f32 %v542, 0.01
      %v726 = vmul.f32 %v544, 0.01
      %v727 = vmul.f32 %v615, 0.01
      %v728 = vmul.f32 %v617, 0.01
      %v729 = vmul.f32 %v402, 0.01
      %v730 = vmul.f32 %v404, 0.01
      %v731 = vmul.f32 %v475, 0.01
      %v732 = vmul.f32 %v477, 0.01
      %v733 = vmul.f32 %v548, 0.01
      %v734 = vmul.f32 %v550, 0.01
      %v735 = vmul.f32 %v621, 0.01
      %v736 = vmul.f32 %v623, 0.01
      %v737 = vmul.f32 %v406, 0.01
      %v738 = vmul.f32 %v408, 0.01
      %v739 = vmul.f32 %v479, 0.01
      %v740 = vmul.f32 %v481, 0.01
      %v741 = vmul.f32 %v552, 0.01
      %v742 = vmul.f32 %v554, 0.01
      %v743 = vmul.f32 %v625, 0.01
      %v744 = vmul.f32 %v627, 0.01
      %v745 = vmul.f32 %v412, 0.01
      %v746 = vmul.f32 %v414, 0.01
      %v747 = vmul.f32 %v485, 0.01
      %v748 = vmul.f32 %v487, 0.01
      %v749 = vmul.f32 %v558, 0.01
      %v750 = vmul.f32 %v560, 0.01
      %v751 = vmul.f32 %v631, 0.01
      %v752 = vmul.f32 %v633, 0.01
      %v753 = vmul.f32 %v416, 0.01
      %v754 = vmul.f32 %v418, 0.01
      %v755 = vmul.f32 %v489, 0.01
      %v756 = vmul.f32 %v491, 0.01
      %v757 = vmul.f32 %v562, 0.01
      %v758 = vmul.f32 %v564, 0.01
      %v759 = vmul.f32 %v635, 0.01
      %v760 = vmul.f32 %v637, 0.01
      %v761 = vmul.f32 %v422, 0.01
      %v762 = vmul.f32 %v424, 0.01
      %v763 = vmul.f32 %v495, 0.01
      %v764 = vmul.f32 %v497, 0.01
      %v765 = vmul.f32 %v568, 0.01
      %v766 = vmul.f32 %v570, 0.01
      %v767 = vmul.f32 %v641, 0.01
      %v768 = vmul.f32 %v643, 0.01
      %v769 = vmul.f32 %v426, 0.01
      %v770 = vmul.f32 %v428, 0.01
      %v771 = vmul.f32 %v499, 0.01
      %v772 = vmul.f32 %v501, 0.01
      %v773 = vmul.f32 %v572, 0.01
      %v774 = vmul.f32 %v574, 0.01
      %v775 = vmul.f32 %v645, 0.01
      %v776 = vmul.f32 %v647, 0.01
      %v777 = vsel %vm649, %v392, %v713
      %v778 = vsel %vm650, %v394, %v714
      %v779 = vsel %vm651, %v465, %v715
      %v780 = vsel %vm652, %v467, %v716
      %v781 = vsel %vm653, %v538, %v717
      %v782 = vsel %vm654, %v540, %v718
      %v783 = vsel %vm655, %v611, %v719
      %v784 = vsel %vm656, %v613, %v720
      %v785 = vsel %vm657, %v396, %v721
      %v786 = vsel %vm658, %v398, %v722
      %v787 = vsel %vm659, %v469, %v723
      %v788 = vsel %vm660, %v471, %v724
      %v789 = vsel %vm661, %v542, %v725
      %v790 = vsel %vm662, %v544, %v726
      %v791 = vsel %vm663, %v615, %v727
      %v792 = vsel %vm664, %v617, %v728
      %v793 = vsel %vm665, %v402, %v729
      %v794 = vsel %vm666, %v404, %v730
      %v795 = vsel %vm667, %v475, %v731
      %v796 = vsel %vm668, %v477, %v732
      %v797 = vsel %vm669, %v548, %v733
      %v798 = vsel %vm670, %v550, %v734
      %v799 = vsel %vm671, %v621, %v735
      %v800 = vsel %vm672, %v623, %v736
      %v801 = vsel %vm673, %v406, %v737
      %v802 = vsel %vm674, %v408, %v738
      %v803 = vsel %vm675, %v479, %v739
      %v804 = vsel %vm676, %v481, %v740
      %v805 = vsel %vm677, %v552, %v741
      %v806 = vsel %vm678, %v554, %v742
      %v807 = vsel %vm679, %v625, %v743
      %v808 = vsel %vm680, %v627, %v744
      %v809 = vsel %vm681, %v412, %v745
      %v810 = vsel %vm682, %v414, %v746
      %v811 = vsel %vm683, %v485, %v747
      %v812 = vsel %vm684, %v487, %v748
      %v813 = vsel %vm685, %v558, %v749
      %v814 = vsel %vm686, %v560, %v750
      %v815 = vsel %vm687, %v631, %v751
      %v816 = vsel %vm688, %v633, %v752
      %v817 = vsel %vm689, %v416, %v753
      %v818 = vsel %vm690, %v418, %v754
      %v819 = vsel %vm691, %v489, %v755
      %v820 = vsel %vm692, %v491, %v756
      %v821 = vsel %vm693, %v562, %v757
      %v822 = vsel %vm694, %v564, %v758
      %v823 = vsel %vm695, %v635, %v759
      %v824 = vsel %vm696, %v637, %v760
      %v825 = vsel %vm697, %v422, %v761
      %v826 = vsel %vm698, %v424, %v762
      %v827 = vsel %vm699, %v495, %v763
      %v828 = vsel %vm700, %v497, %v764
      %v829 = vsel %vm701, %v568, %v765
      %v830 = vsel %vm702, %v570, %v766
      %v831 = vsel %vm703, %v641, %v767
      %v832 = vsel %vm704, %v643, %v768
      %v833 = vsel %vm705, %v426, %v769
      %v834 = vsel %vm706, %v428, %v770
      %v835 = vsel %vm707, %v499, %v771
      %v836 = vsel %vm708, %v501, %v772
      %v837 = vsel %vm709, %v572, %v773
      %v838 = vsel %vm710, %v574, %v774
      %v839 = vsel %vm711, %v645, %v775
      %v840 = vsel %vm712, %v647, %v776
      %v841 = vpack.c.bf16 %v785, %v777
      %v842 = vpack.c.bf16 %v786, %v778
      %v843 = vpack.c.bf16 %v787, %v779
      %v844 = vpack.c.bf16 %v788, %v780
      %v845 = vpack.c.bf16 %v789, %v781
      %v846 = vpack.c.bf16 %v790, %v782
      %v847 = vpack.c.bf16 %v791, %v783
      %v848 = vpack.c.bf16 %v792, %v784
      %v849 = vpack.c.bf16 %v801, %v793
      %v850 = vpack.c.bf16 %v802, %v794
      %v851 = vpack.c.bf16 %v803, %v795
      %v852 = vpack.c.bf16 %v804, %v796
      %v853 = vpack.c.bf16 %v805, %v797
      %v854 = vpack.c.bf16 %v806, %v798
      %v855 = vpack.c.bf16 %v807, %v799
      %v856 = vpack.c.bf16 %v808, %v800
      %v857 = vpack.c.bf16 %v817, %v809
      %v858 = vpack.c.bf16 %v818, %v810
      %v859 = vpack.c.bf16 %v819, %v811
      %v860 = vpack.c.bf16 %v820, %v812
      %v861 = vpack.c.bf16 %v821, %v813
      %v862 = vpack.c.bf16 %v822, %v814
      %v863 = vpack.c.bf16 %v823, %v815
      %v864 = vpack.c.bf16 %v824, %v816
      %v865 = vpack.c.bf16 %v833, %v825
      %v866 = vpack.c.bf16 %v834, %v826
      %v867 = vpack.c.bf16 %v835, %v827
      %v868 = vpack.c.bf16 %v836, %v828
      %v869 = vpack.c.bf16 %v837, %v829
      %v870 = vpack.c.bf16 %v838, %v830
      %v871 = vpack.c.bf16 %v839, %v831
      %v872 = vpack.c.bf16 %v840, %v832
      %v905 = vunpack.c.l.b16 %v841
      %v906 = vunpack.c.l.b16 %v842
      %v907 = vunpack.c.l.b16 %v843
      %v908 = vunpack.c.l.b16 %v844
      %v909 = vunpack.c.l.b16 %v845
      %v910 = vunpack.c.l.b16 %v846
      %v911 = vunpack.c.l.b16 %v847
      %v912 = vunpack.c.l.b16 %v848
      %v913 = vunpack.c.h.b16 %v841
      %v914 = vunpack.c.h.b16 %v842
      %v915 = vunpack.c.h.b16 %v843
      %v916 = vunpack.c.h.b16 %v844
      %v917 = vunpack.c.h.b16 %v845
      %v918 = vunpack.c.h.b16 %v846
      %v919 = vunpack.c.h.b16 %v847
      %v920 = vunpack.c.h.b16 %v848
      %v921 = vunpack.c.l.b16 %v849
      %v922 = vunpack.c.l.b16 %v850
      %v923 = vunpack.c.l.b16 %v851
      %v924 = vunpack.c.l.b16 %v852
      %v925 = vunpack.c.l.b16 %v853
      %v926 = vunpack.c.l.b16 %v854
      %v927 = vunpack.c.l.b16 %v855
      %v928 = vunpack.c.l.b16 %v856
      %v929 = vunpack.c.h.b16 %v849
      %v930 = vunpack.c.h.b16 %v850
      %v931 = vunpack.c.h.b16 %v851
      %v932 = vunpack.c.h.b16 %v852
      %v933 = vunpack.c.h.b16 %v853
      %v934 = vunpack.c.h.b16 %v854
      %v935 = vunpack.c.h.b16 %v855
      %v936 = vunpack.c.h.b16 %v856
      %v937 = vunpack.c.l.b16 %v857
      %v938 = vunpack.c.l.b16 %v858
      %v939 = vunpack.c.l.b16 %v859
      %v940 = vunpack.c.l.b16 %v860
      %v941 = vunpack.c.l.b16 %v861
      %v942 = vunpack.c.l.b16 %v862
      %v943 = vunpack.c.l.b16 %v863
      %v944 = vunpack.c.l.b16 %v864
      %v945 = vunpack.c.h.b16 %v857
      %v946 = vunpack.c.h.b16 %v858
      %v947 = vunpack.c.h.b16 %v859
      %v948 = vunpack.c.h.b16 %v860
      %v949 = vunpack.c.h.b16 %v861
      %v950 = vunpack.c.h.b16 %v862
      %v951 = vunpack.c.h.b16 %v863
      %v952 = vunpack.c.h.b16 %v864
      %v953 = vunpack.c.l.b16 %v865
      %v954 = vunpack.c.l.b16 %v866
      %v955 = vunpack.c.l.b16 %v867
      %v956 = vunpack.c.l.b16 %v868
      %v957 = vunpack.c.l.b16 %v869
      %v958 = vunpack.c.l.b16 %v870
      %v959 = vunpack.c.l.b16 %v871
      %v960 = vunpack.c.l.b16 %v872
      %v961 = vunpack.c.h.b16 %v865
      %v962 = vunpack.c.h.b16 %v866
      %v963 = vunpack.c.h.b16 %v867
      %v964 = vunpack.c.h.b16 %v868
      %v965 = vunpack.c.h.b16 %v869
      %v966 = vunpack.c.h.b16 %v870
      %v967 = vunpack.c.h.b16 %v871
      %v968 = vunpack.c.h.b16 %v872
      %v969 = vpack.c.b16 %v906, %v905
      %v970 = vpack.c.b16 %v908, %v907
      %v971 = vpack.c.b16 %v910, %v909
      %v972 = vpack.c.b16 %v912, %v911
      %v973 = vpack.c.b16 %v914, %v913
      %v974 = vpack.c.b16 %v916, %v915
      %v975 = vpack.c.b16 %v918, %v917
      %v976 = vpack.c.b16 %v920, %v919
      %v977 = vpack.c.b16 %v922, %v921
      %v978 = vpack.c.b16 %v924, %v923
      %v979 = vpack.c.b16 %v926, %v925
      %v980 = vpack.c.b16 %v928, %v927
      %v981 = vpack.c.b16 %v930, %v929
      %v982 = vpack.c.b16 %v932, %v931
      %v983 = vpack.c.b16 %v934, %v933
      %v984 = vpack.c.b16 %v936, %v935
      %v985 = vpack.c.b16 %v938, %v937
      %v986 = vpack.c.b16 %v940, %v939
      %v987 = vpack.c.b16 %v942, %v941
      %v988 = vpack.c.b16 %v944, %v943
      %v989 = vpack.c.b16 %v946, %v945
      %v990 = vpack.c.b16 %v948, %v947
      %v991 = vpack.c.b16 %v950, %v949
      %v992 = vpack.c.b16 %v952, %v951
      %v993 = vpack.c.b16 %v954, %v953
      %v994 = vpack.c.b16 %v956, %v955
      %v995 = vpack.c.b16 %v958, %v957
      %v996 = vpack.c.b16 %v960, %v959
      %v997 = vpack.c.b16 %v962, %v961
      %v998 = vpack.c.b16 %v964, %v963
      %v999 = vpack.c.b16 %v966, %v965
      %v1000 = vpack.c.b16 %v968, %v967
      %1033 = vst [vmem:[%s170] sm:$0xff] %v969
      %1034 = vst [vmem:[%s170 + $0x8] sm:$0xff] %v970
      %1035 = vst [vmem:[%s170 + $0x10] sm:$0xff] %v971
      %vm1036 = vcmask 1043456
      %vm1037 = vcmask 531460
      %vm1038 = vmor %vm1037, %vm1036
      %1039 = vst.msk [vmem:[%s170 + $0x18] sm:$0xff] %vm1038, %v972
      %1040 = vst [vmem:[%s170 + $0x20] sm:$0xff] %v973
      %1041 = vst [vmem:[%s170 + $0x28] sm:$0xff] %v974
      %1042 = vst [vmem:[%s170 + $0x30] sm:$0xff] %v975
      %1043 = vst.msk [vmem:[%s170 + $0x38] sm:$0xff] %vm1038, %v976
      %1044 = vst [vmem:[%s170 + $0x40] sm:$0xff] %v977
      %1045 = vst [vmem:[%s170 + $0x48] sm:$0xff] %v978
      %1046 = vst [vmem:[%s170 + $0x50] sm:$0xff] %v979
      %1047 = vst.msk [vmem:[%s170 + $0x58] sm:$0xff] %vm1038, %v980
      %1048 = vst [vmem:[%s170 + $0x60] sm:$0xff] %v981
      %1049 = vst [vmem:[%s170 + $0x68] sm:$0xff] %v982
      %1050 = vst [vmem:[%s170 + $0x70] sm:$0xff] %v983
      %1051 = vst.msk [vmem:[%s170 + $0x78] sm:$0xff] %vm1038, %v984
      %1052 = vst [vmem:[%s170 + $0x80] sm:$0xff] %v985
      %1053 = vst [vmem:[%s170 + $0x88] sm:$0xff] %v986
      %1054 = vst [vmem:[%s170 + $0x90] sm:$0xff] %v987
      %1055 = vst.msk [vmem:[%s170 + $0x98] sm:$0xff] %vm1038, %v988
      %1056 = vst [vmem:[%s170 + $0xa0] sm:$0xff] %v989
      %1057 = vst [vmem:[%s170 + $0xa8] sm:$0xff] %v990
      %1058 = vst [vmem:[%s170 + $0xb0] sm:$0xff] %v991
      %1059 = vst.msk [vmem:[%s170 + $0xb8] sm:$0xff] %vm1038, %v992
      %1060 = vst [vmem:[%s170 + $0xc0] sm:$0xff] %v993
      %1061 = vst [vmem:[%s170 + $0xc8] sm:$0xff] %v994
      %1062 = vst [vmem:[%s170 + $0xd0] sm:$0xff] %v995
      %1063 = vst.msk [vmem:[%s170 + $0xd8] sm:$0xff] %vm1038, %v996
      %1064 = vst [vmem:[%s170 + $0xe0] sm:$0xff] %v997
      %1065 = vst [vmem:[%s170 + $0xe8] sm:$0xff] %v998
      %1066 = vst [vmem:[%s170 + $0xf0] sm:$0xff] %v999
      %1067 = vst.msk [vmem:[%s170 + $0xf8] sm:$0xff] %vm1038, %v1000
      %p1068 = scmp.lt.s32.totalorder %s14, 1
      %s1069 = scalar_select %p1068, %s14, 1
      %s1070 = smul.addr %s1069, 64
      %s1071 = smul.addr %s1070, 4
      %s1072 = scalar_lea.vmem %s3, %s1071
      // Predicated region
      $region33: #{discriminator_forward.2} parent=31 // pred_check
        %p1073 = pneg %p100
      $region34: #{discriminator_forward.2} parent=31 // pred_check_branch
        %1075 = sbr.rel (%p1073) target = $region36
      $region35: #{discriminator_forward.2} parent=31 // pred_region
        _
      $region36: #{discriminator_forward.2} parent=31 // pred_fallthru
        _
    $region32: #{discriminator_forward.2} parent=5 // pred_fallthru
      _
    %p1076 = scmp.le.s32.totalorder 2, %s9
    // Predicated region
    $region37: #{discriminator_forward.2} parent=5 // pred_check
      %p1077 = pneg %p1076
    $region38: #{discriminator_forward.2} parent=5 // pred_check_branch
      %1079 = sbr.rel (%p1077) target = $region40
    $region39: #{discriminator_forward.2} parent=5 // pred_region
      %s1080 = ssub.s32 %s9, 2
      // Predicated region
      $region41: #{discriminator_forward.2} parent=39 // pred_check
        %p1081 = pneg %p106
      $region42: #{discriminator_forward.2} parent=39 // pred_check_branch
        %1083 = sbr.rel (%p1081) target = $region44
      $region43: #{discriminator_forward.2} parent=39 // pred_region
        %p1084 = scmp.lt.s32.totalorder %s15, 1
        %s1085 = scalar_select %p1084, %s15, 1
        %s1086 = smul.addr %s1085, 64
        %s1087 = smul.addr %s1086, 4
        %s1088 = scalar_lea.vmem %s3, %s1087
      $region44: #{discriminator_forward.2} parent=39 // pred_fallthru
        _
    $region40: #{discriminator_forward.2} parent=5 // pred_fallthru
      _
  $region6: #{discriminator_forward.2} parent=0 // loop_footer
    %s13 = sadd.s32 1, %s9
  $region7: #{discriminator_forward.2} parent=0 // loop_footer_branch
    %8 = sbr.rel target = $region3
  $region8: #{discriminator_forward.2} parent=0 // loop_exit
    _

// kernel: discriminator_forward.3
$region0: #{discriminator_forward.3}
  #allocation0 [shape = 'u32[]', space=smem, size = 0x4, offset = 0x4, fixed_abs, tag = 'smem constant byte address 0x4 - core index']
  #allocation1 [shape = 'u32[144,128]{1,0:T(1,128)}', space=vmem, size = 0x12000, scoped, tag = 'internal scratch']
  #allocation2 [shape = 'f32[128,1]{1,0:T(8,128)}', space=vmem, size = 0x10000, scoped, tag = 'scratch operand']
  #allocation3 [shape = 'f32[128,1]{1,0:T(8,128)}', space=vmem, size = 0x10000, scoped, tag = 'scratch operand']
  #allocation4 [shape = 'f32[2,128,1]{2,1,0:T(8,128)}', space=vmem, size = 0x20000, scoped, tag = 'scratch operand']
  #allocation5 [shape = 'f32[1,1]{1,0:T(1,128)S(1)}', space=vmem, size = 0x200, scoped, tag = 'scoped memory for discriminator_forward.3']
  %s0 = inlined_call_operand.vmem [shape: bf16[2,576,225], index: 0, kind: input, shape index: {}]
  %s1 = inlined_call_operand.vmem [shape: bf16[128,576], index: 1, kind: input, shape index: {}]
  %s2 = inlined_call_operand.vmem [shape: f32[128,1], index: 2, kind: input, shape index: {}]
  %s3 = inlined_call_operand.vmem [shape: f32[128,225], index: 3, kind: input, shape index: {}]
  %s4 = inlined_call_operand.vmem [shape: f32[128,1], index: 4, kind: input, shape index: {}]
  %s5 = inlined_call_operand.vmem [shape: f32[128,1], index: 5, kind: input, shape index: {}]
  %s6 = inlined_call_operand.<no memory space> [shape: f32[1,1], index: 6, kind: input, shape index: {}]
  %s7 = inlined_call_operand.vmem [shape: f32[2,1], index: 7, kind: output, shape index: {}]
  %s8 = sld [smem:[#allocation0]]
  $region69: #{discriminator_forward.3} parent=0
    _
  %s10 = ssub.s32 1, %s8
  %s11 = scalar_select 0, %s10, %s8
  %v12 = vstv %s6
  %13 = vst [vmem:[#allocation5] sm:$0x1] %v12
  loop: start=0, step=1, limit=4
  $region2: #{discriminator_forward.3} parent=0 // loop_pre_header
    _
  $region3: #{discriminator_forward.3} parent=0 // loop_header
    %s15 = sphi 0, %s19
    %p16 = scmp.ge.s32.totalorder %s15, 4
    %s25 = sphi 0, %s27
    %s28 = sphi 0, %s25
    %s29 = sphi 0, %s28
    %s45 = sphi 0, %s29
    %s49 = sphi 0, %s49
    %s51 = sphi 0, %s49
    %s52 = sphi 0, %s51
    %s66 = sphi 0, %s52
    %s70 = sphi 0, %s70
    %s72 = sphi 0, %s70
    %s73 = sphi 0, %s72
    %s87 = sphi 0, %s73
    %s91 = sphi 0, %s91
    %s93 = sphi 0, %s91
    %s94 = sphi 0, %s93
    %s108 = sphi 0, %s94
    %s112 = sphi 0, %s112
    %s114 = sphi 0, %s112
    %s115 = sphi 0, %s114
    %s129 = sphi 0, %s115
    %s133 = sphi 0, %s133
    %s135 = sphi 0, %s133
    %s136 = sphi 0, %s135
    %s150 = sphi 0, %s136
    %s154 = sphi 0, %s154
    %s156 = sphi 0, %s154
    %s157 = sphi 0, %s156
    %s171 = sphi 0, %s157
    %s175 = sphi 0, %s175
    %s177 = sphi 0, %s175
    %s178 = sphi 0, %s177
    %s192 = sphi 0, %s178
  $region4: #{discriminator_forward.3} parent=0 // loop_header_branch
    %18 = sbr.rel (%p16) target = $region8
  $region5: #{discriminator_forward.3} parent=0 // loop_body
    %s20 = ssub.s32 %s15, 1
    %s21 = ssub.s32 %s15, 2
    %s22 = sadd.s32 %s15, 1
    %s23 = ssub.s32 %s15, %s22
    %p24 = scmp.eq.s32.totalorder %s23, 0
    %s26 = sadd.s32 %s25, 1
    %s27 = scalar_select %p24, %s25, %s26
    %p30 = pneg %p24
    %p31 = scmp.eq.s32.totalorder %s15, 1
    %p32 = por %p30, %p31
    %p33 = scmp.ne.s32.totalorder %s25, %s28
    %p34 = scmp.eq.s32.totalorder %s15, 0
    %p35 = por %p33, %p34
    %p36 = scmp.ne.s32.totalorder %s25, %s28
    %p37 = scmp.eq.s32.totalorder %s20, 1
    %p38 = por %p36, %p37
    %p39 = scmp.ne.s32.totalorder %s28, %s29
    %p40 = scmp.eq.s32.totalorder %s20, 0
    %p41 = por %p39, %p40
    %p42 = scmp.ne.s32.totalorder %s28, %s29
    %p43 = scmp.eq.s32.totalorder %s21, 1
    %p44 = por %p42, %p43
    %p46 = scmp.ne.s32.totalorder %s29, %s45
    %p47 = scmp.eq.s32.totalorder %s21, 0
    %p48 = por %p46, %p47
    %s50 = sadd.s32 %s49, 1
    %p53 = scmp.eq.s32.totalorder %s15, 1
    %p54 = scmp.ne.s32.totalorder %s49, %s51
    %p55 = scmp.eq.s32.totalorder %s15, 0
    %p56 = por %p54, %p55
    %p57 = scmp.ne.s32.totalorder %s49, %s51
    %p58 = scmp.eq.s32.totalorder %s20, 1
    %p59 = por %p57, %p58
    %p60 = scmp.ne.s32.totalorder %s51, %s52
    %p61 = scmp.eq.s32.totalorder %s20, 0
    %p62 = por %p60, %p61
    %p63 = scmp.ne.s32.totalorder %s51, %s52
    %p64 = scmp.eq.s32.totalorder %s21, 1
    %p65 = por %p63, %p64
    %p67 = scmp.ne.s32.totalorder %s52, %s66
    %p68 = scmp.eq.s32.totalorder %s21, 0
    %p69 = por %p67, %p68
    %s71 = sadd.s32 %s70, 1
    %p74 = scmp.eq.s32.totalorder %s15, 1
    %p75 = scmp.ne.s32.totalorder %s70, %s72
    %p76 = scmp.eq.s32.totalorder %s15, 0
    %p77 = por %p75, %p76
    %p78 = scmp.ne.s32.totalorder %s70, %s72
    %p79 = scmp.eq.s32.totalorder %s20, 1
    %p80 = por %p78, %p79
    %p81 = scmp.ne.s32.totalorder %s72, %s73
    %p82 = scmp.eq.s32.totalorder %s20, 0
    %p83 = por %p81, %p82
    %p84 = scmp.ne.s32.totalorder %s72, %s73
    %p85 = scmp.eq.s32.totalorder %s21, 1
    %p86 = por %p84, %p85
    %p88 = scmp.ne.s32.totalorder %s73, %s87
    %p89 = scmp.eq.s32.totalorder %s21, 0
    %p90 = por %p88, %p89
    %s92 = sadd.s32 %s91, 1
    %p95 = scmp.eq.s32.totalorder %s15, 1
    %p96 = scmp.ne.s32.totalorder %s91, %s93
    %p97 = scmp.eq.s32.totalorder %s15, 0
    %p98 = por %p96, %p97
    %p99 = scmp.ne.s32.totalorder %s91, %s93
    %p100 = scmp.eq.s32.totalorder %s20, 1
    %p101 = por %p99, %p100
    %p102 = scmp.ne.s32.totalorder %s93, %s94
    %p103 = scmp.eq.s32.totalorder %s20, 0
    %p104 = por %p102, %p103
    %p105 = scmp.ne.s32.totalorder %s93, %s94
    %p106 = scmp.eq.s32.totalorder %s21, 1
    %p107 = por %p105, %p106
    %p109 = scmp.ne.s32.totalorder %s94, %s108
    %p110 = scmp.eq.s32.totalorder %s21, 0
    %p111 = por %p109, %p110
    %s113 = sadd.s32 %s112, 1
    %p116 = scmp.eq.s32.totalorder %s15, 1
    %p117 = scmp.ne.s32.totalorder %s112, %s114
    %p118 = scmp.eq.s32.totalorder %s15, 0
    %p119 = por %p117, %p118
    %p120 = scmp.ne.s32.totalorder %s112, %s114
    %p121 = scmp.eq.s32.totalorder %s20, 1
    %p122 = por %p120, %p121
    %p123 = scmp.ne.s32.totalorder %s114, %s115
    %p124 = scmp.eq.s32.totalorder %s20, 0
    %p125 = por %p123, %p124
    %p126 = scmp.ne.s32.totalorder %s114, %s115
    %p127 = scmp.eq.s32.totalorder %s21, 1
    %p128 = por %p126, %p127
    %p130 = scmp.ne.s32.totalorder %s115, %s129
    %p131 = scmp.eq.s32.totalorder %s21, 0
    %p132 = por %p130, %p131
    %s134 = sadd.s32 %s133, 1
    %p137 = scmp.eq.s32.totalorder %s15, 1
    %p138 = scmp.ne.s32.totalorder %s133, %s135
    %p139 = scmp.eq.s32.totalorder %s15, 0
    %p140 = por %p138, %p139
    %p141 = scmp.ne.s32.totalorder %s133, %s135
    %p142 = scmp.eq.s32.totalorder %s20, 1
    %p143 = por %p141, %p142
    %p144 = scmp.ne.s32.totalorder %s135, %s136
    %p145 = scmp.eq.s32.totalorder %s20, 0
    %p146 = por %p144, %p145
    %p147 = scmp.ne.s32.totalorder %s135, %s136
    %p148 = scmp.eq.s32.totalorder %s21, 1
    %p149 = por %p147, %p148
    %p151 = scmp.ne.s32.totalorder %s136, %s150
    %p152 = scmp.eq.s32.totalorder %s21, 0
    %p153 = por %p151, %p152
    %s155 = sadd.s32 %s154, 1
    %p158 = scmp.eq.s32.totalorder %s15, 1
    %p159 = scmp.ne.s32.totalorder %s154, %s156
    %p160 = scmp.eq.s32.totalorder %s15, 0
    %p161 = por %p159, %p160
    %p162 = scmp.ne.s32.totalorder %s154, %s156
    %p163 = scmp.eq.s32.totalorder %s20, 1
    %p164 = por %p162, %p163
    %p165 = scmp.ne.s32.totalorder %s156, %s157
    %p166 = scmp.eq.s32.totalorder %s20, 0
    %p167 = por %p165, %p166
    %p168 = scmp.ne.s32.totalorder %s156, %s157
    %p169 = scmp.eq.s32.totalorder %s21, 1
    %p170 = por %p168, %p169
    %p172 = scmp.ne.s32.totalorder %s157, %s171
    %p173 = scmp.eq.s32.totalorder %s21, 0
    %p174 = por %p172, %p173
    %s176 = sadd.s32 %s175, 1
    %p179 = scmp.eq.s32.totalorder %s15, 1
    %p180 = scmp.ne.s32.totalorder %s175, %s177
    %p181 = scmp.eq.s32.totalorder %s15, 0
    %p182 = por %p180, %p181
    %p183 = scmp.ne.s32.totalorder %s175, %s177
    %p184 = scmp.eq.s32.totalorder %s20, 1
    %p185 = por %p183, %p184
    %p186 = scmp.ne.s32.totalorder %s177, %s178
    %p187 = scmp.eq.s32.totalorder %s20, 0
    %p188 = por %p186, %p187
    %p189 = scmp.ne.s32.totalorder %s177, %s178
    %p190 = scmp.eq.s32.totalorder %s21, 1
    %p191 = por %p189, %p190
    %p193 = scmp.ne.s32.totalorder %s178, %s192
    %p194 = scmp.eq.s32.totalorder %s21, 0
    %p195 = por %p193, %p194
    %p196 = scmp.le.s32.totalorder 1, %s15
    %p197 = scmp.lt.s32.totalorder %s15, 3
    %p198 = pnand %p196, %p197
    %p199 = pneg %p198
    // Predicated region
    $region9: #{discriminator_forward.3} parent=5 // pred_check
      _
    $region10: #{discriminator_forward.3} parent=5 // pred_check_branch
      %201 = sbr.rel (%p198) target = $region12
    $region11: #{discriminator_forward.3} parent=5 // pred_region
      %s202 = ssub.s32 %s15, 1
      // Predicated region
      $region13: #{discriminator_forward.3} parent=11 // pred_check
        %p203 = pneg %p62
      $region14: #{discriminator_forward.3} parent=11 // pred_check_branch
        %205 = sbr.rel (%p203) target = $region16
      $region15: #{discriminator_forward.3} parent=11 // pred_region
        _
      $region16: #{discriminator_forward.3} parent=11 // pred_fallthru
        _
      // Predicated region
      $region17: #{discriminator_forward.3} parent=11 // pred_check
        %p206 = pneg %p83
      $region18: #{discriminator_forward.3} parent=11 // pred_check_branch
        %208 = sbr.rel (%p206) target = $region20
      $region19: #{discriminator_forward.3} parent=11 // pred_region
        _
      $region20: #{discriminator_forward.3} parent=11 // pred_fallthru
        _
      // Predicated region
      $region21: #{discriminator_forward.3} parent=11 // pred_check
        %p209 = pneg %p104
      $region22: #{discriminator_forward.3} parent=11 // pred_check_branch
        %211 = sbr.rel (%p209) target = $region24
      $region23: #{discriminator_forward.3} parent=11 // pred_region
        _
      $region24: #{discriminator_forward.3} parent=11 // pred_fallthru
        _
      // Predicated region
      $region25: #{discriminator_forward.3} parent=11 // pred_check
        %p212 = pneg %p125
      $region26: #{discriminator_forward.3} parent=11 // pred_check_branch
        %214 = sbr.rel (%p212) target = $region28
      $region27: #{discriminator_forward.3} parent=11 // pred_region
        _
      $region28: #{discriminator_forward.3} parent=11 // pred_fallthru
        _
      // Predicated region
      $region29: #{discriminator_forward.3} parent=11 // pred_check
        %p215 = pneg %p146
      $region30: #{discriminator_forward.3} parent=11 // pred_check_branch
        %217 = sbr.rel (%p215) target = $region32
      $region31: #{discriminator_forward.3} parent=11 // pred_region
        _
      $region32: #{discriminator_forward.3} parent=11 // pred_fallthru
        _
      // Predicated region
      $region33: #{discriminator_forward.3} parent=11 // pred_check
        %p218 = pneg %p167
      $region34: #{discriminator_forward.3} parent=11 // pred_check_branch
        %220 = sbr.rel (%p218) target = $region36
      $region35: #{discriminator_forward.3} parent=11 // pred_region
        _
      $region36: #{discriminator_forward.3} parent=11 // pred_fallthru
        _
    $region12: #{discriminator_forward.3} parent=5 // pred_fallthru
      _
    %p221 = scmp.lt.s32.totalorder %s15, 2
    // Predicated region
    $region37: #{discriminator_forward.3} parent=5 // pred_check
      %p222 = pneg %p221
    $region38: #{discriminator_forward.3} parent=5 // pred_check_branch
      %224 = sbr.rel (%p222) target = $region40
    $region39: #{discriminator_forward.3} parent=5 // pred_region
      // Predicated region
      $region41: #{discriminator_forward.3} parent=39 // pred_check
        %p225 = pneg %p35
      $region42: #{discriminator_forward.3} parent=39 // pred_check_branch
        %227 = sbr.rel (%p225) target = $region44
      $region43: #{discriminator_forward.3} parent=39 // pred_region
        %p228 = scmp.lt.s32.totalorder %s15, 1
        %s229 = scalar_select %p228, %s15, 1
        %s230 = smul.addr %s229, 144
        %s231 = smul.addr %s230, 4
        %s232 = scalar_lea.vmem %s0, %s231
      $region44: #{discriminator_forward.3} parent=39 // pred_fallthru
        _
    $region40: #{discriminator_forward.3} parent=5 // pred_fallthru
      _
    %p233 = scmp.le.s32.totalorder 1, %s15
    %p234 = scmp.lt.s32.totalorder %s15, 3
    %p235 = pnand %p233, %p234
    %p236 = pneg %p235
    // Predicated region
    $region45: #{discriminator_forward.3} parent=5 // pred_check
      _
    $region46: #{discriminator_forward.3} parent=5 // pred_check_branch
      %238 = sbr.rel (%p235) target = $region48
    $region47: #{discriminator_forward.3} parent=5 // pred_region
      %s239 = ssub.s32 %s15, 1
      %p240 = scmp.lt.s32.totalorder %s20, 1
      %s241 = scalar_select %p240, %s20, 1
      %s242 = smul.addr %s241, 144
      %s243 = smul.addr %s242, 4
      %s244 = scalar_lea.vmem %s0, %s243
      %p245 = pneg %p41
      %p246 = pneg %p38
      %p247 = pneg %p62
      %p248 = pneg %p59
      %p249 = pneg %p83
      %p250 = pneg %p80
      %p251 = pneg %p104
      %p252 = pneg %p101
      %p253 = pneg %p125
      %p254 = pneg %p122
      %p255 = pneg %p146
      %p256 = pneg %p143
      %p257 = pneg %p167
      %p258 = pneg %p164
      %p259 = pneg %p188
      %p260 = pneg %p185
      %p261 = scmp.lt.s32.totalorder %s20, 1
      %s262 = scalar_select %p261, %s20, 1
      %s263 = smul.addr %s262, 144
      %s264 = smul.addr %s263, 4
      %s265 = scalar_lea.vmem %s0, %s264
      %p267 = scmp.eq.s32.totalorder %s20, 0
      // Predicated region
      $region49: #{discriminator_forward.3} parent=47 // pred_check
        %p268 = pneg %p267
      $region50: #{discriminator_forward.3} parent=47 // pred_check_branch
        %270 = sbr.rel (%p268) target = $region52
      $region51: #{discriminator_forward.3} parent=47 // pred_region
        %vm271 = vcmask 7168
        %272 = vst.msk [vmem:[#allocation2] sm:$0xff] %vm271, 0.0
        %273 = vst.msk [vmem:[#allocation2 + $0x8] sm:$0xff] %vm271, 0.0
        %274 = vst.msk [vmem:[#allocation2 + $0x10] sm:$0xff] %vm271, 0.0
        %275 = vst.msk [vmem:[#allocation2 + $0x18] sm:$0xff] %vm271, 0.0
        %276 = vst.msk [vmem:[#allocation2 + $0x20] sm:$0xff] %vm271, 0.0
        %277 = vst.msk [vmem:[#allocation2 + $0x28] sm:$0xff] %vm271, 0.0
        %278 = vst.msk [vmem:[#allocation2 + $0x30] sm:$0xff] %vm271, 0.0
        %279 = vst.msk [vmem:[#allocation2 + $0x38] sm:$0xff] %vm271, 0.0
        %280 = vst.msk [vmem:[#allocation2 + $0x40] sm:$0xff] %vm271, 0.0
        %281 = vst.msk [vmem:[#allocation2 + $0x48] sm:$0xff] %vm271, 0.0
        %282 = vst.msk [vmem:[#allocation2 + $0x50] sm:$0xff] %vm271, 0.0
        %283 = vst.msk [vmem:[#allocation2 + $0x58] sm:$0xff] %vm271, 0.0
        %284 = vst.msk [vmem:[#allocation2 + $0x60] sm:$0xff] %vm271, 0.0
        %285 = vst.msk [vmem:[#allocation2 + $0x68] sm:$0xff] %vm271, 0.0
        %286 = vst.msk [vmem:[#allocation2 + $0x70] sm:$0xff] %vm271, 0.0
        %287 = vst.msk [vmem:[#allocation2 + $0x78] sm:$0xff] %vm271, 0.0
        %288 = vst.msk [vmem:[#allocation3] sm:$0xff] %vm271, 0.0
        %289 = vst.msk [vmem:[#allocation3 + $0x8] sm:$0xff] %vm271, 0.0
        %290 = vst.msk [vmem:[#allocation3 + $0x10] sm:$0xff] %vm271, 0.0
        %291 = vst.msk [vmem:[#allocation3 + $0x18] sm:$0xff] %vm271, 0.0
        %292 = vst.msk [vmem:[#allocation3 + $0x20] sm:$0xff] %vm271, 0.0
        %293 = vst.msk [vmem:[#allocation3 + $0x28] sm:$0xff] %vm271, 0.0
        %294 = vst.msk [vmem:[#allocation3 + $0x30] sm:$0xff] %vm271, 0.0
        %295 = vst.msk [vmem:[#allocation3 + $0x38] sm:$0xff] %vm271, 0.0
        %296 = vst.msk [vmem:[#allocation3 + $0x40] sm:$0xff] %vm271, 0.0
        %297 = vst.msk [vmem:[#allocation3 + $0x48] sm:$0xff] %vm271, 0.0
        %298 = vst.msk [vmem:[#allocation3 + $0x50] sm:$0xff] %vm271, 0.0
        %299 = vst.msk [vmem:[#allocation3 + $0x58] sm:$0xff] %vm271, 0.0
        %300 = vst.msk [vmem:[#allocation3 + $0x60] sm:$0xff] %vm271, 0.0
        %301 = vst.msk [vmem:[#allocation3 + $0x68] sm:$0xff] %vm271, 0.0
        %302 = vst.msk [vmem:[#allocation3 + $0x70] sm:$0xff] %vm271, 0.0
        %303 = vst.msk [vmem:[#allocation3 + $0x78] sm:$0xff] %vm271, 0.0
      $region52: #{discriminator_forward.3} parent=47 // pred_fallthru
        _
      %v304 = vld [vmem:[%s1] sm:$0xff]
      %v305 = vld [vmem:[%s1 + $0x8] sm:$0xff]
      %v306 = vld [vmem:[%s1 + $0x10] sm:$0xf]
      %v307 = vld [vmem:[%s1 + $0x14] sm:$0xff]
      %v308 = vld [vmem:[%s1 + $0x1c] sm:$0xff]
      %v309 = vld [vmem:[%s1 + $0x24] sm:$0xf]
      %v310 = vld [vmem:[%s1 + $0x28] sm:$0xff]
      %v311 = vld [vmem:[%s1 + $0x30] sm:$0xff]
      %v312 = vld [vmem:[%s1 + $0x38] sm:$0xf]
      %v313 = vld [vmem:[%s1 + $0x3c] sm:$0xff]
      %v314 = vld [vmem:[%s1 + $0x44] sm:$0xff]
      %v315 = vld [vmem:[%s1 + $0x4c] sm:$0xf]
      %v316 = vld [vmem:[%s1 + $0x50] sm:$0xff]
      %v317 = vld [vmem:[%s1 + $0x58] sm:$0xff]
      %v318 = vld [vmem:[%s1 + $0x60] sm:$0xf]
      %v319 = vld [vmem:[%s1 + $0x64] sm:$0xff]
      %v320 = vld [vmem:[%s1 + $0x6c] sm:$0xff]
      %v321 = vld [vmem:[%s1 + $0x74] sm:$0xf]
      %v322 = vld [vmem:[%s1 + $0x78] sm:$0xff]
      %v323 = vld [vmem:[%s1 + $0x80] sm:$0xff]
      %v324 = vld [vmem:[%s1 + $0x88] sm:$0xf]
      %v325 = vld [vmem:[%s1 + $0x8c] sm:$0xff]
      %v326 = vld [vmem:[%s1 + $0x94] sm:$0xff]
      %v327 = vld [vmem:[%s1 + $0x9c] sm:$0xf]
      %v328 = vld [vmem:[%s1 + $0xa0] sm:$0xff]
      %v329 = vld [vmem:[%s1 + $0xa8] sm:$0xff]
      %v330 = vld [vmem:[%s1 + $0xb0] sm:$0xf]
      %v331 = vld [vmem:[%s1 + $0xb4] sm:$0xff]
      %v332 = vld [vmem:[%s1 + $0xbc] sm:$0xff]
      %v333 = vld [vmem:[%s1 + $0xc4] sm:$0xf]
      %v334 = vld [vmem:[%s1 + $0xc8] sm:$0xff]
      %v335 = vld [vmem:[%s1 + $0xd0] sm:$0xff]
      %v336 = vld [vmem:[%s1 + $0xd8] sm:$0xf]
      %v337 = vld [vmem:[%s1 + $0xdc] sm:$0xff]
      %v338 = vld [vmem:[%s1 + $0xe4] sm:$0xff]
      %v339 = vld [vmem:[%s1 + $0xec] sm:$0xf]
      %v340 = vld [vmem:[%s1 + $0xf0] sm:$0xff]
      %v341 = vld [vmem:[%s1 + $0xf8] sm:$0xff]
      %v342 = vld [vmem:[%s1 + $0x100] sm:$0xf]
      %v343 = vld [vmem:[%s1 + $0x104] sm:$0xff]
      %v344 = vld [vmem:[%s1 + $0x10c] sm:$0xff]
      %v345 = vld [vmem:[%s1 + $0x114] sm:$0xf]
      %v346 = vld [vmem:[%s1 + $0x118] sm:$0xff]
      %v347 = vld [vmem:[%s1 + $0x120] sm:$0xff]
      %v348 = vld [vmem:[%s1 + $0x128] sm:$0xf]
      %v349 = vld [vmem:[%s1 + $0x12c] sm:$0xff]
      %v350 = vld [vmem:[%s1 + $0x134] sm:$0xff]
      %v351 = vld [vmem:[%s1 + $0x13c] sm:$0xf]
      %v352 = vld [vmem:[%s265] sm:$0xff]
      %v353 = vld [vmem:[%s265 + $0x8] sm:$0xff]
      %v354 = vld [vmem:[%s265 + $0x10] sm:$0xff]
      %v355 = vld [vmem:[%s265 + $0x18] sm:$0xff]
      %v356 = vld [vmem:[%s265 + $0x20] sm:$0xff]
      %v357 = vld [vmem:[%s265 + $0x28] sm:$0xff]
      %v358 = vld [vmem:[%s265 + $0x30] sm:$0xff]
      %v359 = vld [vmem:[%s265 + $0x38] sm:$0xff]
      %v360 = vld [vmem:[%s265 + $0x40] sm:$0xff]
      %v361 = vld [vmem:[%s265 + $0x48] sm:$0xff]
      %v362 = vld [vmem:[%s265 + $0x50] sm:$0xff]
      %v363 = vld [vmem:[%s265 + $0x58] sm:$0xff]
      %v364 = vld [vmem:[%s265 + $0x60] sm:$0xff]
      %v365 = vld [vmem:[%s265 + $0x68] sm:$0xff]
      %v366 = vld [vmem:[%s265 + $0x70] sm:$0xff]
      %v367 = vld [vmem:[%s265 + $0x78] sm:$0xff]
      %v368 = vld [vmem:[%s265 + $0x80] sm:$0xff]
      %v369 = vld [vmem:[%s265 + $0x88] sm:$0xff]
      %v370 = vld [vmem:[%s265 + $0x90] sm:$0xff]
      %v371 = vld [vmem:[%s265 + $0x98] sm:$0xff]
      %v372 = vld [vmem:[%s265 + $0xa0] sm:$0xff]
      %v373 = vld [vmem:[%s265 + $0xa8] sm:$0xff]
      %v374 = vld [vmem:[%s265 + $0xb0] sm:$0xff]
      %v375 = vld [vmem:[%s265 + $0xb8] sm:$0xff]
      %v376 = vld [vmem:[%s265 + $0xc0] sm:$0xff]
      %v377 = vld [vmem:[%s265 + $0xc8] sm:$0xff]
      %v378 = vld [vmem:[%s265 + $0xd0] sm:$0xff]
      %v379 = vld [vmem:[%s265 + $0xd8] sm:$0xff]
      %v380 = vld [vmem:[%s265 + $0xe0] sm:$0xff]
      %v381 = vld [vmem:[%s265 + $0xe8] sm:$0xff]
      %v382 = vld [vmem:[%s265 + $0xf0] sm:$0xff]
      %v383 = vld [vmem:[%s265 + $0xf8] sm:$0xff]
      %v384 = vld [vmem:[%s265 + $0x100] sm:$0xff]
      %v385 = vld [vmem:[%s265 + $0x108] sm:$0xff]
      %v386 = vld [vmem:[%s265 + $0x110] sm:$0xff]
      %v387 = vld [vmem:[%s265 + $0x118] sm:$0xff]
      %v388 = vld [vmem:[%s265 + $0x120] sm:$0xff]
      %v389 = vld [vmem:[%s265 + $0x128] sm:$0xff]
      %v390 = vld [vmem:[%s265 + $0x130] sm:$0xff]
      %v391 = vld [vmem:[%s265 + $0x138] sm:$0xff]
      %v392 = vld [vmem:[%s265 + $0x140] sm:$0xff]
      %v393 = vld [vmem:[%s265 + $0x148] sm:$0xff]
      %v394 = vld [vmem:[%s265 + $0x150] sm:$0xff]
      %v395 = vld [vmem:[%s265 + $0x158] sm:$0xff]
      %v396 = vld [vmem:[%s265 + $0x160] sm:$0xff]
      %v397 = vld [vmem:[%s265 + $0x168] sm:$0xff]
      %v398 = vld [vmem:[%s265 + $0x170] sm:$0xff]
      %v399 = vld [vmem:[%s265 + $0x178] sm:$0xff]
      %v400 = vld [vmem:[%s265 + $0x180] sm:$0xff]
      %v401 = vld [vmem:[%s265 + $0x188] sm:$0xff]
      %v402 = vld [vmem:[%s265 + $0x190] sm:$0xff]
      %v403 = vld [vmem:[%s265 + $0x198] sm:$0xff]
      %v404 = vld [vmem:[%s265 + $0x1a0] sm:$0xff]
      %v405 = vld [vmem:[%s265 + $0x1a8] sm:$0xff]
      %v406 = vld [vmem:[%s265 + $0x1b0] sm:$0xff]
      %v407 = vld [vmem:[%s265 + $0x1b8] sm:$0xff]
      %v408 = vld [vmem:[%s265 + $0x1c0] sm:$0xff]
      %v409 = vld [vmem:[%s265 + $0x1c8] sm:$0xff]
      %v410 = vld [vmem:[%s265 + $0x1d0] sm:$0xff]
      %v411 = vld [vmem:[%s265 + $0x1d8] sm:$0xff]
      %v412 = vld [vmem:[%s265 + $0x1e0] sm:$0xff]
      %v413 = vld [vmem:[%s265 + $0x1e8] sm:$0xff]
      %v414 = vld [vmem:[%s265 + $0x1f0] sm:$0xff]
      %v415 = vld [vmem:[%s265 + $0x1f8] sm:$0xff]
      %v416 = vld [vmem:[%s265 + $0x200] sm:$0xff]
      %v417 = vld [vmem:[%s265 + $0x208] sm:$0xff]
      %v418 = vld [vmem:[%s265 + $0x210] sm:$0xff]
      %v419 = vld [vmem:[%s265 + $0x218] sm:$0xff]
      %v420 = vld [vmem:[%s265 + $0x220] sm:$0xff]
      %v421 = vld [vmem:[%s265 + $0x228] sm:$0xff]
      %v422 = vld [vmem:[%s265 + $0x230] sm:$0xff]
      %v423 = vld [vmem:[%s265 + $0x238] sm:$0xff]
      %v424 = vld [vmem:[%s2] sm:$0xff]
      %v425 = vld [vmem:[%s2 + $0x8] sm:$0xff]
      %v426 = vld [vmem:[%s2 + $0x10] sm:$0xff]
      %v427 = vld [vmem:[%s2 + $0x18] sm:$0xff]
      %v428 = vld [vmem:[%s2 + $0x20] sm:$0xff]
      %v429 = vld [vmem:[%s2 + $0x28] sm:$0xff]
      %v430 = vld [vmem:[%s2 + $0x30] sm:$0xff]
      %v431 = vld [vmem:[%s2 + $0x38] sm:$0xff]
      %v432 = vld [vmem:[%s2 + $0x40] sm:$0xff]
      %v433 = vld [vmem:[%s2 + $0x48] sm:$0xff]
      %v434 = vld [vmem:[%s2 + $0x50] sm:$0xff]
      %v435 = vld [vmem:[%s2 + $0x58] sm:$0xff]
      %v436 = vld [vmem:[%s2 + $0x60] sm:$0xff]
      %v437 = vld [vmem:[%s2 + $0x68] sm:$0xff]
      %v438 = vld [vmem:[%s2 + $0x70] sm:$0xff]
      %v439 = vld [vmem:[%s2 + $0x78] sm:$0xff]
      %441 = vset.pattern.permute.xlu0 0
      %442 = vperm.xlu0 %441, %v424
      %v443 = vpop.permute.xlu0 %442
      %446 = vset.pattern.permute.xlu0 0
      %447 = vperm.xlu0 %446, %v425
      %v448 = vpop.permute.xlu0 %447
      %451 = vset.pattern.permute.xlu0 0
      %452 = vperm.xlu0 %451, %v426
      %v453 = vpop.permute.xlu0 %452
      %456 = vset.pattern.permute.xlu0 0
      %457 = vperm.xlu0 %456, %v427
      %v458 = vpop.permute.xlu0 %457
      %461 = vset.pattern.permute.xlu0 0
      %462 = vperm.xlu0 %461, %v428
      %v463 = vpop.permute.xlu0 %462
      %466 = vset.pattern.permute.xlu0 0
      %467 = vperm.xlu0 %466, %v429
      %v468 = vpop.permute.xlu0 %467
      %471 = vset.pattern.permute.xlu0 0
      %472 = vperm.xlu0 %471, %v430
      %v473 = vpop.permute.xlu0 %472
      %476 = vset.pattern.permute.xlu0 0
      %477 = vperm.xlu0 %476, %v431
      %v478 = vpop.permute.xlu0 %477
      %481 = vset.pattern.permute.xlu0 0
      %482 = vperm.xlu0 %481, %v432
      %v483 = vpop.permute.xlu0 %482
      %486 = vset.pattern.permute.xlu0 0
      %487 = vperm.xlu0 %486, %v433
      %v488 = vpop.permute.xlu0 %487
      %491 = vset.pattern.permute.xlu0 0
      %492 = vperm.xlu0 %491, %v434
      %v493 = vpop.permute.xlu0 %492
      %496 = vset.pattern.permute.xlu0 0
      %497 = vperm.xlu0 %496, %v435
      %v498 = vpop.permute.xlu0 %497
      %501 = vset.pattern.permute.xlu0 0
      %502 = vperm.xlu0 %501, %v436
      %v503 = vpop.permute.xlu0 %502
      %506 = vset.pattern.permute.xlu0 0
      %507 = vperm.xlu0 %506, %v437
      %v508 = vpop.permute.xlu0 %507
      %511 = vset.pattern.permute.xlu0 0
      %512 = vperm.xlu0 %511, %v438
      %v513 = vpop.permute.xlu0 %512
      %516 = vset.pattern.permute.xlu0 0
      %517 = vperm.xlu0 %516, %v439
      %v518 = vpop.permute.xlu0 %517
      %v568 = vunpack.c.l.b16 %v304
      %v569 = vunpack.c.h.b16 %v304
      %v570 = vunpack.c.l.b16 %v305
      %v571 = vunpack.c.h.b16 %v305
      %v572 = vunpack.c.l.b16 %v306
      %v573 = vunpack.c.l.b16 %v307
      %v574 = vunpack.c.h.b16 %v307
      %v575 = vunpack.c.l.b16 %v308
      %v576 = vunpack.c.h.b16 %v308
      %v577 = vunpack.c.l.b16 %v309
      %v578 = vunpack.c.l.b16 %v310
      %v579 = vunpack.c.h.b16 %v310
      %v580 = vunpack.c.l.b16 %v311
      %v581 = vunpack.c.h.b16 %v311
      %v582 = vunpack.c.l.b16 %v312
      %v583 = vunpack.c.l.b16 %v313
      %v584 = vunpack.c.h.b16 %v313
      %v585 = vunpack.c.l.b16 %v314
      %v586 = vunpack.c.h.b16 %v314
      %v587 = vunpack.c.l.b16 %v315
      %v588 = vunpack.c.l.b16 %v316
      %v589 = vunpack.c.h.b16 %v316
      %v590 = vunpack.c.l.b16 %v317
      %v591 = vunpack.c.h.b16 %v317
      %v592 = vunpack.c.l.b16 %v318
      %v593 = vunpack.c.l.b16 %v319
      %v594 = vunpack.c.h.b16 %v319
      %v595 = vunpack.c.l.b16 %v320
      %v596 = vunpack.c.h.b16 %v320
      %v597 = vunpack.c.l.b16 %v321
      %v598 = vunpack.c.l.b16 %v322
      %v599 = vunpack.c.h.b16 %v322
      %v600 = vunpack.c.l.b16 %v323
      %v601 = vunpack.c.h.b16 %v323
      %v602 = vunpack.c.l.b16 %v324
      %v603 = vunpack.c.l.b16 %v325
      %v604 = vunpack.c.h.b16 %v325
      %v605 = vunpack.c.l.b16 %v326
      %v606 = vunpack.c.h.b16 %v326
      %v607 = vunpack.c.l.b16 %v327
      %v608 = vunpack.c.l.b16 %v328
      %v609 = vunpack.c.h.b16 %v328
      %v610 = vunpack.c.l.b16 %v329
      %v611 = vunpack.c.h.b16 %v329
      %v612 = vunpack.c.l.b16 %v330
      %v613 = vunpack.c.l.b16 %v331
      %v614 = vunpack.c.h.b16 %v331
      %v615 = vunpack.c.l.b16 %v332
      %v616 = vunpack.c.h.b16 %v332
      %v617 = vunpack.c.l.b16 %v333
      %v618 = vunpack.c.l.b16 %v334
      %v619 = vunpack.c.h.b16 %v334
      %v620 = vunpack.c.l.b16 %v335
      %v621 = vunpack.c.h.b16 %v335
      %v622 = vunpack.c.l.b16 %v336
      %v623 = vunpack.c.l.b16 %v337
      %v624 = vunpack.c.h.b16 %v337
      %v625 = vunpack.c.l.b16 %v338
      %v626 = vunpack.c.h.b16 %v338
      %v627 = vunpack.c.l.b16 %v339
      %v628 = vunpack.c.l.b16 %v340
      %v629 = vunpack.c.h.b16 %v340
      %v630 = vunpack.c.l.b16 %v341
      %v631 = vunpack.c.h.b16 %v341
      %v632 = vunpack.c.l.b16 %v342
      %v633 = vunpack.c.l.b16 %v343
      %v634 = vunpack.c.h.b16 %v343
      %v635 = vunpack.c.l.b16 %v344
      %v636 = vunpack.c.h.b16 %v344
      %v637 = vunpack.c.l.b16 %v345
      %v638 = vunpack.c.l.b16 %v346
      %v639 = vunpack.c.h.b16 %v346
      %v640 = vunpack.c.l.b16 %v347
      %v641 = vunpack.c.h.b16 %v347
      %v642 = vunpack.c.l.b16 %v348
      %v643 = vunpack.c.l.b16 %v349
      %v644 = vunpack.c.h.b16 %v349
      %v645 = vunpack.c.l.b16 %v350
      %v646 = vunpack.c.h.b16 %v350
      %v647 = vunpack.c.l.b16 %v351
      %v648 = vpack.c.b16 %v573, %v568
      %v649 = vpack.c.b16 %v574, %v569
      %v650 = vpack.c.b16 %v575, %v570
      %v651 = vpack.c.b16 %v576, %v571
      %v652 = vpack.c.b16 %v577, %v572
      %v653 = vpack.c.b16 %v583, %v578
      %v654 = vpack.c.b16 %v584, %v579
      %v655 = vpack.c.b16 %v585, %v580
      %v656 = vpack.c.b16 %v586, %v581
      %v657 = vpack.c.b16 %v587, %v582
      %v658 = vpack.c.b16 %v593, %v588
      %v659 = vpack.c.b16 %v594, %v589
      %v660 = vpack.c.b16 %v595, %v590
      %v661 = vpack.c.b16 %v596, %v591
      %v662 = vpack.c.b16 %v597, %v592
      %v663 = vpack.c.b16 %v603, %v598
      %v664 = vpack.c.b16 %v604, %v599
      %v665 = vpack.c.b16 %v605, %v600
      %v666 = vpack.c.b16 %v606, %v601
      %v667 = vpack.c.b16 %v607, %v602
      %v668 = vpack.c.b16 %v613, %v608
      %v669 = vpack.c.b16 %v614, %v609
      %v670 = vpack.c.b16 %v615, %v610
      %v671 = vpack.c.b16 %v616, %v611
      %v672 = vpack.c.b16 %v617, %v612
      %v673 = vpack.c.b16 %v623, %v618
      %v674 = vpack.c.b16 %v624, %v619
      %v675 = vpack.c.b16 %v625, %v620
      %v676 = vpack.c.b16 %v626, %v621
      %v677 = vpack.c.b16 %v627, %v622
      %v678 = vpack.c.b16 %v633, %v628
      %v679 = vpack.c.b16 %v634, %v629
      %v680 = vpack.c.b16 %v635, %v630
      %v681 = vpack.c.b16 %v636, %v631
      %v682 = vpack.c.b16 %v637, %v632
      %v683 = vpack.c.b16 %v643, %v638
      %v684 = vpack.c.b16 %v644, %v639
      %v685 = vpack.c.b16 %v645, %v640
      %v686 = vpack.c.b16 %v646, %v641
      %v687 = vpack.c.b16 %v647, %v642
      %v792 = vunpack.c.l.b16 %v352
      %v793 = vunpack.c.h.b16 %v352
      %v794 = vunpack.c.l.b16 %v353
      %v795 = vunpack.c.h.b16 %v353
      %v796 = vunpack.c.l.b16 %v354
      %v797 = vunpack.c.h.b16 %v354
      %v798 = vunpack.c.l.b16 %v355
      %v799 = vunpack.c.h.b16 %v355
      %v800 = vunpack.c.l.b16 %v356
      %v801 = vunpack.c.h.b16 %v356
      %v802 = vunpack.c.l.b16 %v357
      %v803 = vunpack.c.h.b16 %v357
      %v804 = vunpack.c.l.b16 %v358
      %v805 = vunpack.c.h.b16 %v358
      %v806 = vunpack.c.l.b16 %v359
      %v807 = vunpack.c.h.b16 %v359
      %v808 = vunpack.c.l.b16 %v360
      %v809 = vunpack.c.h.b16 %v360
      %v810 = vunpack.c.l.b16 %v361
      %v811 = vunpack.c.h.b16 %v361
      %v812 = vunpack.c.l.b16 %v362
      %v813 = vunpack.c.h.b16 %v362
      %v814 = vunpack.c.l.b16 %v363
      %v815 = vunpack.c.h.b16 %v363
      %v816 = vunpack.c.l.b16 %v364
      %v817 = vunpack.c.h.b16 %v364
      %v818 = vunpack.c.l.b16 %v365
      %v819 = vunpack.c.h.b16 %v365
      %v820 = vunpack.c.l.b16 %v366
      %v821 = vunpack.c.h.b16 %v366
      %v822 = vunpack.c.l.b16 %v367
      %v823 = vunpack.c.h.b16 %v367
      %v824 = vunpack.c.l.b16 %v368
      %v825 = vunpack.c.h.b16 %v368
      %v826 = vunpack.c.l.b16 %v369
      %v827 = vunpack.c.h.b16 %v369
      %v828 = vunpack.c.l.b16 %v370
      %v829 = vunpack.c.h.b16 %v370
      %v830 = vunpack.c.l.b16 %v371
      %v831 = vunpack.c.h.b16 %v371
      %v832 = vunpack.c.l.b16 %v372
      %v833 = vunpack.c.h.b16 %v372
      %v834 = vunpack.c.l.b16 %v373
      %v835 = vunpack.c.h.b16 %v373
      %v836 = vunpack.c.l.b16 %v374
      %v837 = vunpack.c.h.b16 %v374
      %v838 = vunpack.c.l.b16 %v375
      %v839 = vunpack.c.h.b16 %v375
      %v840 = vunpack.c.l.b16 %v376
      %v841 = vunpack.c.h.b16 %v376
      %v842 = vunpack.c.l.b16 %v377
      %v843 = vunpack.c.h.b16 %v377
      %v844 = vunpack.c.l.b16 %v378
      %v845 = vunpack.c.h.b16 %v378
      %v846 = vunpack.c.l.b16 %v379
      %v847 = vunpack.c.h.b16 %v379
      %v848 = vunpack.c.l.b16 %v380
      %v849 = vunpack.c.h.b16 %v380
      %v850 = vunpack.c.l.b16 %v381
      %v851 = vunpack.c.h.b16 %v381
      %v852 = vunpack.c.l.b16 %v382
      %v853 = vunpack.c.h.b16 %v382
      %v854 = vunpack.c.l.b16 %v383
      %v855 = vunpack.c.h.b16 %v383
      %v856 = vunpack.c.l.b16 %v384
      %v857 = vunpack.c.h.b16 %v384
      %v858 = vunpack.c.l.b16 %v385
      %v859 = vunpack.c.h.b16 %v385
      %v860 = vunpack.c.l.b16 %v386
      %v861 = vunpack.c.h.b16 %v386
      %v862 = vunpack.c.l.b16 %v387
      %v863 = vunpack.c.h.b16 %v387
      %v864 = vunpack.c.l.b16 %v388
      %v865 = vunpack.c.h.b16 %v388
      %v866 = vunpack.c.l.b16 %v389
      %v867 = vunpack.c.h.b16 %v389
      %v868 = vunpack.c.l.b16 %v390
      %v869 = vunpack.c.h.b16 %v390
      %v870 = vunpack.c.l.b16 %v391
      %v871 = vunpack.c.h.b16 %v391
      %v872 = vunpack.c.l.b16 %v392
      %v873 = vunpack.c.h.b16 %v392
      %v874 = vunpack.c.l.b16 %v393
      %v875 = vunpack.c.h.b16 %v393
      %v876 = vunpack.c.l.b16 %v394
      %v877 = vunpack.c.h.b16 %v394
      %v878 = vunpack.c.l.b16 %v395
      %v879 = vunpack.c.h.b16 %v395
      %v880 = vunpack.c.l.b16 %v396
      %v881 = vunpack.c.h.b16 %v396
      %v882 = vunpack.c.l.b16 %v397
      %v883 = vunpack.c.h.b16 %v397
      %v884 = vunpack.c.l.b16 %v398
      %v885 = vunpack.c.h.b16 %v398
      %v886 = vunpack.c.l.b16 %v399
      %v887 = vunpack.c.h.b16 %v399
      %v888 = vunpack.c.l.b16 %v400
      %v889 = vunpack.c.h.b16 %v400
      %v890 = vunpack.c.l.b16 %v401
      %v891 = vunpack.c.h.b16 %v401
      %v892 = vunpack.c.l.b16 %v402
      %v893 = vunpack.c.h.b16 %v402
      %v894 = vunpack.c.l.b16 %v403
      %v895 = vunpack.c.h.b16 %v403
      %v896 = vunpack.c.l.b16 %v404
      %v897 = vunpack.c.h.b16 %v404
      %v898 = vunpack.c.l.b16 %v405
      %v899 = vunpack.c.h.b16 %v405
      %v900 = vunpack.c.l.b16 %v406
      %v901 = vunpack.c.h.b16 %v406
      %v902 = vunpack.c.l.b16 %v407
      %v903 = vunpack.c.h.b16 %v407
      %v904 = vunpack.c.l.b16 %v408
      %v905 = vunpack.c.h.b16 %v408
      %v906 = vunpack.c.l.b16 %v409
      %v907 = vunpack.c.h.b16 %v409
      %v908 = vunpack.c.l.b16 %v410
      %v909 = vunpack.c.h.b16 %v410
      %v910 = vunpack.c.l.b16 %v411
      %v911 = vunpack.c.h.b16 %v411
      %v912 = vunpack.c.l.b16 %v412
      %v913 = vunpack.c.h.b16 %v412
      %v914 = vunpack.c.l.b16 %v413
      %v915 = vunpack.c.h.b16 %v413
      %v916 = vunpack.c.l.b16 %v414
      %v917 = vunpack.c.h.b16 %v414
      %v918 = vunpack.c.l.b16 %v415
      %v919 = vunpack.c.h.b16 %v415
      %v920 = vunpack.c.l.b16 %v416
      %v921 = vunpack.c.h.b16 %v416
      %v922 = vunpack.c.l.b16 %v417
      %v923 = vunpack.c.h.b16 %v417
      %v924 = vunpack.c.l.b16 %v418
      %v925 = vunpack.c.h.b16 %v418
      %v926 = vunpack.c.l.b16 %v419
      %v927 = vunpack.c.h.b16 %v419
      %v928 = vunpack.c.l.b16 %v420
      %v929 = vunpack.c.h.b16 %v420
      %v930 = vunpack.c.l.b16 %v421
      %v931 = vunpack.c.h.b16 %v421
      %v932 = vunpack.c.l.b16 %v422
      %v933 = vunpack.c.h.b16 %v422
      %v934 = vunpack.c.l.b16 %v423
      %v935 = vunpack.c.h.b16 %v423
      %v936 = vpack.c.b16 %v794, %v792
      %v937 = vpack.c.b16 %v795, %v793
      %v938 = vpack.c.b16 %v798, %v796
      %v939 = vpack.c.b16 %v799, %v797
      %v940 = vpack.c.b16 %v802, %v800
      %v941 = vpack.c.b16 %v803, %v801
      %v942 = vpack.c.b16 %v806, %v804
      %v943 = vpack.c.b16 %v807, %v805
      %v944 = vpack.c.b16 %v810, %v808
      %v945 = vpack.c.b16 %v811, %v809
      %v946 = vpack.c.b16 %v814, %v812
      %v947 = vpack.c.b16 %v815, %v813
      %v948 = vpack.c.b16 %v818, %v816
      %v949 = vpack.c.b16 %v819, %v817
      %v950 = vpack.c.b16 %v822, %v820
      %v951 = vpack.c.b16 %v823, %v821
      %v952 = vpack.c.b16 %v826, %v824
      %v953 = vpack.c.b16 %v827, %v825
      %v954 = vpack.c.b16 %v830, %v828
      %v955 = vpack.c.b16 %v831, %v829
      %v956 = vpack.c.b16 %v834, %v832
      %v957 = vpack.c.b16 %v835, %v833
      %v958 = vpack.c.b16 %v838, %v836
      %v959 = vpack.c.b16 %v839, %v837
      %v960 = vpack.c.b16 %v842, %v840
      %v961 = vpack.c.b16 %v843, %v841
      %v962 = vpack.c.b16 %v846, %v844
      %v963 = vpack.c.b16 %v847, %v845
      %v964 = vpack.c.b16 %v850, %v848
      %v965 = vpack.c.b16 %v851, %v849
      %v966 = vpack.c.b16 %v854, %v852
      %v967 = vpack.c.b16 %v855, %v853
      %v968 = vpack.c.b16 %v858, %v856
      %v969 = vpack.c.b16 %v859, %v857
      %v970 = vpack.c.b16 %v862, %v860
      %v971 = vpack.c.b16 %v863, %v861
      %v972 = vpack.c.b16 %v866, %v864
      %v973 = vpack.c.b16 %v867, %v865
      %v974 = vpack.c.b16 %v870, %v868
      %v975 = vpack.c.b16 %v871, %v869
      %v976 = vpack.c.b16 %v874, %v872
      %v977 = vpack.c.b16 %v875, %v873
      %v978 = vpack.c.b16 %v878, %v876
      %v979 = vpack.c.b16 %v879, %v877
      %v980 = vpack.c.b16 %v882, %v880
      %v981 = vpack.c.b16 %v883, %v881
      %v982 = vpack.c.b16 %v886, %v884
      %v983 = vpack.c.b16 %v887, %v885
      %v984 = vpack.c.b16 %v890, %v888
      %v985 = vpack.c.b16 %v891, %v889
      %v986 = vpack.c.b16 %v894, %v892
      %v987 = vpack.c.b16 %v895, %v893
      %v988 = vpack.c.b16 %v898, %v896
      %v989 = vpack.c.b16 %v899, %v897
      %v990 = vpack.c.b16 %v902, %v900
      %v991 = vpack.c.b16 %v903, %v901
      %v992 = vpack.c.b16 %v906, %v904
      %v993 = vpack.c.b16 %v907, %v905
      %v994 = vpack.c.b16 %v910, %v908
      %v995 = vpack.c.b16 %v911, %v909
      %v996 = vpack.c.b16 %v914, %v912
      %v997 = vpack.c.b16 %v915, %v913
      %v998 = vpack.c.b16 %v918, %v916
      %v999 = vpack.c.b16 %v919, %v917
      %v1000 = vpack.c.b16 %v922, %v920
      %v1001 = vpack.c.b16 %v923, %v921
      %v1002 = vpack.c.b16 %v926, %v924
      %v1003 = vpack.c.b16 %v927, %v925
      %v1004 = vpack.c.b16 %v930, %v928
      %v1005 = vpack.c.b16 %v931, %v929
      %v1006 = vpack.c.b16 %v934, %v932
      %v1007 = vpack.c.b16 %v935, %v933
      %vm1080 = vcmask 523264
      %v1082 = vsel %vm1080, %v652, 0
      %v1085 = vsel %vm1080, %v657, 0
      %v1088 = vsel %vm1080, %v662, 0
      %v1091 = vsel %vm1080, %v667, 0
      %v1094 = vsel %vm1080, %v672, 0
      %v1097 = vsel %vm1080, %v677, 0
      %v1100 = vsel %vm1080, %v682, 0
      %v1103 = vsel %vm1080, %v687, 0
      %1105 = vmatprep.subr.bf16.mxu0 %v937
      %1106 = vmatpush1.bf16.msra.mxu0 %v936
      %1107 = vmatprep.subr.bf16.mxu0 %v939
      %1108 = vmatpush1.bf16.msra.mxu0 %v938
      %1109 = vmatprep.subr.bf16.mxu0 %v941
      %1110 = vmatpush1.bf16.msra.mxu0 %v940
      %1111 = vmatprep.subr.bf16.mxu0 %v943
      %1112 = vmatpush1.bf16.msra.mxu0 %v942
      %1113 = vmatprep.subr.bf16.mxu0 %v945
      %1114 = vmatpush1.bf16.msra.mxu0 %v944
      %1115 = vmatprep.subr.bf16.mxu0 %v947
      %1116 = vmatpush1.bf16.msra.mxu0 %v946
      %1117 = vmatprep.subr.bf16.mxu0 %v949
      %1118 = vmatpush1.bf16.msra.mxu0 %v948
      %1119 = vmatprep.subr.bf16.mxu0 %v951
      %1120 = vmatpush1.bf16.msra.mxu0 %v950
      %1121 = vmatprep.subr.bf16.mxu0 %v953
      %1122 = vmatpush1.bf16.msra.mxu0 %v952
      %1123 = vmatprep.subr.bf16.mxu0 %v955
      %1124 = vmatpush1.bf16.msra.mxu0 %v954
      %1125 = vmatprep.subr.bf16.mxu0 %v957
      %1126 = vmatpush1.bf16.msra.mxu0 %v956
      %1127 = vmatprep.subr.bf16.mxu0 %v959
      %1128 = vmatpush1.bf16.msra.mxu0 %v958
      %1129 = vmatprep.subr.bf16.mxu0 %v961
      %1130 = vmatpush1.bf16.msra.mxu0 %v960
      %1131 = vmatprep.subr.bf16.mxu0 %v963
      %1132 = vmatpush1.bf16.msra.mxu0 %v962
      %1133 = vmatprep.subr.bf16.mxu0 %v965
      %1134 = vmatpush1.bf16.msra.mxu0 %v964
      %1135 = vmatprep.subr.bf16.mxu0 %v967
      %1136 = vmatpush1.bf16.msra.mxu0 %v966
      %1137 = vmatprep.mubr.bf16.mxu0 %v649
      %1138 = vmatmul.mubr.bf16.gmra.mrb[0].mxu0 %v648
      %v1139 = vpop.f32.mrb[0].mxu0
      %v1140 = vadd.f32 %v443, %v1139
      %v1141 = vpop.f32.mrb[0].mxu0
      %v1142 = vadd.f32 %v443, %v1141
      %v1143 = vpop.f32.mrb[0].mxu0
      %v1144 = vadd.f32 %v448, %v1143
      %v1145 = vpop.f32.mrb[0].mxu0
      %v1146 = vadd.f32 %v448, %v1145
      %1147 = vmatprep.mubr.bf16.mxu0 %v654
      %1148 = vmatmul.mubr.bf16.gmra.mrb[0].mxu0 %v653
      %v1149 = vpop.f32.mrb[0].mxu0
      %v1150 = vadd.f32 %v453, %v1149
      %v1151 = vpop.f32.mrb[0].mxu0
      %v1152 = vadd.f32 %v453, %v1151
      %v1153 = vpop.f32.mrb[0].mxu0
      %v1154 = vadd.f32 %v458, %v1153
      %v1155 = vpop.f32.mrb[0].mxu0
      %v1156 = vadd.f32 %v458, %v1155
      %1157 = vmatprep.mubr.bf16.mxu0 %v659
      %1158 = vmatmul.mubr.bf16.gmra.mrb[0].mxu0 %v658
      %v1159 = vpop.f32.mrb[0].mxu0
      %v1160 = vadd.f32 %v463, %v1159
      %v1161 = vpop.f32.mrb[0].mxu0
      %v1162 = vadd.f32 %v463, %v1161
      %v1163 = vpop.f32.mrb[0].mxu0
      %v1164 = vadd.f32 %v468, %v1163
      %v1165 = vpop.f32.mrb[0].mxu0
      %v1166 = vadd.f32 %v468, %v1165
      %1167 = vmatprep.mubr.bf16.mxu0 %v664
      %1168 = vmatmul.mubr.bf16.gmra.mrb[0].mxu0 %v663
      %v1169 = vpop.f32.mrb[0].mxu0
      %v1170 = vadd.f32 %v473, %v1169
      %v1171 = vpop.f32.mrb[0].mxu0
      %v1172 = vadd.f32 %v473, %v1171
      %v1173 = vpop.f32.mrb[0].mxu0
      %v1174 = vadd.f32 %v478, %v1173
      %v1175 = vpop.f32.mrb[0].mxu0
      %v1176 = vadd.f32 %v478, %v1175
      %1177 = vmatprep.mubr.bf16.mxu0 %v669
      %1178 = vmatmul.mubr.bf16.gmra.mrb[0].mxu0 %v668
      %v1179 = vpop.f32.mrb[0].mxu0
      %v1180 = vadd.f32 %v483, %v1179
      %v1181 = vpop.f32.mrb[0].mxu0
      %v1182 = vadd.f32 %v483, %v1181
      %v1183 = vpop.f32.mrb[0].mxu0
      %v1184 = vadd.f32 %v488, %v1183
      %v1185 = vpop.f32.mrb[0].mxu0
      %v1186 = vadd.f32 %v488, %v1185
      %1187 = vmatprep.mubr.bf16.mxu0 %v674
      %1188 = vmatmul.mubr.bf16.gmra.mrb[0].mxu0 %v673
      %v1189 = vpop.f32.mrb[0].mxu0
      %v1190 = vadd.f32 %v493, %v1189
      %v1191 = vpop.f32.mrb[0].mxu0
      %v1192 = vadd.f32 %v493, %v1191
      %v1193 = vpop.f32.mrb[0].mxu0
      %v1194 = vadd.f32 %v498, %v1193
      %v1195 = vpop.f32.mrb[0].mxu0
      %v1196 = vadd.f32 %v498, %v1195
      %1197 = vmatprep.mubr.bf16.mxu0 %v679
      %1198 = vmatmul.mubr.bf16.gmra.mrb[0].mxu0 %v678
      %v1199 = vpop.f32.mrb[0].mxu0
      %v1200 = vadd.f32 %v503, %v1199
      %v1201 = vpop.f32.mrb[0].mxu0
      %v1202 = vadd.f32 %v503, %v1201
      %v1203 = vpop.f32.mrb[0].mxu0
      %v1204 = vadd.f32 %v508, %v1203
      %v1205 = vpop.f32.mrb[0].mxu0
      %v1206 = vadd.f32 %v508, %v1205
      %1207 = vmatprep.mubr.bf16.mxu0 %v684
      %1208 = vmatmul.mubr.bf16.gmra.mrb[0].mxu0 %v683
      %v1209 = vpop.f32.mrb[0].mxu0
      %v1210 = vadd.f32 %v513, %v1209
      %v1211 = vpop.f32.mrb[0].mxu0
      %v1212 = vadd.f32 %v513, %v1211
      %v1213 = vpop.f32.mrb[0].mxu0
      %v1214 = vadd.f32 %v518, %v1213
      %v1215 = vpop.f32.mrb[0].mxu0
      %v1216 = vadd.f32 %v518, %v1215
      %1217 = vdwg.mxu0
      %1218 = vmatprep.subr.bf16.mxu0 %v969
      %1219 = vmatpush1.bf16.msra.mxu0 %v968
      %1220 = vmatprep.subr.bf16.mxu0 %v971
      %1221 = vmatpush1.bf16.msra.mxu0 %v970
      %1222 = vmatprep.subr.bf16.mxu0 %v973
      %1223 = vmatpush1.bf16.msra.mxu0 %v972
      %1224 = vmatprep.subr.bf16.mxu0 %v975
      %1225 = vmatpush1.bf16.msra.mxu0 %v974
      %1226 = vmatprep.subr.bf16.mxu0 %v977
      %1227 = vmatpush1.bf16.msra.mxu0 %v976
      %1228 = vmatprep.subr.bf16.mxu0 %v979
      %1229 = vmatpush1.bf16.msra.mxu0 %v978
      %1230 = vmatprep.subr.bf16.mxu0 %v981
      %1231 = vmatpush1.bf16.msra.mxu0 %v980
      %1232 = vmatprep.subr.bf16.mxu0 %v983
      %1233 = vmatpush1.bf16.msra.mxu0 %v982
      %1234 = vmatprep.subr.bf16.mxu0 %v985
      %1235 = vmatpush1.bf16.msra.mxu0 %v984
      %1236 = vmatprep.subr.bf16.mxu0 %v987
      %1237 = vmatpush1.bf16.msra.mxu0 %v986
      %1238 = vmatprep.subr.bf16.mxu0 %v989
      %1239 = vmatpush1.bf16.msra.mxu0 %v988
      %1240 = vmatprep.subr.bf16.mxu0 %v991
      %1241 = vmatpush1.bf16.msra.mxu0 %v990
      %1242 = vmatprep.subr.bf16.mxu0 %v993
      %1243 = vmatpush1.bf16.msra.mxu0 %v992
      %1244 = vmatprep.subr.bf16.mxu0 %v995
      %1245 = vmatpush1.bf16.msra.mxu0 %v994
      %1246 = vmatprep.subr.bf16.mxu0 %v997
      %1247 = vmatpush1.bf16.msra.mxu0 %v996
      %1248 = vmatprep.subr.bf16.mxu0 %v999
      %1249 = vmatpush1.bf16.msra.mxu0 %v998
      %1250 = vmatprep.mubr.bf16.mxu0 %v651
      %1251 = vmatmul.mubr.bf16.gmra.mrb[0].mxu0 %v650
      %v1252 = vpop.f32.mrb[0].mxu0
      %v1253 = vadd.f32 %v1140, %v1252
      %v1254 = vpop.f32.mrb[0].mxu0
      %v1255 = vadd.f32 %v1142, %v1254
      %v1256 = vpop.f32.mrb[0].mxu0
      %v1257 = vadd.f32 %v1144, %v1256
      %v1258 = vpop.f32.mrb[0].mxu0
      %v1259 = vadd.f32 %v1146, %v1258
      %1260 = vmatprep.mubr.bf16.mxu0 %v656
      %1261 = vmatmul.mubr.bf16.gmra.mrb[0].mxu0 %v655
      %v1262 = vpop.f32.mrb[0].mxu0
      %v1263 = vadd.f32 %v1150, %v1262
      %v1264 = vpop.f32.mrb[0].mxu0
      %v1265 = vadd.f32 %v1152, %v1264
      %v1266 = vpop.f32.mrb[0].mxu0
      %v1267 = vadd.f32 %v1154, %v1266
      %v1268 = vpop.f32.mrb[0].mxu0
      %v1269 = vadd.f32 %v1156, %v1268
      %1270 = vmatprep.mubr.bf16.mxu0 %v661
      %1271 = vmatmul.mubr.bf16.gmra.mrb[0].mxu0 %v660
      %v1272 = vpop.f32.mrb[0].mxu0
      %v1273 = vadd.f32 %v1160, %v1272
      %v1274 = vpop.f32.mrb[0].mxu0
      %v1275 = vadd.f32 %v1162, %v1274
      %v1276 = vpop.f32.mrb[0].mxu0
      %v1277 = vadd.f32 %v1164, %v1276
      %v1278 = vpop.f32.mrb[0].mxu0
      %v1279 = vadd.f32 %v1166, %v1278
      %1280 = vmatprep.mubr.bf16.mxu0 %v666
      %1281 = vmatmul.mubr.bf16.gmra.mrb[0].mxu0 %v665
      %v1282 = vpop.f32.mrb[0].mxu0
      %v1283 = vadd.f32 %v1170, %v1282
      %v1284 = vpop.f32.mrb[0].mxu0
      %v1285 = vadd.f32 %v1172, %v1284
      %v1286 = vpop.f32.mrb[0].mxu0
      %v1287 = vadd.f32 %v1174, %v1286
      %v1288 = vpop.f32.mrb[0].mxu0
      %v1289 = vadd.f32 %v1176, %v1288
      %1290 = vmatprep.mubr.bf16.mxu0 %v671
      %1291 = vmatmul.mubr.bf16.gmra.mrb[0].mxu0 %v670
      %v1292 = vpop.f32.mrb[0].mxu0
      %v1293 = vadd.f32 %v1180, %v1292
      %v1294 = vpop.f32.mrb[0].mxu0
      %v1295 = vadd.f32 %v1182, %v1294
      %v1296 = vpop.f32.mrb[0].mxu0
      %v1297 = vadd.f32 %v1184, %v1296
      %v1298 = vpop.f32.mrb[0].mxu0
      %v1299 = vadd.f32 %v1186, %v1298
      %1300 = vmatprep.mubr.bf16.mxu0 %v676
      %1301 = vmatmul.mubr.bf16.gmra.mrb[0].mxu0 %v675
      %v1302 = vpop.f32.mrb[0].mxu0
      %v1303 = vadd.f32 %v1190, %v1302
      %v1304 = vpop.f32.mrb[0].mxu0
      %v1305 = vadd.f32 %v1192, %v1304
      %v1306 = vpop.f32.mrb[0].mxu0
      %v1307 = vadd.f32 %v1194, %v1306
      %v1308 = vpop.f32.mrb[0].mxu0
      %v1309 = vadd.f32 %v1196, %v1308
      %1310 = vmatprep.mubr.bf16.mxu0 %v681
      %1311 = vmatmul.mubr.bf16.gmra.mrb[0].mxu0 %v680
      %v1312 = vpop.f32.mrb[0].mxu0
      %v1313 = vadd.f32 %v1200, %v1312
      %v1314 = vpop.f32.mrb[0].mxu0
      %v1315 = vadd.f32 %v1202, %v1314
      %v1316 = vpop.f32.mrb[0].mxu0
      %v1317 = vadd.f32 %v1204, %v1316
      %v1318 = vpop.f32.mrb[0].mxu0
      %v1319 = vadd.f32 %v1206, %v1318
      %1320 = vmatprep.mubr.bf16.mxu0 %v686
      %1321 = vmatmul.mubr.bf16.gmra.mrb[0].mxu0 %v685
      %v1322 = vpop.f32.mrb[0].mxu0
      %v1323 = vadd.f32 %v1210, %v1322
      %v1324 = vpop.f32.mrb[0].mxu0
      %v1325 = vadd.f32 %v1212, %v1324
      %v1326 = vpop.f32.mrb[0].mxu0
      %v1327 = vadd.f32 %v1214, %v1326
      %v1328 = vpop.f32.mrb[0].mxu0
      %v1329 = vadd.f32 %v1216, %v1328
      %1330 = vdwg.mxu0
      %1331 = vmatprep.subr.bf16.mxu0 %v1001
      %1332 = vmatpush1.bf16.msra.mxu0 %v1000
      %1333 = vmatprep.subr.bf16.mxu0 %v1003
      %1334 = vmatpush1.bf16.msra.mxu0 %v1002
      %1335 = vmatprep.subr.bf16.mxu0 %v1005
      %1336 = vmatpush1.bf16.msra.mxu0 %v1004
      %1337 = vmatprep.subr.bf16.mxu0 %v1007
      %1338 = vmatpush1.bf16.msra.mxu0 %v1006
      %1339 = vmatprep.subr.bf16.mxu0 0
      %1340 = vmatpush1.bf16.msra.mxu0 0
      %1341 = vmatprep.subr.bf16.mxu0 0
      %1342 = vmatpush1.bf16.msra.mxu0 0
      %1343 = vmatprep.subr.bf16.mxu0 0
      %1344 = vmatpush1.bf16.msra.mxu0 0
      %1345 = vmatprep.subr.bf16.mxu0 0
      %1346 = vmatpush1.bf16.msra.mxu0 0
      %1347 = vmatprep.subr.bf16.mxu0 0
      %1348 = vmatpush1.bf16.msra.mxu0 0
      %1349 = vmatprep.subr.bf16.mxu0 0
      %1350 = vmatpush1.bf16.msra.mxu0 0
      %1351 = vmatprep.subr.bf16.mxu0 0
      %1352 = vmatpush1.bf16.msra.mxu0 0
      %1353 = vmatprep.subr.bf16.mxu0 0
      %1354 = vmatpush1.bf16.msra.mxu0 0
      %1355 = vmatprep.subr.bf16.mxu0 0
      %1356 = vmatpush1.bf16.msra.mxu0 0
      %1357 = vmatprep.subr.bf16.mxu0 0
      %1358 = vmatpush1.bf16.msra.mxu0 0
      %1359 = vmatprep.subr.bf16.mxu0 0
      %1360 = vmatpush1.bf16.msra.mxu0 0
      %1361 = vmatprep.subr.bf16.mxu0 0
      %1362 = vmatpush1.bf16.msra.mxu0 0
      %1363 = vmatprep.mubr.bf16.mxu0 0
      %1364 = vmatmul.mubr.bf16.gmra.mrb[0].mxu0 %v1082
      %v1365 = vpop.f32.mrb[0].mxu0
      %v1366 = vadd.f32 %v1253, %v1365
      %v1367 = vpop.f32.mrb[0].mxu0
      %v1368 = vadd.f32 %v1255, %v1367
      %v1369 = vpop.f32.mrb[0].mxu0
      %v1370 = vadd.f32 %v1257, %v1369
      %v1371 = vpop.f32.mrb[0].mxu0
      %v1372 = vadd.f32 %v1259, %v1371
      %1373 = vmatprep.mubr.bf16.mxu0 0
      %1374 = vmatmul.mubr.bf16.gmra.mrb[0].mxu0 %v1085
      %v1375 = vpop.f32.mrb[0].mxu0
      %v1376 = vadd.f32 %v1263, %v1375
      %v1377 = vpop.f32.mrb[0].mxu0
      %v1378 = vadd.f32 %v1265, %v1377
      %v1379 = vpop.f32.mrb[0].mxu0
      %v1380 = vadd.f32 %v1267, %v1379
      %v1381 = vpop.f32.mrb[0].mxu0
      %v1382 = vadd.f32 %v1269, %v1381
      %1383 = vmatprep.mubr.bf16.mxu0 0
      %1384 = vmatmul.mubr.bf16.gmra.mrb[0].mxu0 %v1088
      %v1385 = vpop.f32.mrb[0].mxu0
      %v1386 = vadd.f32 %v1273, %v1385
      %v1387 = vpop.f32.mrb[0].mxu0
      %v1388 = vadd.f32 %v1275, %v1387
      %v1389 = vpop.f32.mrb[0].mxu0
      %v1390 = vadd.f32 %v1277, %v1389
      %v1391 = vpop.f32.mrb[0].mxu0
      %v1392 = vadd.f32 %v1279, %v1391
      %1393 = vmatprep.mubr.bf16.mxu0 0
      %1394 = vmatmul.mubr.bf16.gmra.mrb[0].mxu0 %v1091
      %v1395 = vpop.f32.mrb[0].mxu0
      %v1396 = vadd.f32 %v1283, %v1395
      %v1397 = vpop.f32.mrb[0].mxu0
      %v1398 = vadd.f32 %v1285, %v1397
      %v1399 = vpop.f32.mrb[0].mxu0
      %v1400 = vadd.f32 %v1287, %v1399
      %v1401 = vpop.f32.mrb[0].mxu0
      %v1402 = vadd.f32 %v1289, %v1401
      %1403 = vmatprep.mubr.bf16.mxu0 0
      %1404 = vmatmul.mubr.bf16.gmra.mrb[0].mxu0 %v1094
      %v1405 = vpop.f32.mrb[0].mxu0
      %v1406 = vadd.f32 %v1293, %v1405
      %v1407 = vpop.f32.mrb[0].mxu0
      %v1408 = vadd.f32 %v1295, %v1407
      %v1409 = vpop.f32.mrb[0].mxu0
      %v1410 = vadd.f32 %v1297, %v1409
      %v1411 = vpop.f32.mrb[0].mxu0
      %v1412 = vadd.f32 %v1299, %v1411
      %1413 = vmatprep.mubr.bf16.mxu0 0
      %1414 = vmatmul.mubr.bf16.gmra.mrb[0].mxu0 %v1097
      %v1415 = vpop.f32.mrb[0].mxu0
      %v1416 = vadd.f32 %v1303, %v1415
      %v1417 = vpop.f32.mrb[0].mxu0
      %v1418 = vadd.f32 %v1305, %v1417
      %v1419 = vpop.f32.mrb[0].mxu0
      %v1420 = vadd.f32 %v1307, %v1419
      %v1421 = vpop.f32.mrb[0].mxu0
      %v1422 = vadd.f32 %v1309, %v1421
      %1423 = vmatprep.mubr.bf16.mxu0 0
      %1424 = vmatmul.mubr.bf16.gmra.mrb[0].mxu0 %v1100
      %v1425 = vpop.f32.mrb[0].mxu0
      %v1426 = vadd.f32 %v1313, %v1425
      %v1427 = vpop.f32.mrb[0].mxu0
      %v1428 = vadd.f32 %v1315, %v1427
      %v1429 = vpop.f32.mrb[0].mxu0
      %v1430 = vadd.f32 %v1317, %v1429
      %v1431 = vpop.f32.mrb[0].mxu0
      %v1432 = vadd.f32 %v1319, %v1431
      %1433 = vmatprep.mubr.bf16.mxu0 0
      %1434 = vmatmul.mubr.bf16.gmra.mrb[0].mxu0 %v1103
      %v1435 = vpop.f32.mrb[0].mxu0
      %v1436 = vadd.f32 %v1323, %v1435
      %v1437 = vpop.f32.mrb[0].mxu0
      %v1438 = vadd.f32 %v1325, %v1437
      %v1439 = vpop.f32.mrb[0].mxu0
      %v1440 = vadd.f32 %v1327, %v1439
      %v1441 = vpop.f32.mrb[0].mxu0
      %v1442 = vadd.f32 %v1329, %v1441
      %1443 = vdwg.mxu0
      %vm1444 = vcmp.ge.f32.partialorder %v1366, 0.0
      %vm1445 = vcmp.ge.f32.partialorder %v1368, 0.0
      %vm1446 = vcmp.ge.f32.partialorder %v1370, 0.0
      %vm1447 = vcmp.ge.f32.partialorder %v1372, 0.0
      %vm1448 = vcmp.ge.f32.partialorder %v1376, 0.0
      %vm1449 = vcmp.ge.f32.partialorder %v1378, 0.0
      %vm1450 = vcmp.ge.f32.partialorder %v1380, 0.0
      %vm1451 = vcmp.ge.f32.partialorder %v1382, 0.0
      %vm1452 = vcmp.ge.f32.partialorder %v1386, 0.0
      %vm1453 = vcmp.ge.f32.partialorder %v1388, 0.0
      %vm1454 = vcmp.ge.f32.partialorder %v1390, 0.0
      %vm1455 = vcmp.ge.f32.partialorder %v1392, 0.0
      %vm1456 = vcmp.ge.f32.partialorder %v1396, 0.0
      %vm1457 = vcmp.ge.f32.partialorder %v1398, 0.0
      %vm1458 = vcmp.ge.f32.partialorder %v1400, 0.0
      %vm1459 = vcmp.ge.f32.partialorder %v1402, 0.0
      %vm1460 = vcmp.ge.f32.partialorder %v1406, 0.0
      %vm1461 = vcmp.ge.f32.partialorder %v1408, 0.0
      %vm1462 = vcmp.ge.f32.partialorder %v1410, 0.0
      %vm1463 = vcmp.ge.f32.partialorder %v1412, 0.0
      %vm1464 = vcmp.ge.f32.partialorder %v1416, 0.0
      %vm1465 = vcmp.ge.f32.partialorder %v1418, 0.0
      %vm1466 = vcmp.ge.f32.partialorder %v1420, 0.0
      %vm1467 = vcmp.ge.f32.partialorder %v1422, 0.0
      %vm1468 = vcmp.ge.f32.partialorder %v1426, 0.0
      %vm1469 = vcmp.ge.f32.partialorder %v1428, 0.0
      %vm1470 = vcmp.ge.f32.partialorder %v1430, 0.0
      %vm1471 = vcmp.ge.f32.partialorder %v1432, 0.0
      %vm1472 = vcmp.ge.f32.partialorder %v1436, 0.0
      %vm1473 = vcmp.ge.f32.partialorder %v1438, 0.0
      %vm1474 = vcmp.ge.f32.partialorder %v1440, 0.0
      %vm1475 = vcmp.ge.f32.partialorder %v1442, 0.0
      %v1476 = vmul.f32 %v1366, 0.01
      %v1477 = vmul.f32 %v1368, 0.01
      %v1478 = vmul.f32 %v1370, 0.01
      %v1479 = vmul.f32 %v1372, 0.01
      %v1480 = vmul.f32 %v1376, 0.01
      %v1481 = vmul.f32 %v1378, 0.01
      %v1482 = vmul.f32 %v1380, 0.01
      %v1483 = vmul.f32 %v1382, 0.01
      %v1484 = vmul.f32 %v1386, 0.01
      %v1485 = vmul.f32 %v1388, 0.01
      %v1486 = vmul.f32 %v1390, 0.01
      %v1487 = vmul.f32 %v1392, 0.01
      %v1488 = vmul.f32 %v1396, 0.01
      %v1489 = vmul.f32 %v1398, 0.01
      %v1490 = vmul.f32 %v1400, 0.01
      %v1491 = vmul.f32 %v1402, 0.01
      %v1492 = vmul.f32 %v1406, 0.01
      %v1493 = vmul.f32 %v1408, 0.01
      %v1494 = vmul.f32 %v1410, 0.01
      %v1495 = vmul.f32 %v1412, 0.01
      %v1496 = vmul.f32 %v1416, 0.01
      %v1497 = vmul.f32 %v1418, 0.01
      %v1498 = vmul.f32 %v1420, 0.01
      %v1499 = vmul.f32 %v1422, 0.01
      %v1500 = vmul.f32 %v1426, 0.01
      %v1501 = vmul.f32 %v1428, 0.01
      %v1502 = vmul.f32 %v1430, 0.01
      %v1503 = vmul.f32 %v1432, 0.01
      %v1504 = vmul.f32 %v1436, 0.01
      %v1505 = vmul.f32 %v1438, 0.01
      %v1506 = vmul.f32 %v1440, 0.01
      %v1507 = vmul.f32 %v1442, 0.01
      %v1508 = vsel %vm1444, %v1366, %v1476
      %v1509 = vsel %vm1445, %v1368, %v1477
      %v1510 = vsel %vm1446, %v1370, %v1478
      %v1511 = vsel %vm1447, %v1372, %v1479
      %v1512 = vsel %vm1448, %v1376, %v1480
      %v1513 = vsel %vm1449, %v1378, %v1481
      %v1514 = vsel %vm1450, %v1380, %v1482
      %v1515 = vsel %vm1451, %v1382, %v1483
      %v1516 = vsel %vm1452, %v1386, %v1484
      %v1517 = vsel %vm1453, %v1388, %v1485
      %v1518 = vsel %vm1454, %v1390, %v1486
      %v1519 = vsel %vm1455, %v1392, %v1487
      %v1520 = vsel %vm1456, %v1396, %v1488
      %v1521 = vsel %vm1457, %v1398, %v1489
      %v1522 = vsel %vm1458, %v1400, %v1490
      %v1523 = vsel %vm1459, %v1402, %v1491
      %v1524 = vsel %vm1460, %v1406, %v1492
      %v1525 = vsel %vm1461, %v1408, %v1493
      %v1526 = vsel %vm1462, %v1410, %v1494
      %v1527 = vsel %vm1463, %v1412, %v1495
      %v1528 = vsel %vm1464, %v1416, %v1496
      %v1529 = vsel %vm1465, %v1418, %v1497
      %v1530 = vsel %vm1466, %v1420, %v1498
      %v1531 = vsel %vm1467, %v1422, %v1499
      %v1532 = vsel %vm1468, %v1426, %v1500
      %v1533 = vsel %vm1469, %v1428, %v1501
      %v1534 = vsel %vm1470, %v1430, %v1502
      %v1535 = vsel %vm1471, %v1432, %v1503
      %v1536 = vsel %vm1472, %v1436, %v1504
      %v1537 = vsel %vm1473, %v1438, %v1505
      %v1538 = vsel %vm1474, %v1440, %v1506
      %v1539 = vsel %vm1475, %v1442, %v1507
      %v1540 = vld [vmem:[#allocation2] sm:$0xff]
      %v1541 = vld [vmem:[#allocation2 + $0x8] sm:$0xff]
      %v1542 = vld [vmem:[#allocation2 + $0x10] sm:$0xff]
      %v1543 = vld [vmem:[#allocation2 + $0x18] sm:$0xff]
      %v1544 = vld [vmem:[#allocation2 + $0x20] sm:$0xff]
      %v1545 = vld [vmem:[#allocation2 + $0x28] sm:$0xff]
      %v1546 = vld [vmem:[#allocation2 + $0x30] sm:$0xff]
      %v1547 = vld [vmem:[#allocation2 + $0x38] sm:$0xff]
      %v1548 = vld [vmem:[#allocation2 + $0x40] sm:$0xff]
      %v1549 = vld [vmem:[#allocation2 + $0x48] sm:$0xff]
      %v1550 = vld [vmem:[#allocation2 + $0x50] sm:$0xff]
      %v1551 = vld [vmem:[#allocation2 + $0x58] sm:$0xff]
      %v1552 = vld [vmem:[#allocation2 + $0x60] sm:$0xff]
      %v1553 = vld [vmem:[#allocation2 + $0x68] sm:$0xff]
      %v1554 = vld [vmem:[#allocation2 + $0x70] sm:$0xff]
      %v1555 = vld [vmem:[#allocation2 + $0x78] sm:$0xff]
      %vm1556 = vcmask 793600
      %v1557 = vsel %vm1556, %v1509, 0.0
      %v1558 = vadd.f32 %v1508, %v1557
      %1559 = vadd.xlane.f32.xlu0 %v1558
      %v1560 = vpop.xlane.xlu0 %1559
      %v1561 = vsel %vm1556, %v1511, 0.0
      %v1562 = vadd.f32 %v1510, %v1561
      %1563 = vadd.xlane.f32.xlu0 %v1562
      %v1564 = vpop.xlane.xlu0 %1563
      %v1565 = vsel %vm1556, %v1513, 0.0
      %v1566 = vadd.f32 %v1512, %v1565
      %1567 = vadd.xlane.f32.xlu0 %v1566
      %v1568 = vpop.xlane.xlu0 %1567
      %v1569 = vsel %vm1556, %v1515, 0.0
      %v1570 = vadd.f32 %v1514, %v1569
      %1571 = vadd.xlane.f32.xlu0 %v1570
      %v1572 = vpop.xlane.xlu0 %1571
      %v1573 = vsel %vm1556, %v1517, 0.0
      %v1574 = vadd.f32 %v1516, %v1573
      %1575 = vadd.xlane.f32.xlu0 %v1574
      %v1576 = vpop.xlane.xlu0 %1575
      %v1577 = vsel %vm1556, %v1519, 0.0
      %v1578 = vadd.f32 %v1518, %v1577
      %1579 = vadd.xlane.f32.xlu0 %v1578
      %v1580 = vpop.xlane.xlu0 %1579
      %v1581 = vsel %vm1556, %v1521, 0.0
      %v1582 = vadd.f32 %v1520, %v1581
      %1583 = vadd.xlane.f32.xlu0 %v1582
      %v1584 = vpop.xlane.xlu0 %1583
      %v1585 = vsel %vm1556, %v1523, 0.0
      %v1586 = vadd.f32 %v1522, %v1585
      %1587 = vadd.xlane.f32.xlu0 %v1586
      %v1588 = vpop.xlane.xlu0 %1587
      %v1589 = vsel %vm1556, %v1525, 0.0
      %v1590 = vadd.f32 %v1524, %v1589
      %1591 = vadd.xlane.f32.xlu0 %v1590
      %v1592 = vpop.xlane.xlu0 %1591
      %v1593 = vsel %vm1556, %v1527, 0.0
      %v1594 = vadd.f32 %v1526, %v1593
      %1595 = vadd.xlane.f32.xlu0 %v1594
      %v1596 = vpop.xlane.xlu0 %1595
      %v1597 = vsel %vm1556, %v1529, 0.0
      %v1598 = vadd.f32 %v1528, %v1597
      %1599 = vadd.xlane.f32.xlu0 %v1598
      %v1600 = vpop.xlane.xlu0 %1599
      %v1601 = vsel %vm1556, %v1531, 0.0
      %v1602 = vadd.f32 %v1530, %v1601
      %1603 = vadd.xlane.f32.xlu0 %v1602
      %v1604 = vpop.xlane.xlu0 %1603
      %v1605 = vsel %vm1556, %v1533, 0.0
      %v1606 = vadd.f32 %v1532, %v1605
      %1607 = vadd.xlane.f32.xlu0 %v1606
      %v1608 = vpop.xlane.xlu0 %1607
      %v1609 = vsel %vm1556, %v1535, 0.0
      %v1610 = vadd.f32 %v1534, %v1609
      %1611 = vadd.xlane.f32.xlu0 %v1610
      %v1612 = vpop.xlane.xlu0 %1611
      %v1613 = vsel %vm1556, %v1537, 0.0
      %v1614 = vadd.f32 %v1536, %v1613
      %1615 = vadd.xlane.f32.xlu0 %v1614
      %v1616 = vpop.xlane.xlu0 %1615
      %v1617 = vsel %vm1556, %v1539, 0.0
      %v1618 = vadd.f32 %v1538, %v1617
      %1619 = vadd.xlane.f32.xlu0 %v1618
      %v1620 = vpop.xlane.xlu0 %1619
      %v1621 = vadd.f32 %v1540, %v1560
      %v1622 = vadd.f32 %v1541, %v1564
      %v1623 = vadd.f32 %v1542, %v1568
      %v1624 = vadd.f32 %v1543, %v1572
      %v1625 = vadd.f32 %v1544, %v1576
      %v1626 = vadd.f32 %v1545, %v1580
      %v1627 = vadd.f32 %v1546, %v1584
      %v1628 = vadd.f32 %v1547, %v1588
      %v1629 = vadd.f32 %v1548, %v1592
      %v1630 = vadd.f32 %v1549, %v1596
      %v1631 = vadd.f32 %v1550, %v1600
      %v1632 = vadd.f32 %v1551, %v1604
      %v1633 = vadd.f32 %v1552, %v1608
      %v1634 = vadd.f32 %v1553, %v1612
      %v1635 = vadd.f32 %v1554, %v1616
      %v1636 = vadd.f32 %v1555, %v1620
      %vm1637 = vcmask 7168
      %1638 = vst.msk [vmem:[#allocation2] sm:$0xff] %vm1637, %v1621
      %1639 = vst.msk [vmem:[#allocation2 + $0x8] sm:$0xff] %vm1637, %v1622
      %1640 = vst.msk [vmem:[#allocation2 + $0x10] sm:$0xff] %vm1637, %v1623
      %1641 = vst.msk [vmem:[#allocation2 + $0x18] sm:$0xff] %vm1637, %v1624
      %1642 = vst.msk [vmem:[#allocation2 + $0x20] sm:$0xff] %vm1637, %v1625
      %1643 = vst.msk [vmem:[#allocation2 + $0x28] sm:$0xff] %vm1637, %v1626
      %1644 = vst.msk [vmem:[#allocation2 + $0x30] sm:$0xff] %vm1637, %v1627
      %1645 = vst.msk [vmem:[#allocation2 + $0x38] sm:$0xff] %vm1637, %v1628
      %1646 = vst.msk [vmem:[#allocation2 + $0x40] sm:$0xff] %vm1637, %v1629
      %1647 = vst.msk [vmem:[#allocation2 + $0x48] sm:$0xff] %vm1637, %v1630
      %1648 = vst.msk [vmem:[#allocation2 + $0x50] sm:$0xff] %vm1637, %v1631
      %1649 = vst.msk [vmem:[#allocation2 + $0x58] sm:$0xff] %vm1637, %v1632
      %1650 = vst.msk [vmem:[#allocation2 + $0x60] sm:$0xff] %vm1637, %v1633
      %1651 = vst.msk [vmem:[#allocation2 + $0x68] sm:$0xff] %vm1637, %v1634
      %1652 = vst.msk [vmem:[#allocation2 + $0x70] sm:$0xff] %vm1637, %v1635
      %1653 = vst.msk [vmem:[#allocation2 + $0x78] sm:$0xff] %vm1637, %v1636
      %v1654 = vld [vmem:[#allocation3] sm:$0xff]
      %v1655 = vld [vmem:[#allocation3 + $0x8] sm:$0xff]
      %v1656 = vld [vmem:[#allocation3 + $0x10] sm:$0xff]
      %v1657 = vld [vmem:[#allocation3 + $0x18] sm:$0xff]
      %v1658 = vld [vmem:[#allocation3 + $0x20] sm:$0xff]
      %v1659 = vld [vmem:[#allocation3 + $0x28] sm:$0xff]
      %v1660 = vld [vmem:[#allocation3 + $0x30] sm:$0xff]
      %v1661 = vld [vmem:[#allocation3 + $0x38] sm:$0xff]
      %v1662 = vld [vmem:[#allocation3 + $0x40] sm:$0xff]
      %v1663 = vld [vmem:[#allocation3 + $0x48] sm:$0xff]
      %v1664 = vld [vmem:[#allocation3 + $0x50] sm:$0xff]
      %v1665 = vld [vmem:[#allocation3 + $0x58] sm:$0xff]
      %v1666 = vld [vmem:[#allocation3 + $0x60] sm:$0xff]
      %v1667 = vld [vmem:[#allocation3 + $0x68] sm:$0xff]
      %v1668 = vld [vmem:[#allocation3 + $0x70] sm:$0xff]
      %v1669 = vld [vmem:[#allocation3 + $0x78] sm:$0xff]
      %v1670 = vmul.f32 %v1508, %v1508
      %v1671 = vmul.f32 %v1509, %v1509
      %v1672 = vmul.f32 %v1510, %v1510
      %v1673 = vmul.f32 %v1511, %v1511
      %v1674 = vmul.f32 %v1512, %v1512
      %v1675 = vmul.f32 %v1513, %v1513
      %v1676 = vmul.f32 %v1514, %v1514
      %v1677 = vmul.f32 %v1515, %v1515
      %v1678 = vmul.f32 %v1516, %v1516
      %v1679 = vmul.f32 %v1517, %v1517
      %v1680 = vmul.f32 %v1518, %v1518
      %v1681 = vmul.f32 %v1519, %v1519
      %v1682 = vmul.f32 %v1520, %v1520
      %v1683 = vmul.f32 %v1521, %v1521
      %v1684 = vmul.f32 %v1522, %v1522
      %v1685 = vmul.f32 %v1523, %v1523
      %v1686 = vmul.f32 %v1524, %v1524
      %v1687 = vmul.f32 %v1525, %v1525
      %v1688 = vmul.f32 %v1526, %v1526
      %v1689 = vmul.f32 %v1527, %v1527
      %v1690 = vmul.f32 %v1528, %v1528
      %v1691 = vmul.f32 %v1529, %v1529
      %v1692 = vmul.f32 %v1530, %v1530
      %v1693 = vmul.f32 %v1531, %v1531
      %v1694 = vmul.f32 %v1532, %v1532
      %v1695 = vmul.f32 %v1533, %v1533
      %v1696 = vmul.f32 %v1534, %v1534
      %v1697 = vmul.f32 %v1535, %v1535
      %v1698 = vmul.f32 %v1536, %v1536
      %v1699 = vmul.f32 %v1537, %v1537
      %v1700 = vmul.f32 %v1538, %v1538
      %v1701 = vmul.f32 %v1539, %v1539
      %v1702 = vsel %vm1556, %v1671, 0.0
      %v1703 = vadd.f32 %v1670, %v1702
      %1704 = vadd.xlane.f32.xlu0 %v1703
      %v1705 = vpop.xlane.xlu0 %1704
      %v1706 = vsel %vm1556, %v1673, 0.0
      %v1707 = vadd.f32 %v1672, %v1706
      %1708 = vadd.xlane.f32.xlu0 %v1707
      %v1709 = vpop.xlane.xlu0 %1708
      %v1710 = vsel %vm1556, %v1675, 0.0
      %v1711 = vadd.f32 %v1674, %v1710
      %1712 = vadd.xlane.f32.xlu0 %v1711
      %v1713 = vpop.xlane.xlu0 %1712
      %v1714 = vsel %vm1556, %v1677, 0.0
      %v1715 = vadd.f32 %v1676, %v1714
      %1716 = vadd.xlane.f32.xlu0 %v1715
      %v1717 = vpop.xlane.xlu0 %1716
      %v1718 = vsel %vm1556, %v1679, 0.0
      %v1719 = vadd.f32 %v1678, %v1718
      %1720 = vadd.xlane.f32.xlu0 %v1719
      %v1721 = vpop.xlane.xlu0 %1720
      %v1722 = vsel %vm1556, %v1681, 0.0
      %v1723 = vadd.f32 %v1680, %v1722
      %1724 = vadd.xlane.f32.xlu0 %v1723
      %v1725 = vpop.xlane.xlu0 %1724
      %v1726 = vsel %vm1556, %v1683, 0.0
      %v1727 = vadd.f32 %v1682, %v1726
      %1728 = vadd.xlane.f32.xlu0 %v1727
      %v1729 = vpop.xlane.xlu0 %1728
      %v1730 = vsel %vm1556, %v1685, 0.0
      %v1731 = vadd.f32 %v1684, %v1730
      %1732 = vadd.xlane.f32.xlu0 %v1731
      %v1733 = vpop.xlane.xlu0 %1732
      %v1734 = vsel %vm1556, %v1687, 0.0
      %v1735 = vadd.f32 %v1686, %v1734
      %1736 = vadd.xlane.f32.xlu0 %v1735
      %v1737 = vpop.xlane.xlu0 %1736
      %v1738 = vsel %vm1556, %v1689, 0.0
      %v1739 = vadd.f32 %v1688, %v1738
      %1740 = vadd.xlane.f32.xlu0 %v1739
      %v1741 = vpop.xlane.xlu0 %1740
      %v1742 = vsel %vm1556, %v1691, 0.0
      %v1743 = vadd.f32 %v1690, %v1742
      %1744 = vadd.xlane.f32.xlu0 %v1743
      %v1745 = vpop.xlane.xlu0 %1744
      %v1746 = vsel %vm1556, %v1693, 0.0
      %v1747 = vadd.f32 %v1692, %v1746
      %1748 = vadd.xlane.f32.xlu0 %v1747
      %v1749 = vpop.xlane.xlu0 %1748
      %v1750 = vsel %vm1556, %v1695, 0.0
      %v1751 = vadd.f32 %v1694, %v1750
      %1752 = vadd.xlane.f32.xlu0 %v1751
      %v1753 = vpop.xlane.xlu0 %1752
      %v1754 = vsel %vm1556, %v1697, 0.0
      %v1755 = vadd.f32 %v1696, %v1754
      %1756 = vadd.xlane.f32.xlu0 %v1755
      %v1757 = vpop.xlane.xlu0 %1756
      %v1758 = vsel %vm1556, %v1699, 0.0
      %v1759 = vadd.f32 %v1698, %v1758
      %1760 = vadd.xlane.f32.xlu0 %v1759
      %v1761 = vpop.xlane.xlu0 %1760
      %v1762 = vsel %vm1556, %v1701, 0.0
      %v1763 = vadd.f32 %v1700, %v1762
      %1764 = vadd.xlane.f32.xlu0 %v1763
      %v1765 = vpop.xlane.xlu0 %1764
      %v1766 = vadd.f32 %v1654, %v1705
      %v1767 = vadd.f32 %v1655, %v1709
      %v1768 = vadd.f32 %v1656, %v1713
      %v1769 = vadd.f32 %v1657, %v1717
      %v1770 = vadd.f32 %v1658, %v1721
      %v1771 = vadd.f32 %v1659, %v1725
      %v1772 = vadd.f32 %v1660, %v1729
      %v1773 = vadd.f32 %v1661, %v1733
      %v1774 = vadd.f32 %v1662, %v1737
      %v1775 = vadd.f32 %v1663, %v1741
      %v1776 = vadd.f32 %v1664, %v1745
      %v1777 = vadd.f32 %v1665, %v1749
      %v1778 = vadd.f32 %v1666, %v1753
      %v1779 = vadd.f32 %v1667, %v1757
      %v1780 = vadd.f32 %v1668, %v1761
      %v1781 = vadd.f32 %v1669, %v1765
      %1782 = vst.msk [vmem:[#allocation3] sm:$0xff] %vm1637, %v1766
      %1783 = vst.msk [vmem:[#allocation3 + $0x8] sm:$0xff] %vm1637, %v1767
      %1784 = vst.msk [vmem:[#allocation3 + $0x10] sm:$0xff] %vm1637, %v1768
      %1785 = vst.msk [vmem:[#allocation3 + $0x18] sm:$0xff] %vm1637, %v1769
      %1786 = vst.msk [vmem:[#allocation3 + $0x20] sm:$0xff] %vm1637, %v1770
      %1787 = vst.msk [vmem:[#allocation3 + $0x28] sm:$0xff] %vm1637, %v1771
      %1788 = vst.msk [vmem:[#allocation3 + $0x30] sm:$0xff] %vm1637, %v1772
      %1789 = vst.msk [vmem:[#allocation3 + $0x38] sm:$0xff] %vm1637, %v1773
      %1790 = vst.msk [vmem:[#allocation3 + $0x40] sm:$0xff] %vm1637, %v1774
      %1791 = vst.msk [vmem:[#allocation3 + $0x48] sm:$0xff] %vm1637, %v1775
      %1792 = vst.msk [vmem:[#allocation3 + $0x50] sm:$0xff] %vm1637, %v1776
      %1793 = vst.msk [vmem:[#allocation3 + $0x58] sm:$0xff] %vm1637, %v1777
      %1794 = vst.msk [vmem:[#allocation3 + $0x60] sm:$0xff] %vm1637, %v1778
      %1795 = vst.msk [vmem:[#allocation3 + $0x68] sm:$0xff] %vm1637, %v1779
      %1796 = vst.msk [vmem:[#allocation3 + $0x70] sm:$0xff] %vm1637, %v1780
      %1797 = vst.msk [vmem:[#allocation3 + $0x78] sm:$0xff] %vm1637, %v1781
      %v1798 = vld [vmem:[%s3] sm:$0xff]
      %v1799 = vld [vmem:[%s3 + $0x8] sm:$0xff]
      %v1800 = vld [vmem:[%s3 + $0x10] sm:$0xff]
      %v1801 = vld [vmem:[%s3 + $0x18] sm:$0xff]
      %v1802 = vld [vmem:[%s3 + $0x20] sm:$0xff]
      %v1803 = vld [vmem:[%s3 + $0x28] sm:$0xff]
      %v1804 = vld [vmem:[%s3 + $0x30] sm:$0xff]
      %v1805 = vld [vmem:[%s3 + $0x38] sm:$0xff]
      %v1806 = vld [vmem:[%s3 + $0x40] sm:$0xff]
      %v1807 = vld [vmem:[%s3 + $0x48] sm:$0xff]
      %v1808 = vld [vmem:[%s3 + $0x50] sm:$0xff]
      %v1809 = vld [vmem:[%s3 + $0x58] sm:$0xff]
      %v1810 = vld [vmem:[%s3 + $0x60] sm:$0xff]
      %v1811 = vld [vmem:[%s3 + $0x68] sm:$0xff]
      %v1812 = vld [vmem:[%s3 + $0x70] sm:$0xff]
      %v1813 = vld [vmem:[%s3 + $0x78] sm:$0xff]
      %v1814 = vld [vmem:[%s3 + $0x80] sm:$0xff]
      %v1815 = vld [vmem:[%s3 + $0x88] sm:$0xff]
      %v1816 = vld [vmem:[%s3 + $0x90] sm:$0xff]
      %v1817 = vld [vmem:[%s3 + $0x98] sm:$0xff]
      %v1818 = vld [vmem:[%s3 + $0xa0] sm:$0xff]
      %v1819 = vld [vmem:[%s3 + $0xa8] sm:$0xff]
      %v1820 = vld [vmem:[%s3 + $0xb0] sm:$0xff]
      %v1821 = vld [vmem:[%s3 + $0xb8] sm:$0xff]
      %v1822 = vld [vmem:[%s3 + $0xc0] sm:$0xff]
      %v1823 = vld [vmem:[%s3 + $0xc8] sm:$0xff]
      %v1824 = vld [vmem:[%s3 + $0xd0] sm:$0xff]
      %v1825 = vld [vmem:[%s3 + $0xd8] sm:$0xff]
      %v1826 = vld [vmem:[%s3 + $0xe0] sm:$0xff]
      %v1827 = vld [vmem:[%s3 + $0xe8] sm:$0xff]
      %v1828 = vld [vmem:[%s3 + $0xf0] sm:$0xff]
      %v1829 = vld [vmem:[%s3 + $0xf8] sm:$0xff]
      %v1830 = vmul.f32 %v1508, %v1798
      %v1831 = vmul.f32 %v1509, %v1799
      %v1832 = vmul.f32 %v1510, %v1800
      %v1833 = vmul.f32 %v1511, %v1801
      %v1834 = vmul.f32 %v1512, %v1802
      %v1835 = vmul.f32 %v1513, %v1803
      %v1836 = vmul.f32 %v1514, %v1804
      %v1837 = vmul.f32 %v1515, %v1805
      %v1838 = vmul.f32 %v1516, %v1806
      %v1839 = vmul.f32 %v1517, %v1807
      %v1840 = vmul.f32 %v1518, %v1808
      %v1841 = vmul.f32 %v1519, %v1809
      %v1842 = vmul.f32 %v1520, %v1810
      %v1843 = vmul.f32 %v1521, %v1811
      %v1844 = vmul.f32 %v1522, %v1812
      %v1845 = vmul.f32 %v1523, %v1813
      %v1846 = vmul.f32 %v1524, %v1814
      %v1847 = vmul.f32 %v1525, %v1815
      %v1848 = vmul.f32 %v1526, %v1816
      %v1849 = vmul.f32 %v1527, %v1817
      %v1850 = vmul.f32 %v1528, %v1818
      %v1851 = vmul.f32 %v1529, %v1819
      %v1852 = vmul.f32 %v1530, %v1820
      %v1853 = vmul.f32 %v1531, %v1821
      %v1854 = vmul.f32 %v1532, %v1822
      %v1855 = vmul.f32 %v1533, %v1823
      %v1856 = vmul.f32 %v1534, %v1824
      %v1857 = vmul.f32 %v1535, %v1825
      %v1858 = vmul.f32 %v1536, %v1826
      %v1859 = vmul.f32 %v1537, %v1827
      %v1860 = vmul.f32 %v1538, %v1828
      %v1861 = vmul.f32 %v1539, %v1829
      %v1862 = vsel %vm1556, %v1831, 0.0
      %v1863 = vadd.f32 %v1830, %v1862
      %1864 = vadd.xlane.f32.xlu0 %v1863
      %v1865 = vpop.xlane.xlu0 %1864
      %v1866 = vsel %vm1556, %v1833, 0.0
      %v1867 = vadd.f32 %v1832, %v1866
      %1868 = vadd.xlane.f32.xlu0 %v1867
      %v1869 = vpop.xlane.xlu0 %1868
      %v1870 = vsel %vm1556, %v1835, 0.0
      %v1871 = vadd.f32 %v1834, %v1870
      %1872 = vadd.xlane.f32.xlu0 %v1871
      %v1873 = vpop.xlane.xlu0 %1872
      %v1874 = vsel %vm1556, %v1837, 0.0
      %v1875 = vadd.f32 %v1836, %v1874
      %1876 = vadd.xlane.f32.xlu0 %v1875
      %v1877 = vpop.xlane.xlu0 %1876
      %v1878 = vsel %vm1556, %v1839, 0.0
      %v1879 = vadd.f32 %v1838, %v1878
      %1880 = vadd.xlane.f32.xlu0 %v1879
      %v1881 = vpop.xlane.xlu0 %1880
      %v1882 = vsel %vm1556, %v1841, 0.0
      %v1883 = vadd.f32 %v1840, %v1882
      %1884 = vadd.xlane.f32.xlu0 %v1883
      %v1885 = vpop.xlane.xlu0 %1884
      %v1886 = vsel %vm1556, %v1843, 0.0
      %v1887 = vadd.f32 %v1842, %v1886
      %1888 = vadd.xlane.f32.xlu0 %v1887
      %v1889 = vpop.xlane.xlu0 %1888
      %v1890 = vsel %vm1556, %v1845, 0.0
      %v1891 = vadd.f32 %v1844, %v1890
      %1892 = vadd.xlane.f32.xlu0 %v1891
      %v1893 = vpop.xlane.xlu0 %1892
      %v1894 = vsel %vm1556, %v1847, 0.0
      %v1895 = vadd.f32 %v1846, %v1894
      %1896 = vadd.xlane.f32.xlu0 %v1895
      %v1897 = vpop.xlane.xlu0 %1896
      %v1898 = vsel %vm1556, %v1849, 0.0
      %v1899 = vadd.f32 %v1848, %v1898
      %1900 = vadd.xlane.f32.xlu0 %v1899
      %v1901 = vpop.xlane.xlu0 %1900
      %v1902 = vsel %vm1556, %v1851, 0.0
      %v1903 = vadd.f32 %v1850, %v1902
      %1904 = vadd.xlane.f32.xlu0 %v1903
      %v1905 = vpop.xlane.xlu0 %1904
      %v1906 = vsel %vm1556, %v1853, 0.0
      %v1907 = vadd.f32 %v1852, %v1906
      %1908 = vadd.xlane.f32.xlu0 %v1907
      %v1909 = vpop.xlane.xlu0 %1908
      %v1910 = vsel %vm1556, %v1855, 0.0
      %v1911 = vadd.f32 %v1854, %v1910
      %1912 = vadd.xlane.f32.xlu0 %v1911
      %v1913 = vpop.xlane.xlu0 %1912
      %v1914 = vsel %vm1556, %v1857, 0.0
      %v1915 = vadd.f32 %v1856, %v1914
      %1916 = vadd.xlane.f32.xlu0 %v1915
      %v1917 = vpop.xlane.xlu0 %1916
      %v1918 = vsel %vm1556, %v1859, 0.0
      %v1919 = vadd.f32 %v1858, %v1918
      %1920 = vadd.xlane.f32.xlu0 %v1919
      %v1921 = vpop.xlane.xlu0 %1920
      %v1922 = vsel %vm1556, %v1861, 0.0
      %v1923 = vadd.f32 %v1860, %v1922
      %1924 = vadd.xlane.f32.xlu0 %v1923
      %v1925 = vpop.xlane.xlu0 %1924
      %s1926 = smul.u32 %s20, 128
      %s1927 = scalar_lea.vmem [#allocation4], %s1926
      %1928 = vst.msk [vmem:[%s1927] sm:$0xff] %vm1637, %v1865
      %1929 = vst.msk [vmem:[%s1927 + $0x8] sm:$0xff] %vm1637, %v1869
      %1930 = vst.msk [vmem:[%s1927 + $0x10] sm:$0xff] %vm1637, %v1873
      %1931 = vst.msk [vmem:[%s1927 + $0x18] sm:$0xff] %vm1637, %v1877
      %1932 = vst.msk [vmem:[%s1927 + $0x20] sm:$0xff] %vm1637, %v1881
      %1933 = vst.msk [vmem:[%s1927 + $0x28] sm:$0xff] %vm1637, %v1885
      %1934 = vst.msk [vmem:[%s1927 + $0x30] sm:$0xff] %vm1637, %v1889
      %1935 = vst.msk [vmem:[%s1927 + $0x38] sm:$0xff] %vm1637, %v1893
      %1936 = vst.msk [vmem:[%s1927 + $0x40] sm:$0xff] %vm1637, %v1897
      %1937 = vst.msk [vmem:[%s1927 + $0x48] sm:$0xff] %vm1637, %v1901
      %1938 = vst.msk [vmem:[%s1927 + $0x50] sm:$0xff] %vm1637, %v1905
      %1939 = vst.msk [vmem:[%s1927 + $0x58] sm:$0xff] %vm1637, %v1909
      %1940 = vst.msk [vmem:[%s1927 + $0x60] sm:$0xff] %vm1637, %v1913
      %1941 = vst.msk [vmem:[%s1927 + $0x68] sm:$0xff] %vm1637, %v1917
      %1942 = vst.msk [vmem:[%s1927 + $0x70] sm:$0xff] %vm1637, %v1921
      %1943 = vst.msk [vmem:[%s1927 + $0x78] sm:$0xff] %vm1637, %v1925
      %p1944 = scmp.eq.s32.totalorder %s20, 1
      // Predicated region
      $region53: #{discriminator_forward.3} parent=47 // pred_check
        %p1945 = pneg %p1944
      $region54: #{discriminator_forward.3} parent=47 // pred_check_branch
        %1947 = sbr.rel (%p1945) target = $region56
      $region55: #{discriminator_forward.3} parent=47 // pred_region
        %v1948 = vld [vmem:[#allocation2] sm:$0xff]
        %v1949 = vld [vmem:[#allocation2 + $0x8] sm:$0xff]
        %v1950 = vld [vmem:[#allocation2 + $0x10] sm:$0xff]
        %v1951 = vld [vmem:[#allocation2 + $0x18] sm:$0xff]
        %v1952 = vld [vmem:[#allocation2 + $0x20] sm:$0xff]
        %v1953 = vld [vmem:[#allocation2 + $0x28] sm:$0xff]
        %v1954 = vld [vmem:[#allocation2 + $0x30] sm:$0xff]
        %v1955 = vld [vmem:[#allocation2 + $0x38] sm:$0xff]
        %v1956 = vld [vmem:[#allocation2 + $0x40] sm:$0xff]
        %v1957 = vld [vmem:[#allocation2 + $0x48] sm:$0xff]
        %v1958 = vld [vmem:[#allocation2 + $0x50] sm:$0xff]
        %v1959 = vld [vmem:[#allocation2 + $0x58] sm:$0xff]
        %v1960 = vld [vmem:[#allocation2 + $0x60] sm:$0xff]
        %v1961 = vld [vmem:[#allocation2 + $0x68] sm:$0xff]
        %v1962 = vld [vmem:[#allocation2 + $0x70] sm:$0xff]
        %v1963 = vld [vmem:[#allocation2 + $0x78] sm:$0xff]
        %v1964 = vmul.f32 %v1948, 0.0022222223
        %v1965 = vmul.f32 %v1949, 0.0022222223
        %v1966 = vmul.f32 %v1950, 0.0022222223
        %v1967 = vmul.f32 %v1951, 0.0022222223
        %v1968 = vmul.f32 %v1952, 0.0022222223
        %v1969 = vmul.f32 %v1953, 0.0022222223
        %v1970 = vmul.f32 %v1954, 0.0022222223
        %v1971 = vmul.f32 %v1955, 0.0022222223
        %v1972 = vmul.f32 %v1956, 0.0022222223
        %v1973 = vmul.f32 %v1957, 0.0022222223
        %v1974 = vmul.f32 %v1958, 0.0022222223
        %v1975 = vmul.f32 %v1959, 0.0022222223
        %v1976 = vmul.f32 %v1960, 0.0022222223
        %v1977 = vmul.f32 %v1961, 0.0022222223
        %v1978 = vmul.f32 %v1962, 0.0022222223
        %v1979 = vmul.f32 %v1963, 0.0022222223
        %v1980 = vld [vmem:[#allocation3] sm:$0xff]
        %v1981 = vld [vmem:[#allocation3 + $0x8] sm:$0xff]
        %v1982 = vld [vmem:[#allocation3 + $0x10] sm:$0xff]
        %v1983 = vld [vmem:[#allocation3 + $0x18] sm:$0xff]
        %v1984 = vld [vmem:[#allocation3 + $0x20] sm:$0xff]
        %v1985 = vld [vmem:[#allocation3 + $0x28] sm:$0xff]
        %v1986 = vld [vmem:[#allocation3 + $0x30] sm:$0xff]
        %v1987 = vld [vmem:[#allocation3 + $0x38] sm:$0xff]
        %v1988 = vld [vmem:[#allocation3 + $0x40] sm:$0xff]
        %v1989 = vld [vmem:[#allocation3 + $0x48] sm:$0xff]
        %v1990 = vld [vmem:[#allocation3 + $0x50] sm:$0xff]
        %v1991 = vld [vmem:[#allocation3 + $0x58] sm:$0xff]
        %v1992 = vld [vmem:[#allocation3 + $0x60] sm:$0xff]
        %v1993 = vld [vmem:[#allocation3 + $0x68] sm:$0xff]
        %v1994 = vld [vmem:[#allocation3 + $0x70] sm:$0xff]
        %v1995 = vld [vmem:[#allocation3 + $0x78] sm:$0xff]
        %v1996 = vmul.f32 %v1980, 0.0022222223
        %v1997 = vmul.f32 %v1981, 0.0022222223
        %v1998 = vmul.f32 %v1982, 0.0022222223
        %v1999 = vmul.f32 %v1983, 0.0022222223
        %v2000 = vmul.f32 %v1984, 0.0022222223
        %v2001 = vmul.f32 %v1985, 0.0022222223
        %v2002 = vmul.f32 %v1986, 0.0022222223
        %v2003 = vmul.f32 %v1987, 0.0022222223
        %v2004 = vmul.f32 %v1988, 0.0022222223
        %v2005 = vmul.f32 %v1989, 0.0022222223
        %v2006 = vmul.f32 %v1990, 0.0022222223
        %v2007 = vmul.f32 %v1991, 0.0022222223
        %v2008 = vmul.f32 %v1992, 0.0022222223
        %v2009 = vmul.f32 %v1993, 0.0022222223
        %v2010 = vmul.f32 %v1994, 0.0022222223
        %v2011 = vmul.f32 %v1995, 0.0022222223
        %v2012 = vmul.f32 %v1964, %v1964
        %v2013 = vmul.f32 %v1965, %v1965
        %v2014 = vmul.f32 %v1966, %v1966
        %v2015 = vmul.f32 %v1967, %v1967
        %v2016 = vmul.f32 %v1968, %v1968
        %v2017 = vmul.f32 %v1969, %v1969
        %v2018 = vmul.f32 %v1970, %v1970
        %v2019 = vmul.f32 %v1971, %v1971
        %v2020 = vmul.f32 %v1972, %v1972
        %v2021 = vmul.f32 %v1973, %v1973
        %v2022 = vmul.f32 %v1974, %v1974
        %v2023 = vmul.f32 %v1975, %v1975
        %v2024 = vmul.f32 %v1976, %v1976
        %v2025 = vmul.f32 %v1977, %v1977
        %v2026 = vmul.f32 %v1978, %v1978
        %v2027 = vmul.f32 %v1979, %v1979
        %v2028 = vsub.f32 %v1996, %v2012
        %v2029 = vsub.f32 %v1997, %v2013
        %v2030 = vsub.f32 %v1998, %v2014
        %v2031 = vsub.f32 %v1999, %v2015
        %v2032 = vsub.f32 %v2000, %v2016
        %v2033 = vsub.f32 %v2001, %v2017
        %v2034 = vsub.f32 %v2002, %v2018
        %v2035 = vsub.f32 %v2003, %v2019
        %v2036 = vsub.f32 %v2004, %v2020
        %v2037 = vsub.f32 %v2005, %v2021
        %v2038 = vsub.f32 %v2006, %v2022
        %v2039 = vsub.f32 %v2007, %v2023
        %v2040 = vsub.f32 %v2008, %v2024
        %v2041 = vsub.f32 %v2009, %v2025
        %v2042 = vsub.f32 %v2010, %v2026
        %v2043 = vsub.f32 %v2011, %v2027
        %v2044 = vmax.f32 %v2028, 0.0
        %v2045 = vmax.f32 %v2029, 0.0
        %v2046 = vmax.f32 %v2030, 0.0
        %v2047 = vmax.f32 %v2031, 0.0
        %v2048 = vmax.f32 %v2032, 0.0
        %v2049 = vmax.f32 %v2033, 0.0
        %v2050 = vmax.f32 %v2034, 0.0
        %v2051 = vmax.f32 %v2035, 0.0
        %v2052 = vmax.f32 %v2036, 0.0
        %v2053 = vmax.f32 %v2037, 0.0
        %v2054 = vmax.f32 %v2038, 0.0
        %v2055 = vmax.f32 %v2039, 0.0
        %v2056 = vmax.f32 %v2040, 0.0
        %v2057 = vmax.f32 %v2041, 0.0
        %v2058 = vmax.f32 %v2042, 0.0
        %v2059 = vmax.f32 %v2043, 0.0
        %v2060 = vadd.f32 %v2044, 1e-05
        %v2061 = vadd.f32 %v2045, 1e-05
        %v2062 = vadd.f32 %v2046, 1e-05
        %v2063 = vadd.f32 %v2047, 1e-05
        %v2064 = vadd.f32 %v2048, 1e-05
        %v2065 = vadd.f32 %v2049, 1e-05
        %v2066 = vadd.f32 %v2050, 1e-05
        %v2067 = vadd.f32 %v2051, 1e-05
        %v2068 = vadd.f32 %v2052, 1e-05
        %v2069 = vadd.f32 %v2053, 1e-05
        %v2070 = vadd.f32 %v2054, 1e-05
        %v2071 = vadd.f32 %v2055, 1e-05
        %v2072 = vadd.f32 %v2056, 1e-05
        %v2073 = vadd.f32 %v2057, 1e-05
        %v2074 = vadd.f32 %v2058, 1e-05
        %v2075 = vadd.f32 %v2059, 1e-05
        %v2076 = vrsqrt.pop %v2060
        %v2077 = vrsqrt.pop %v2061
        %v2078 = vrsqrt.pop %v2062
        %v2079 = vrsqrt.pop %v2063
        %v2080 = vrsqrt.pop %v2064
        %v2081 = vrsqrt.pop %v2065
        %v2082 = vrsqrt.pop %v2066
        %v2083 = vrsqrt.pop %v2067
        %v2084 = vrsqrt.pop %v2068
        %v2085 = vrsqrt.pop %v2069
        %v2086 = vrsqrt.pop %v2070
        %v2087 = vrsqrt.pop %v2071
        %v2088 = vrsqrt.pop %v2072
        %v2089 = vrsqrt.pop %v2073
        %v2090 = vrsqrt.pop %v2074
        %v2091 = vrsqrt.pop %v2075
        %v2092 = vld [vmem:[%s4] sm:$0xff]
        %v2093 = vld [vmem:[%s4 + $0x8] sm:$0xff]
        %v2094 = vld [vmem:[%s4 + $0x10] sm:$0xff]
        %v2095 = vld [vmem:[%s4 + $0x18] sm:$0xff]
        %v2096 = vld [vmem:[%s4 + $0x20] sm:$0xff]
        %v2097 = vld [vmem:[%s4 + $0x28] sm:$0xff]
        %v2098 = vld [vmem:[%s4 + $0x30] sm:$0xff]
        %v2099 = vld [vmem:[%s4 + $0x38] sm:$0xff]
        %v2100 = vld [vmem:[%s4 + $0x40] sm:$0xff]
        %v2101 = vld [vmem:[%s4 + $0x48] sm:$0xff]
        %v2102 = vld [vmem:[%s4 + $0x50] sm:$0xff]
        %v2103 = vld [vmem:[%s4 + $0x58] sm:$0xff]
        %v2104 = vld [vmem:[%s4 + $0x60] sm:$0xff]
        %v2105 = vld [vmem:[%s4 + $0x68] sm:$0xff]
        %v2106 = vld [vmem:[%s4 + $0x70] sm:$0xff]
        %v2107 = vld [vmem:[%s4 + $0x78] sm:$0xff]
        %v2108 = vmul.f32 %v2092, %v2076
        %v2109 = vmul.f32 %v2093, %v2077
        %v2110 = vmul.f32 %v2094, %v2078
        %v2111 = vmul.f32 %v2095, %v2079
        %v2112 = vmul.f32 %v2096, %v2080
        %v2113 = vmul.f32 %v2097, %v2081
        %v2114 = vmul.f32 %v2098, %v2082
        %v2115 = vmul.f32 %v2099, %v2083
        %v2116 = vmul.f32 %v2100, %v2084
        %v2117 = vmul.f32 %v2101, %v2085
        %v2118 = vmul.f32 %v2102, %v2086
        %v2119 = vmul.f32 %v2103, %v2087
        %v2120 = vmul.f32 %v2104, %v2088
        %v2121 = vmul.f32 %v2105, %v2089
        %v2122 = vmul.f32 %v2106, %v2090
        %v2123 = vmul.f32 %v2107, %v2091
        %v2124 = vld [vmem:[%s5] sm:$0xff]
        %v2125 = vld [vmem:[%s5 + $0x8] sm:$0xff]
        %v2126 = vld [vmem:[%s5 + $0x10] sm:$0xff]
        %v2127 = vld [vmem:[%s5 + $0x18] sm:$0xff]
        %v2128 = vld [vmem:[%s5 + $0x20] sm:$0xff]
        %v2129 = vld [vmem:[%s5 + $0x28] sm:$0xff]
        %v2130 = vld [vmem:[%s5 + $0x30] sm:$0xff]
        %v2131 = vld [vmem:[%s5 + $0x38] sm:$0xff]
        %v2132 = vld [vmem:[%s5 + $0x40] sm:$0xff]
        %v2133 = vld [vmem:[%s5 + $0x48] sm:$0xff]
        %v2134 = vld [vmem:[%s5 + $0x50] sm:$0xff]
        %v2135 = vld [vmem:[%s5 + $0x58] sm:$0xff]
        %v2136 = vld [vmem:[%s5 + $0x60] sm:$0xff]
        %v2137 = vld [vmem:[%s5 + $0x68] sm:$0xff]
        %v2138 = vld [vmem:[%s5 + $0x70] sm:$0xff]
        %v2139 = vld [vmem:[%s5 + $0x78] sm:$0xff]
        %v2140 = vmul.f32 %v1964, %v2108
        %v2141 = vmul.f32 %v1965, %v2109
        %v2142 = vmul.f32 %v1966, %v2110
        %v2143 = vmul.f32 %v1967, %v2111
        %v2144 = vmul.f32 %v1968, %v2112
        %v2145 = vmul.f32 %v1969, %v2113
        %v2146 = vmul.f32 %v1970, %v2114
        %v2147 = vmul.f32 %v1971, %v2115
        %v2148 = vmul.f32 %v1972, %v2116
        %v2149 = vmul.f32 %v1973, %v2117
        %v2150 = vmul.f32 %v1974, %v2118
        %v2151 = vmul.f32 %v1975, %v2119
        %v2152 = vmul.f32 %v1976, %v2120
        %v2153 = vmul.f32 %v1977, %v2121
        %v2154 = vmul.f32 %v1978, %v2122
        %v2155 = vmul.f32 %v1979, %v2123
        %v2156 = vsub.f32 %v2124, %v2140
        %v2157 = vsub.f32 %v2125, %v2141
        %v2158 = vsub.f32 %v2126, %v2142
        %v2159 = vsub.f32 %v2127, %v2143
        %v2160 = vsub.f32 %v2128, %v2144
        %v2161 = vsub.f32 %v2129, %v2145
        %v2162 = vsub.f32 %v2130, %v2146
        %v2163 = vsub.f32 %v2131, %v2147
        %v2164 = vsub.f32 %v2132, %v2148
        %v2165 = vsub.f32 %v2133, %v2149
        %v2166 = vsub.f32 %v2134, %v2150
        %v2167 = vsub.f32 %v2135, %v2151
        %v2168 = vsub.f32 %v2136, %v2152
        %v2169 = vsub.f32 %v2137, %v2153
        %v2170 = vsub.f32 %v2138, %v2154
        %v2171 = vsub.f32 %v2139, %v2155
        %v2172 = vld [vmem:[%s3] sm:$0xff]
        %v2173 = vld [vmem:[%s3 + $0x8] sm:$0xff]
        %v2174 = vld [vmem:[%s3 + $0x10] sm:$0xff]
        %v2175 = vld [vmem:[%s3 + $0x18] sm:$0xff]
        %v2176 = vld [vmem:[%s3 + $0x20] sm:$0xff]
        %v2177 = vld [vmem:[%s3 + $0x28] sm:$0xff]
        %v2178 = vld [vmem:[%s3 + $0x30] sm:$0xff]
        %v2179 = vld [vmem:[%s3 + $0x38] sm:$0xff]
        %v2180 = vld [vmem:[%s3 + $0x40] sm:$0xff]
        %v2181 = vld [vmem:[%s3 + $0x48] sm:$0xff]
        %v2182 = vld [vmem:[%s3 + $0x50] sm:$0xff]
        %v2183 = vld [vmem:[%s3 + $0x58] sm:$0xff]
        %v2184 = vld [vmem:[%s3 + $0x60] sm:$0xff]
        %v2185 = vld [vmem:[%s3 + $0x68] sm:$0xff]
        %v2186 = vld [vmem:[%s3 + $0x70] sm:$0xff]
        %v2187 = vld [vmem:[%s3 + $0x78] sm:$0xff]
        %v2188 = vld [vmem:[%s3 + $0x80] sm:$0xff]
        %v2189 = vld [vmem:[%s3 + $0x88] sm:$0xff]
        %v2190 = vld [vmem:[%s3 + $0x90] sm:$0xff]
        %v2191 = vld [vmem:[%s3 + $0x98] sm:$0xff]
        %v2192 = vld [vmem:[%s3 + $0xa0] sm:$0xff]
        %v2193 = vld [vmem:[%s3 + $0xa8] sm:$0xff]
        %v2194 = vld [vmem:[%s3 + $0xb0] sm:$0xff]
        %v2195 = vld [vmem:[%s3 + $0xb8] sm:$0xff]
        %v2196 = vld [vmem:[%s3 + $0xc0] sm:$0xff]
        %v2197 = vld [vmem:[%s3 + $0xc8] sm:$0xff]
        %v2198 = vld [vmem:[%s3 + $0xd0] sm:$0xff]
        %v2199 = vld [vmem:[%s3 + $0xd8] sm:$0xff]
        %v2200 = vld [vmem:[%s3 + $0xe0] sm:$0xff]
        %v2201 = vld [vmem:[%s3 + $0xe8] sm:$0xff]
        %v2202 = vld [vmem:[%s3 + $0xf0] sm:$0xff]
        %v2203 = vld [vmem:[%s3 + $0xf8] sm:$0xff]
        %v2204 = vsel %vm1556, %v2173, 0.0
        %v2205 = vadd.f32 %v2172, %v2204
        %2206 = vadd.xlane.f32.xlu0 %v2205
        %v2207 = vpop.xlane.xlu0 %2206
        %v2208 = vsel %vm1556, %v2175, 0.0
        %v2209 = vadd.f32 %v2174, %v2208
        %2210 = vadd.xlane.f32.xlu0 %v2209
        %v2211 = vpop.xlane.xlu0 %2210
        %v2212 = vsel %vm1556, %v2177, 0.0
        %v2213 = vadd.f32 %v2176, %v2212
        %2214 = vadd.xlane.f32.xlu0 %v2213
        %v2215 = vpop.xlane.xlu0 %2214
        %v2216 = vsel %vm1556, %v2179, 0.0
        %v2217 = vadd.f32 %v2178, %v2216
        %2218 = vadd.xlane.f32.xlu0 %v2217
        %v2219 = vpop.xlane.xlu0 %2218
        %v2220 = vsel %vm1556, %v2181, 0.0
        %v2221 = vadd.f32 %v2180, %v2220
        %2222 = vadd.xlane.f32.xlu0 %v2221
        %v2223 = vpop.xlane.xlu0 %2222
        %v2224 = vsel %vm1556, %v2183, 0.0
        %v2225 = vadd.f32 %v2182, %v2224
        %2226 = vadd.xlane.f32.xlu0 %v2225
        %v2227 = vpop.xlane.xlu0 %2226
        %v2228 = vsel %vm1556, %v2185, 0.0
        %v2229 = vadd.f32 %v2184, %v2228
        %2230 = vadd.xlane.f32.xlu0 %v2229
        %v2231 = vpop.xlane.xlu0 %2230
        %v2232 = vsel %vm1556, %v2187, 0.0
        %v2233 = vadd.f32 %v2186, %v2232
        %2234 = vadd.xlane.f32.xlu0 %v2233
        %v2235 = vpop.xlane.xlu0 %2234
        %v2236 = vsel %vm1556, %v2189, 0.0
        %v2237 = vadd.f32 %v2188, %v2236
        %2238 = vadd.xlane.f32.xlu0 %v2237
        %v2239 = vpop.xlane.xlu0 %2238
        %v2240 = vsel %vm1556, %v2191, 0.0
        %v2241 = vadd.f32 %v2190, %v2240
        %2242 = vadd.xlane.f32.xlu0 %v2241
        %v2243 = vpop.xlane.xlu0 %2242
        %v2244 = vsel %vm1556, %v2193, 0.0
        %v2245 = vadd.f32 %v2192, %v2244
        %2246 = vadd.xlane.f32.xlu0 %v2245
        %v2247 = vpop.xlane.xlu0 %2246
        %v2248 = vsel %vm1556, %v2195, 0.0
        %v2249 = vadd.f32 %v2194, %v2248
        %2250 = vadd.xlane.f32.xlu0 %v2249
        %v2251 = vpop.xlane.xlu0 %2250
        %v2252 = vsel %vm1556, %v2197, 0.0
        %v2253 = vadd.f32 %v2196, %v2252
        %2254 = vadd.xlane.f32.xlu0 %v2253
        %v2255 = vpop.xlane.xlu0 %2254
        %v2256 = vsel %vm1556, %v2199, 0.0
        %v2257 = vadd.f32 %v2198, %v2256
        %2258 = vadd.xlane.f32.xlu0 %v2257
        %v2259 = vpop.xlane.xlu0 %2258
        %v2260 = vsel %vm1556, %v2201, 0.0
        %v2261 = vadd.f32 %v2200, %v2260
        %2262 = vadd.xlane.f32.xlu0 %v2261
        %v2263 = vpop.xlane.xlu0 %2262
        %v2264 = vsel %vm1556, %v2203, 0.0
        %v2265 = vadd.f32 %v2202, %v2264
        %2266 = vadd.xlane.f32.xlu0 %v2265
        %v2267 = vpop.xlane.xlu0 %2266
        %v2268 = vmul.f32 %v2156, %v2207
        %v2269 = vmul.f32 %v2157, %v2211
        %v2270 = vmul.f32 %v2158, %v2215
        %v2271 = vmul.f32 %v2159, %v2219
        %v2272 = vmul.f32 %v2160, %v2223
        %v2273 = vmul.f32 %v2161, %v2227
        %v2274 = vmul.f32 %v2162, %v2231
        %v2275 = vmul.f32 %v2163, %v2235
        %v2276 = vmul.f32 %v2164, %v2239
        %v2277 = vmul.f32 %v2165, %v2243
        %v2278 = vmul.f32 %v2166, %v2247
        %v2279 = vmul.f32 %v2167, %v2251
        %v2280 = vmul.f32 %v2168, %v2255
        %v2281 = vmul.f32 %v2169, %v2259
        %v2282 = vmul.f32 %v2170, %v2263
        %v2283 = vmul.f32 %v2171, %v2267
        %v2284 = vsel %vm1637, %v2268, 0.0
        %v2285 = vsel %vm1637, %v2269, 0.0
        %v2286 = vadd.f32 %v2284, %v2285
        %v2287 = vsel %vm1637, %v2270, 0.0
        %v2288 = vadd.f32 %v2286, %v2287
        %v2289 = vsel %vm1637, %v2271, 0.0
        %v2290 = vadd.f32 %v2288, %v2289
        %v2291 = vsel %vm1637, %v2272, 0.0
        %v2292 = vadd.f32 %v2290, %v2291
        %v2293 = vsel %vm1637, %v2273, 0.0
        %v2294 = vadd.f32 %v2292, %v2293
        %v2295 = vsel %vm1637, %v2274, 0.0
        %v2296 = vadd.f32 %v2294, %v2295
        %v2297 = vsel %vm1637, %v2275, 0.0
        %v2298 = vadd.f32 %v2296, %v2297
        %v2299 = vsel %vm1637, %v2276, 0.0
        %v2300 = vadd.f32 %v2298, %v2299
        %v2301 = vsel %vm1637, %v2277, 0.0
        %v2302 = vadd.f32 %v2300, %v2301
        %v2303 = vsel %vm1637, %v2278, 0.0
        %v2304 = vadd.f32 %v2302, %v2303
        %v2305 = vsel %vm1637, %v2279, 0.0
        %v2306 = vadd.f32 %v2304, %v2305
        %v2307 = vsel %vm1637, %v2280, 0.0
        %v2308 = vadd.f32 %v2306, %v2307
        %v2309 = vsel %vm1637, %v2281, 0.0
        %v2310 = vadd.f32 %v2308, %v2309
        %v2311 = vsel %vm1637, %v2282, 0.0
        %v2312 = vadd.f32 %v2310, %v2311
        %v2313 = vsel %vm1637, %v2283, 0.0
        %v2314 = vadd.f32 %v2312, %v2313
        %2315 = vadd.xlane.f32.xlu0 %v2314
        %v2316 = vpop.xlane.xlu0 %2315
        %v2317 = vrot.slane %v2316, 4
        %v2318 = vadd.f32 %v2316, %v2317
        %v2319 = vrot.slane %v2318, 2
        %v2320 = vadd.f32 %v2318, %v2319
        %v2321 = vrot.slane %v2320, 1
        %v2322 = vadd.f32 %v2320, %v2321
        %s2323 = vtos %v2322
        %v2324 = vld [vmem:[#allocation4] sm:$0xff]
        %v2325 = vld [vmem:[#allocation4 + $0x8] sm:$0xff]
        %v2326 = vld [vmem:[#allocation4 + $0x10] sm:$0xff]
        %v2327 = vld [vmem:[#allocation4 + $0x18] sm:$0xff]
        %v2328 = vld [vmem:[#allocation4 + $0x20] sm:$0xff]
        %v2329 = vld [vmem:[#allocation4 + $0x28] sm:$0xff]
        %v2330 = vld [vmem:[#allocation4 + $0x30] sm:$0xff]
        %v2331 = vld [vmem:[#allocation4 + $0x38] sm:$0xff]
        %v2332 = vld [vmem:[#allocation4 + $0x40] sm:$0xff]
        %v2333 = vld [vmem:[#allocation4 + $0x48] sm:$0xff]
        %v2334 = vld [vmem:[#allocation4 + $0x50] sm:$0xff]
        %v2335 = vld [vmem:[#allocation4 + $0x58] sm:$0xff]
        %v2336 = vld [vmem:[#allocation4 + $0x60] sm:$0xff]
        %v2337 = vld [vmem:[#allocation4 + $0x68] sm:$0xff]
        %v2338 = vld [vmem:[#allocation4 + $0x70] sm:$0xff]
        %v2339 = vld [vmem:[#allocation4 + $0x78] sm:$0xff]
        %v2340 = vld [vmem:[#allocation4 + $0x80] sm:$0xff]
        %v2341 = vld [vmem:[#allocation4 + $0x88] sm:$0xff]
        %v2342 = vld [vmem:[#allocation4 + $0x90] sm:$0xff]
        %v2343 = vld [vmem:[#allocation4 + $0x98] sm:$0xff]
        %v2344 = vld [vmem:[#allocation4 + $0xa0] sm:$0xff]
        %v2345 = vld [vmem:[#allocation4 + $0xa8] sm:$0xff]
        %v2346 = vld [vmem:[#allocation4 + $0xb0] sm:$0xff]
        %v2347 = vld [vmem:[#allocation4 + $0xb8] sm:$0xff]
        %v2348 = vld [vmem:[#allocation4 + $0xc0] sm:$0xff]
        %v2349 = vld [vmem:[#allocation4 + $0xc8] sm:$0xff]
        %v2350 = vld [vmem:[#allocation4 + $0xd0] sm:$0xff]
        %v2351 = vld [vmem:[#allocation4 + $0xd8] sm:$0xff]
        %v2352 = vld [vmem:[#allocation4 + $0xe0] sm:$0xff]
        %v2353 = vld [vmem:[#allocation4 + $0xe8] sm:$0xff]
        %v2354 = vld [vmem:[#allocation4 + $0xf0] sm:$0xff]
        %v2355 = vld [vmem:[#allocation4 + $0xf8] sm:$0xff]
        %v2356 = vmul.f32 %v2324, %v2108
        %v2357 = vmul.f32 %v2325, %v2109
        %v2358 = vmul.f32 %v2326, %v2110
        %v2359 = vmul.f32 %v2327, %v2111
        %v2360 = vmul.f32 %v2328, %v2112
        %v2361 = vmul.f32 %v2329, %v2113
        %v2362 = vmul.f32 %v2330, %v2114
        %v2363 = vmul.f32 %v2331, %v2115
        %v2364 = vmul.f32 %v2332, %v2116
        %v2365 = vmul.f32 %v2333, %v2117
        %v2366 = vmul.f32 %v2334, %v2118
        %v2367 = vmul.f32 %v2335, %v2119
        %v2368 = vmul.f32 %v2336, %v2120
        %v2369 = vmul.f32 %v2337, %v2121
        %v2370 = vmul.f32 %v2338, %v2122
        %v2371 = vmul.f32 %v2339, %v2123
        %v2372 = vmul.f32 %v2340, %v2108
        %v2373 = vmul.f32 %v2341, %v2109
        %v2374 = vmul.f32 %v2342, %v2110
        %v2375 = vmul.f32 %v2343, %v2111
        %v2376 = vmul.f32 %v2344, %v2112
        %v2377 = vmul.f32 %v2345, %v2113
        %v2378 = vmul.f32 %v2346, %v2114
        %v2379 = vmul.f32 %v2347, %v2115
        %v2380 = vmul.f32 %v2348, %v2116
        %v2381 = vmul.f32 %v2349, %v2117
        %v2382 = vmul.f32 %v2350, %v2118
        %v2383 = vmul.f32 %v2351, %v2119
        %v2384 = vmul.f32 %v2352, %v2120
        %v2385 = vmul.f32 %v2353, %v2121
        %v2386 = vmul.f32 %v2354, %v2122
        %v2387 = vmul.f32 %v2355, %v2123
        %v2388 = vsel %vm1637, %v2356, 0.0
        %v2389 = vsel %vm1637, %v2357, 0.0
        %v2390 = vadd.f32 %v2388, %v2389
        %v2391 = vsel %vm1637, %v2358, 0.0
        %v2392 = vadd.f32 %v2390, %v2391
        %v2393 = vsel %vm1637, %v2359, 0.0
        %v2394 = vadd.f32 %v2392, %v2393
        %v2395 = vsel %vm1637, %v2360, 0.0
        %v2396 = vadd.f32 %v2394, %v2395
        %v2397 = vsel %vm1637, %v2361, 0.0
        %v2398 = vadd.f32 %v2396, %v2397
        %v2399 = vsel %vm1637, %v2362, 0.0
        %v2400 = vadd.f32 %v2398, %v2399
        %v2401 = vsel %vm1637, %v2363, 0.0
        %v2402 = vadd.f32 %v2400, %v2401
        %v2403 = vsel %vm1637, %v2364, 0.0
        %v2404 = vadd.f32 %v2402, %v2403
        %v2405 = vsel %vm1637, %v2365, 0.0
        %v2406 = vadd.f32 %v2404, %v2405
        %v2407 = vsel %vm1637, %v2366, 0.0
        %v2408 = vadd.f32 %v2406, %v2407
        %v2409 = vsel %vm1637, %v2367, 0.0
        %v2410 = vadd.f32 %v2408, %v2409
        %v2411 = vsel %vm1637, %v2368, 0.0
        %v2412 = vadd.f32 %v2410, %v2411
        %v2413 = vsel %vm1637, %v2369, 0.0
        %v2414 = vadd.f32 %v2412, %v2413
        %v2415 = vsel %vm1637, %v2370, 0.0
        %v2416 = vadd.f32 %v2414, %v2415
        %v2417 = vsel %vm1637, %v2371, 0.0
        %v2418 = vadd.f32 %v2416, %v2417
        %v2419 = vrot.slane %v2418, 4
        %v2420 = vadd.f32 %v2418, %v2419
        %v2421 = vrot.slane %v2420, 2
        %v2422 = vadd.f32 %v2420, %v2421
        %v2423 = vrot.slane %v2422, 1
        %v2424 = vadd.f32 %v2422, %v2423
        %v2425 = vsel %vm1637, %v2372, 0.0
        %v2426 = vsel %vm1637, %v2373, 0.0
        %v2427 = vadd.f32 %v2425, %v2426
        %v2428 = vsel %vm1637, %v2374, 0.0
        %v2429 = vadd.f32 %v2427, %v2428
        %v2430 = vsel %vm1637, %v2375, 0.0
        %v2431 = vadd.f32 %v2429, %v2430
        %v2432 = vsel %vm1637, %v2376, 0.0
        %v2433 = vadd.f32 %v2431, %v2432
        %v2434 = vsel %vm1637, %v2377, 0.0
        %v2435 = vadd.f32 %v2433, %v2434
        %v2436 = vsel %vm1637, %v2378, 0.0
        %v2437 = vadd.f32 %v2435, %v2436
        %v2438 = vsel %vm1637, %v2379, 0.0
        %v2439 = vadd.f32 %v2437, %v2438
        %v2440 = vsel %vm1637, %v2380, 0.0
        %v2441 = vadd.f32 %v2439, %v2440
        %v2442 = vsel %vm1637, %v2381, 0.0
        %v2443 = vadd.f32 %v2441, %v2442
        %v2444 = vsel %vm1637, %v2382, 0.0
        %v2445 = vadd.f32 %v2443, %v2444
        %v2446 = vsel %vm1637, %v2383, 0.0
        %v2447 = vadd.f32 %v2445, %v2446
        %v2448 = vsel %vm1637, %v2384, 0.0
        %v2449 = vadd.f32 %v2447, %v2448
        %v2450 = vsel %vm1637, %v2385, 0.0
        %v2451 = vadd.f32 %v2449, %v2450
        %v2452 = vsel %vm1637, %v2386, 0.0
        %v2453 = vadd.f32 %v2451, %v2452
        %v2454 = vsel %vm1637, %v2387, 0.0
        %v2455 = vadd.f32 %v2453, %v2454
        %v2456 = vrot.slane %v2455, 4
        %v2457 = vadd.f32 %v2455, %v2456
        %v2458 = vrot.slane %v2457, 2
        %v2459 = vadd.f32 %v2457, %v2458
        %v2460 = vrot.slane %v2459, 1
        %v2461 = vadd.f32 %v2459, %v2460
        %v2462 = vstv %s2323
        %v2463 = vadd.f32 %v2424, %v2462
        %v2464 = vadd.f32 %v2461, %v2462
        %v2465 = vld [vmem:[#allocation5] sm:$0x1]
        %v2467 = vlaneseq
        %v2468 = vshrl.u32 %v2467, 7
        %v2469 = vsub.s32 0, %v2468
        %v2470 = vrot.slane %v2465, %v2469
        %v2472 = vadd.f32 %v2463, %v2470
        %v2473 = vadd.f32 %v2464, %v2470
        %v2474 = vsub.f32 0.0, %v2472
        %v2475 = vsub.f32 0.0, %v2473
        %v2476 = vmul.f32 %v2474, 1.442695
        %v2477 = vpow.pop %v2476
        %v2478 = vmul.f32 %v2475, 1.442695
        %v2479 = vpow.pop %v2478
        %v2480 = vadd.f32 %v2477, 1.0
        %v2481 = vadd.f32 %v2479, 1.0
        %v2482 = vrcp.pop %v2480
        %v2483 = vmul.f32 1.0, %v2482
        %v2484 = vrcp.pop %v2481
        %v2485 = vmul.f32 1.0, %v2484
        %v2488 = vrot.slane %v2485, 7
        %vm2489 = vcmask 1041409
        %v2490 = vsel %vm2489, %v2488, %v2483
        %vm2492 = vcmask 1024
        %2493 = vst.msk [vmem:[%s7] sm:$0x3] %vm2492, %v2490
      $region56: #{discriminator_forward.3} parent=47 // pred_fallthru
        _
      // Predicated region
      $region57: #{discriminator_forward.3} parent=47 // pred_check
        %p2494 = pneg %p185
      $region58: #{discriminator_forward.3} parent=47 // pred_check_branch
        %2496 = sbr.rel (%p2494) target = $region60
      $region59: #{discriminator_forward.3} parent=47 // pred_region
        _
      $region60: #{discriminator_forward.3} parent=47 // pred_fallthru
        _
      // Predicated region
      $region61: #{discriminator_forward.3} parent=47 // pred_check
        %p2497 = pneg %p185
      $region62: #{discriminator_forward.3} parent=47 // pred_check_branch
        %2499 = sbr.rel (%p2497) target = $region64
      $region63: #{discriminator_forward.3} parent=47 // pred_region
        _
      $region64: #{discriminator_forward.3} parent=47 // pred_fallthru
        _
    $region48: #{discriminator_forward.3} parent=5 // pred_fallthru
      _
    %p2500 = scmp.le.s32.totalorder 2, %s15
    // Predicated region
    $region65: #{discriminator_forward.3} parent=5 // pred_check
      %p2501 = pneg %p2500
    $region66: #{discriminator_forward.3} parent=5 // pred_check_branch
      %2503 = sbr.rel (%p2501) target = $region68
    $region67: #{discriminator_forward.3} parent=5 // pred_region
      %s2504 = ssub.s32 %s15, 2
    $region68: #{discriminator_forward.3} parent=5 // pred_fallthru
      _
  $region6: #{discriminator_forward.3} parent=0 // loop_footer
    %s19 = sadd.s32 1, %s15
  $region7: #{discriminator_forward.3} parent=0 // loop_footer_branch
    %14 = sbr.rel target = $region3
  $region8: #{discriminator_forward.3} parent=0 // loop_exit
    _

</llo_original>
